<compile_context>
chip_gen: v7x
topology: tpu7x:2x2x1
jax: 0.10.0
libtpu: 0.0.40
codegen_flags: <defaults>
</compile_context>

<pallas_src>
import math
import functools

import jax
import jax.numpy as jnp
from jax.experimental import pallas as pl
from jax.experimental.pallas import tpu as pltpu


# --------------------------------------------------------------------------
# generation-aware VMEM budgets
# --------------------------------------------------------------------------
def _vmem_budgets():
    phys = 64 * 1024 * 1024                    # conservative default (v7x per-TC VMEM)
    try:
        info = pltpu.get_tpu_info()
        phys = int(getattr(info, "vmem_capacity_bytes", phys))
    except Exception:
        pass
    # ~96 MiB scoped on v5e/v6e (128 MiB physical), ~48 MiB on v7x (64 MiB).
    limit = max(32 * 1024 * 1024, min(phys * 3 // 4, 100 * 1024 * 1024))
    tile_budget = limit * 3 // 4               # headroom for Mosaic internal scratch
    return limit, tile_budget


_VMEM_LIMIT, _TILE_BUDGET = _vmem_budgets()


def _cp(num_parallel_axes):
    return pltpu.CompilerParams(
        dimension_semantics=("parallel",) * num_parallel_axes,
        vmem_limit_bytes=_VMEM_LIMIT)


def _row_tile(m, row_bytes, fixed_bytes=0, budget=None):
    """Largest row tile dividing M whose true footprint (resident weights +
    double-buffered row I/O + live temporaries) fits the budget.  Falls back
    to the largest multiple-of-8 divisor of M, then to a full-M block."""
    if budget is None:
        budget = _TILE_BUDGET
    avail = max(budget - fixed_bytes, 8 * row_bytes)
    for t in (2048, 1024, 512, 256, 128, 64, 32, 16, 8):
        if t <= m and m % t == 0 and t * row_bytes <= avail:
            return t
    d = (min(m, 4096) // 8) * 8
    while d >= 8:
        if m % d == 0 and d * row_bytes <= avail:
            return d
        d -= 8
    return m


# --------------------------------------------------------------------------
# Kernel: BertEmbeddings LayerNorm + time_embedding + add   (row-tiled over M)
# --------------------------------------------------------------------------
def _embed_time_kernel(emb_ref, eg_ref, eb_ref, t_ref, tw_ref, tb_ref,
                       tg_ref, tbt_ref, o_ref):
    emb = emb_ref[...]                                          # (TM, H)
    mu = jnp.mean(emb, axis=-1, keepdims=True)
    var = jnp.mean((emb - mu) ** 2, axis=-1, keepdims=True)
    emb_ln = (emb - mu) * jax.lax.rsqrt(var + 1e-12) * eg_ref[...] + eb_ref[...]

    # time_embedding: Linear(1->H) -> LayerNorm(eps=1e-5) -> ReLU -> Dropout(id)
    te = t_ref[...] * tw_ref[...] + tb_ref[...]                 # (TM,1)*(1,H)
    tmu = jnp.mean(te, axis=-1, keepdims=True)
    tvar = jnp.mean((te - tmu) ** 2, axis=-1, keepdims=True)
    te = (te - tmu) * jax.lax.rsqrt(tvar + 1e-5) * tg_ref[...] + tbt_ref[...]

    o_ref[...] = emb_ln + jnp.maximum(te, 0.0)


def embed_time(emb_sum, times2, p):
    m, h = emb_sum.shape
    row = 4 * (4 * h + 2)                 # dbl-buffered in/out rows + times
    fixed = 4 * 6 * h * 2                 # resident LN / time params (dbl-buffered)
    tm = _row_tile(m, row, fixed)
    return pl.pallas_call(
        _embed_time_kernel,
        out_shape=jax.ShapeDtypeStruct((m, h), jnp.float32),
        grid=(m // tm,),
        in_specs=[
            pl.BlockSpec((tm, h), lambda i: (i, 0)),
            pl.BlockSpec((1, h), lambda i: (0, 0)),
            pl.BlockSpec((1, h), lambda i: (0, 0)),
            pl.BlockSpec((tm, 1), lambda i: (i, 0)),
            pl.BlockSpec((1, h), lambda i: (0, 0)),
            pl.BlockSpec((1, h), lambda i: (0, 0)),
            pl.BlockSpec((1, h), lambda i: (0, 0)),
            pl.BlockSpec((1, h), lambda i: (0, 0)),
        ],
        out_specs=pl.BlockSpec((tm, h), lambda i: (i, 0)),
        compiler_params=_cp(1),
    )(emb_sum, p["emb_ln_g"], p["emb_ln_b"], times2,
      p["time_w"], p["time_b"], p["time_ln_g"], p["time_ln_b"])


# --------------------------------------------------------------------------
# Kernel: fused attention block (one batch element per grid step)
#   QKV projection -> prompted attention -> output dense -> +residual -> LN
# --------------------------------------------------------------------------
def _attn_block_kernel(h_ref, wqkv_ref, bqkv_ref, pk_ref, pv_ref, m_ref,
                       wo_ref, bo_ref, g_ref, b_ref, o_ref,
                       *, num_heads, head_dim, scale, eps, dot_dtype):
    hdim = num_heads * head_dim
    h_in = h_ref[0]                                             # (S, H) f32
    s_len = h_in.shape[0]

    # fused QKV projection (weights resident in dot dtype; f32 accumulation)
    qkv = (jnp.dot(h_in.astype(dot_dtype), wqkv_ref[...],
                   preferred_element_type=jnp.float32) + bqkv_ref[...])  # (S, 3H)

    # head-batched layout: (S, nH, D); 1/sqrt(D) folded into q
    q = (qkv[:, :hdim] * scale).reshape(s_len, num_heads, head_dim)
    k = qkv[:, hdim:2 * hdim].reshape(s_len, num_heads, head_dim)
    v = qkv[:, 2 * hdim:].reshape(s_len, num_heads, head_dim)
    qd, kd, vd = (q.astype(dot_dtype), k.astype(dot_dtype), v.astype(dot_dtype))
    pkd = pk_ref[0]                                             # (nH, Lp, D), dot dtype
    pvd = pv_ref[0]
    mask = m_ref[0]                                             # (1, S) raw 0/1 mask

    # Exactly as in the reference: the raw 0/1 mask (ones for prompt tokens)
    # is ADDED to the scores (not converted to -inf).
    s_tok = jnp.einsum('qhd,khd->hqk', qd, kd,
                       preferred_element_type=jnp.float32) + mask        # (nH,S,S)
    s_pr = jnp.einsum('qhd,hkd->hqk', qd, pkd,
                      preferred_element_type=jnp.float32) + 1.0          # (nH,S,Lp)

    mx = jnp.maximum(jnp.max(s_tok, axis=-1, keepdims=True),
                     jnp.max(s_pr, axis=-1, keepdims=True))
    p_tok = jnp.exp(s_tok - mx)
    p_pr = jnp.exp(s_pr - mx)
    denom = (jnp.sum(p_tok, axis=-1, keepdims=True)
             + jnp.sum(p_pr, axis=-1, keepdims=True))
    inv = pl.reciprocal(denom, approx=True)                     # EUP slot

    ctx = (jnp.einsum('hqk,khd->hqd', p_tok.astype(dot_dtype), vd,
                      preferred_element_type=jnp.float32)
           + jnp.einsum('hqk,hkd->hqd', p_pr.astype(dot_dtype), pvd,
                        preferred_element_type=jnp.float32)) * inv       # (nH,S,D)
    ctx = jnp.transpose(ctx, (1, 0, 2)).reshape(s_len, hdim)             # (S, H)

    # attention output dense + residual + LayerNorm (ctx never leaves VMEM)
    y = (jnp.dot(ctx.astype(dot_dtype), wo_ref[...],
                 preferred_element_type=jnp.float32) + bo_ref[...]) + h_in
    mu = jnp.mean(y, axis=-1, keepdims=True)
    var = jnp.mean((y - mu) ** 2, axis=-1, keepdims=True)
    o_ref[0] = (y - mu) * jax.lax.rsqrt(var + eps) * g_ref[...] + b_ref[...]


def prompted_attention_block(hidden_bsh, wqkv, bqkv, prompt_k, prompt_v, mask3d,
                             wo, bo, ln_g, ln_b,
                             *, num_heads, head_dim, eps=1e-12,
                             dot_dtype=jnp.float32):
    b, s, h = hidden_bsh.shape
    three_h = wqkv.shape[1]
    lp = prompt_k.shape[2]
    scale = 1.0 / math.sqrt(head_dim)
    # TODO(synk): for long S / small B on v7x, add a query-tile grid axis
    # (flash-style) to bound the (S, Sk) logits and feed both TensorCores.
    return pl.pallas_call(
        functools.partial(_attn_block_kernel, num_heads=num_heads,
                          head_dim=head_dim, scale=scale, eps=eps,
                          dot_dtype=dot_dtype),
        out_shape=jax.ShapeDtypeStruct((b, s, h), jnp.float32),
        grid=(b,),
        in_specs=[
            pl.BlockSpec((1, s, h), lambda i: (i, 0, 0)),
            pl.BlockSpec((h, three_h), lambda i: (0, 0)),
            pl.BlockSpec((1, three_h), lambda i: (0, 0)),
            pl.BlockSpec((1, num_heads, lp, head_dim), lambda i: (i, 0, 0, 0)),
            pl.BlockSpec((1, num_heads, lp, head_dim), lambda i: (i, 0, 0, 0)),
            pl.BlockSpec((1, 1, s), lambda i: (i, 0, 0)),
            pl.BlockSpec((h, h), lambda i: (0, 0)),
            pl.BlockSpec((1, h), lambda i: (0, 0)),
            pl.BlockSpec((1, h), lambda i: (0, 0)),
            pl.BlockSpec((1, h), lambda i: (0, 0)),
        ],
        out_specs=pl.BlockSpec((1, s, h), lambda i: (i, 0, 0)),
        compiler_params=_cp(1),
    )(hidden_bsh, wqkv, bqkv, prompt_k, prompt_v, mask3d, wo, bo, ln_g, ln_b)


# --------------------------------------------------------------------------
# Kernel: feed-forward chunk (dense -> GELU -> dense + residual + LN), row-tiled
# --------------------------------------------------------------------------
def _ffn_kernel(x_ref, w1_ref, b1_ref, w2_ref, b2_ref, g_ref, bt_ref, o_ref,
                *, eps, dot_dtype):
    x = x_ref[...]                                              # (TM, H) f32
    h = jnp.dot(x.astype(dot_dtype), w1_ref[...],
                preferred_element_type=jnp.float32) + b1_ref[...]
    # TODO(synk): HF BERT default uses exact (erf) GELU; tanh approximation
    # kept here for guaranteed Mosaic lowering.
    h = jax.nn.gelu(h, approximate=True)
    y = jnp.dot(h.astype(dot_dtype), w2_ref[...],
                preferred_element_type=jnp.float32) + b2_ref[...]
    y = y + x
    mu = jnp.mean(y, axis=-1, keepdims=True)
    var = jnp.mean((y - mu) ** 2, axis=-1, keepdims=True)
    o_ref[...] = (y - mu) * jax.lax.rsqrt(var + eps) * g_ref[...] + bt_ref[...]


def ffn_block(x, wi, bi2d, wo2, bo2d, g2d, bt2d, *, eps=1e-12,
              dot_dtype=jnp.float32):
    m, h = x.shape
    inter = wi.shape[1]
    wb = wi.dtype.itemsize
    # resident (double-buffered) weights + biases/LN params
    fixed = 2 * wb * (h * inter + inter * h) + 2 * 4 * (inter + 3 * h)
    # dbl-buffered in/out rows + live f32 GELU intermediate(s)
    row = 4 * (4 * h + 2 * inter)
    tm = _row_tile(m, row, fixed)
    return pl.pallas_call(
        functools.partial(_ffn_kernel, eps=eps, dot_dtype=dot_dtype),
        out_shape=jax.ShapeDtypeStruct((m, h), jnp.float32),
        grid=(m // tm,),
        in_specs=[
            pl.BlockSpec((tm, h), lambda i: (i, 0)),
            pl.BlockSpec((h, inter), lambda i: (0, 0)),
            pl.BlockSpec((1, inter), lambda i: (0, 0)),
            pl.BlockSpec((inter, h), lambda i: (0, 0)),
            pl.BlockSpec((1, h), lambda i: (0, 0)),
            pl.BlockSpec((1, h), lambda i: (0, 0)),
            pl.BlockSpec((1, h), lambda i: (0, 0)),
        ],
        out_specs=pl.BlockSpec((tm, h), lambda i: (i, 0)),
        compiler_params=_cp(1),
    )(x, wi, bi2d, wo2, bo2d, g2d, bt2d)


# --------------------------------------------------------------------------
# parameters (matmul weights stored in the matmul dtype; biases / LN 2-D f32)
# --------------------------------------------------------------------------
def _uniform(key, shape, a=-0.1, b=0.1):
    return jax.random.uniform(key, shape, jnp.float32, a, b)


def init_params(key, cfg):
    H, nH, D, I = cfg["hidden"], cfg["num_heads"], cfg["head_dim"], cfg["intermediate"]
    wdtype = jnp.bfloat16 if cfg.get("bf16_matmul", False) else jnp.float32
    keys = iter(jax.random.split(key, 8 + 8 * cfg["num_layers"]))
    params = dict(
        word_emb=_uniform(next(keys), (cfg["vocab"], H)),
        pos_emb=_uniform(next(keys), (cfg["max_pos"], H)),
        tok_type_emb=_uniform(next(keys), (2, H)),
        emb_ln_g=jnp.ones((1, H), jnp.float32),
        emb_ln_b=jnp.zeros((1, H), jnp.float32),
        # time_embedding: Linear(1,H).weight ~ U(-0.1,0.1), bias = 0, LN default
        time_w=_uniform(next(keys), (1, H)),
        time_b=jnp.zeros((1, H), jnp.float32),
        time_ln_g=jnp.ones((1, H), jnp.float32),
        time_ln_b=jnp.zeros((1, H), jnp.float32),
        # G-Prompt (shared across batch), stored as (1, dup, 1, nH, Lg, D)
        g_key=_uniform(next(keys), (1, cfg["dup"], 1, nH, cfg["g_len"], D)),
        g_value=_uniform(next(keys), (1, cfg["dup"], 1, nH, cfg["g_len"], D)),
        # E-Prompt pool indexed by customer_type (key == value in the reference)
        e_prompt_pool=_uniform(next(keys),
                               (cfg["num_types"], cfg["dup"], 1, nH, cfg["e_len"], D)),
    )
    layers = []
    for _ in range(cfg["num_layers"]):
        wq = _uniform(next(keys), (H, H))
        wk = _uniform(next(keys), (H, H))
        wv = _uniform(next(keys), (H, H))
        layers.append(dict(
            wqkv=jnp.concatenate([wq, wk, wv], axis=1).astype(wdtype),   # (H, 3H)
            bqkv=jnp.zeros((1, 3 * H), jnp.float32),
            wo=_uniform(next(keys), (H, H)).astype(wdtype),
            bo=jnp.zeros((1, H), jnp.float32),
            attn_ln_g=jnp.ones((1, H), jnp.float32),
            attn_ln_b=jnp.zeros((1, H), jnp.float32),
            wi=_uniform(next(keys), (H, I)).astype(wdtype),
            bi=jnp.zeros((1, I), jnp.float32),
            wo2=_uniform(next(keys), (I, H)).astype(wdtype),
            bo2=jnp.zeros((1, H), jnp.float32),
            out_ln_g=jnp.ones((1, H), jnp.float32),
            out_ln_b=jnp.zeros((1, H), jnp.float32),
        ))
    params["layers"] = layers
    return params


# --------------------------------------------------------------------------
# forward
# --------------------------------------------------------------------------
def prompted_bert_forward(params, input_ids, attention_mask, times,
                          customer_type, *, cfg):
    B, S = input_ids.shape
    H, nH, D = cfg["hidden"], cfg["num_heads"], cfg["head_dim"]
    M = B * S
    dot_dtype = jnp.bfloat16 if cfg.get("bf16_matmul", False) else jnp.float32

    # BertEmbeddings: word + position + token_type (all-zeros type ids).
    we = jnp.take(params["word_emb"], input_ids, axis=0)            # (B,S,H)
    pe = params["pos_emb"][:S][None, :, :]
    tte = params["tok_type_emb"][0][None, None, :]
    emb_sum = (we + pe + tte).reshape(M, H)
    times2 = times.reshape(M, 1).astype(jnp.float32)

    hidden = embed_time(emb_sum, times2, params)                    # (M, H)

    # ---- build prompt prefixes ONCE (layer-invariant), as the reference does ----
    def process_prefix(p):  # (B, dup, 1, nH, L, D) -> (B, nH, dup*L, D)
        p = p[:, :, 0]                               # squeeze(2)
        p = jnp.transpose(p, (0, 2, 1, 3, 4))        # permute(0,2,1,3,4)
        bp, hh, dup, ln, dh = p.shape
        return p.reshape(bp, hh, dup * ln, dh)

    g_key_prefix = jnp.broadcast_to(params["g_key"], (B,) + params["g_key"].shape[1:])
    g_value_prefix = jnp.broadcast_to(params["g_value"], (B,) + params["g_value"].shape[1:])
    e_kv = process_prefix(params["e_prompt_pool"][customer_type])   # key == value
    g_k, g_v = process_prefix(g_key_prefix), process_prefix(g_value_prefix)

    # reference concat order: g first, then e prepended -> [e, g, tokens];
    # cast once to the matmul dtype so the kernels never re-cast them.
    prompt_k = jnp.concatenate([e_kv, g_k], axis=2).astype(dot_dtype)  # (B,nH,Lp,D)
    prompt_v = jnp.concatenate([e_kv, g_v], axis=2).astype(dot_dtype)

    # Raw 0/1 mask, added to logits exactly like the reference (prompt part
    # = 1.0 is added inside the attention kernel).
    mask3d = attention_mask.astype(jnp.float32)[:, None, :]           # (B,1,S)

    hidden_bsh = hidden.reshape(B, S, H)
    for layer in params["layers"]:
        attn_out = prompted_attention_block(
            hidden_bsh, layer["wqkv"], layer["bqkv"], prompt_k, prompt_v,
            mask3d, layer["wo"], layer["bo"],
            layer["attn_ln_g"], layer["attn_ln_b"],
            num_heads=nH, head_dim=D, eps=1e-12, dot_dtype=dot_dtype)  # (B,S,H)
        hidden_bsh = ffn_block(
            attn_out.reshape(M, H), layer["wi"], layer["bi"],
            layer["wo2"], layer["bo2"], layer["out_ln_g"], layer["out_ln_b"],
            eps=1e-12, dot_dtype=dot_dtype).reshape(B, S, H)           # (B,S,H)

    return hidden_bsh   # last_hidden_state


if __name__ == "__main__":
    cfg = dict(vocab=50, max_pos=32, hidden=32, num_heads=4, head_dim=8,
               intermediate=128, num_layers=2, g_len=4, e_len=4, dup=1,
               num_types=3, bf16_matmul=False)

    key = jax.random.PRNGKey(0)
    pkey, dkey = jax.random.split(key)
    params = init_params(pkey, cfg)

    B, S = 2, 8
    k1, k2, k3, k4 = jax.random.split(dkey, 4)
    input_ids = jax.random.randint(k1, (B, S), 0, cfg["vocab"], dtype=jnp.int32)
    attention_mask = jnp.ones((B, S), jnp.int32).at[:, -2:].set(0)
    times = jax.random.uniform(k3, (B, S), jnp.float32)
    customer_type = jax.random.randint(k4, (B,), 0, cfg["num_types"], dtype=jnp.int32)

    fwd = jax.jit(functools.partial(prompted_bert_forward, cfg=cfg))
    out = fwd(params, input_ids, attention_mask, times, customer_type)
    jax.block_until_ready(out)
    assert out.shape == (B, S, cfg["hidden"]) and out.dtype == jnp.float32
    print("KERNEL_OK")
</pallas_src>

<mosaic_0001>
module attributes {stable_mosaic.version = 11 : i64} {
  func.func @_embed_time_kernel(%arg0: i32, %arg1: memref<16x32xf32, #tpu.memory_space<vmem>>, %arg2: memref<1x32xf32, #tpu.memory_space<vmem>>, %arg3: memref<1x32xf32, #tpu.memory_space<vmem>>, %arg4: memref<16x1xf32, #tpu.memory_space<vmem>>, %arg5: memref<1x32xf32, #tpu.memory_space<vmem>>, %arg6: memref<1x32xf32, #tpu.memory_space<vmem>>, %arg7: memref<1x32xf32, #tpu.memory_space<vmem>>, %arg8: memref<1x32xf32, #tpu.memory_space<vmem>>, %arg9: memref<16x32xf32, #tpu.memory_space<vmem>>) attributes {dimension_semantics = [#tpu.dimension_semantics<parallel>], iteration_bounds = array<i64: 1>, scalar_prefetch = 0 : i64, scratch_operands = 0 : i64, tpu.core_type = #tpu.core_type<tc>, window_params = [{transform_indices = @transform_0, window_bounds = array<i64: 16, 32>}, {pipeline_mode = #tpu.pipeline_mode<synchronous>, transform_indices = @transform_1, window_bounds = array<i64: 1, 32>}, {pipeline_mode = #tpu.pipeline_mode<synchronous>, transform_indices = @transform_2, window_bounds = array<i64: 1, 32>}, {transform_indices = @transform_3, window_bounds = array<i64: 16, 1>}, {pipeline_mode = #tpu.pipeline_mode<synchronous>, transform_indices = @transform_4, window_bounds = array<i64: 1, 32>}, {pipeline_mode = #tpu.pipeline_mode<synchronous>, transform_indices = @transform_5, window_bounds = array<i64: 1, 32>}, {pipeline_mode = #tpu.pipeline_mode<synchronous>, transform_indices = @transform_6, window_bounds = array<i64: 1, 32>}, {pipeline_mode = #tpu.pipeline_mode<synchronous>, transform_indices = @transform_7, window_bounds = array<i64: 1, 32>}, {transform_indices = @transform_8, window_bounds = array<i64: 16, 32>}]} {
    %c0 = arith.constant 0 : index
    %c0_0 = arith.constant 0 : index
    %0 = vector.load %arg1[%c0, %c0_0] : memref<16x32xf32, #tpu.memory_space<vmem>>, vector<16x32xf32>
    %cst = arith.constant dense<0.000000e+00> : vector<16xf32>
    %1 = vector.multi_reduction <add>, %0, %cst [1] : vector<16x32xf32> to vector<16xf32>
    %2 = vector.shape_cast %1 : vector<16xf32> to vector<16x1xf32>
    %cst_1 = arith.constant 3.200000e+01 : f32
    %3 = vector.broadcast %cst_1 : f32 to vector<16x1xf32>
    %4 = arith.divf %2, %3 : vector<16x1xf32>
    %5 = vector.broadcast %4 : vector<16x1xf32> to vector<16x32xf32>
    %6 = arith.subf %0, %5 : vector<16x32xf32>
    %7 = arith.mulf %6, %6 : vector<16x32xf32>
    %cst_2 = arith.constant dense<0.000000e+00> : vector<16xf32>
    %8 = vector.multi_reduction <add>, %7, %cst_2 [1] : vector<16x32xf32> to vector<16xf32>
    %9 = vector.shape_cast %8 : vector<16xf32> to vector<16x1xf32>
    %cst_3 = arith.constant 3.200000e+01 : f32
    %10 = vector.broadcast %cst_3 : f32 to vector<16x1xf32>
    %11 = arith.divf %9, %10 : vector<16x1xf32>
    %12 = vector.broadcast %4 : vector<16x1xf32> to vector<16x32xf32>
    %13 = arith.subf %0, %12 : vector<16x32xf32>
    %cst_4 = arith.constant 9.99999996E-13 : f32
    %14 = vector.broadcast %cst_4 : f32 to vector<16x1xf32>
    %15 = arith.addf %11, %14 : vector<16x1xf32>
    %16 = math.rsqrt %15 : vector<16x1xf32>
    %17 = vector.broadcast %16 : vector<16x1xf32> to vector<16x32xf32>
    %18 = arith.mulf %13, %17 : vector<16x32xf32>
    %c0_5 = arith.constant 0 : index
    %c0_6 = arith.constant 0 : index
    %19 = vector.load %arg2[%c0_5, %c0_6] : memref<1x32xf32, #tpu.memory_space<vmem>>, vector<1x32xf32>
    %20 = vector.broadcast %19 : vector<1x32xf32> to vector<16x32xf32>
    %21 = arith.mulf %18, %20 : vector<16x32xf32>
    %c0_7 = arith.constant 0 : index
    %c0_8 = arith.constant 0 : index
    %22 = vector.load %arg3[%c0_7, %c0_8] : memref<1x32xf32, #tpu.memory_space<vmem>>, vector<1x32xf32>
    %23 = vector.broadcast %22 : vector<1x32xf32> to vector<16x32xf32>
    %24 = arith.addf %21, %23 : vector<16x32xf32>
    %c0_9 = arith.constant 0 : index
    %c0_10 = arith.constant 0 : index
    %25 = vector.load %arg4[%c0_9, %c0_10] : memref<16x1xf32, #tpu.memory_space<vmem>>, vector<16x1xf32>
    %c0_11 = arith.constant 0 : index
    %c0_12 = arith.constant 0 : index
    %26 = vector.load %arg5[%c0_11, %c0_12] : memref<1x32xf32, #tpu.memory_space<vmem>>, vector<1x32xf32>
    %27 = vector.broadcast %25 : vector<16x1xf32> to vector<16x32xf32>
    %28 = vector.broadcast %26 : vector<1x32xf32> to vector<16x32xf32>
    %29 = arith.mulf %27, %28 : vector<16x32xf32>
    %c0_13 = arith.constant 0 : index
    %c0_14 = arith.constant 0 : index
    %30 = vector.load %arg6[%c0_13, %c0_14] : memref<1x32xf32, #tpu.memory_space<vmem>>, vector<1x32xf32>
    %31 = vector.broadcast %30 : vector<1x32xf32> to vector<16x32xf32>
    %32 = arith.addf %29, %31 : vector<16x32xf32>
    %cst_15 = arith.constant dense<0.000000e+00> : vector<16xf32>
    %33 = vector.multi_reduction <add>, %32, %cst_15 [1] : vector<16x32xf32> to vector<16xf32>
    %34 = vector.shape_cast %33 : vector<16xf32> to vector<16x1xf32>
    %cst_16 = arith.constant 3.200000e+01 : f32
    %35 = vector.broadcast %cst_16 : f32 to vector<16x1xf32>
    %36 = arith.divf %34, %35 : vector<16x1xf32>
    %37 = vector.broadcast %36 : vector<16x1xf32> to vector<16x32xf32>
    %38 = arith.subf %32, %37 : vector<16x32xf32>
    %39 = arith.mulf %38, %38 : vector<16x32xf32>
    %cst_17 = arith.constant dense<0.000000e+00> : vector<16xf32>
    %40 = vector.multi_reduction <add>, %39, %cst_17 [1] : vector<16x32xf32> to vector<16xf32>
    %41 = vector.shape_cast %40 : vector<16xf32> to vector<16x1xf32>
    %cst_18 = arith.constant 3.200000e+01 : f32
    %42 = vector.broadcast %cst_18 : f32 to vector<16x1xf32>
    %43 = arith.divf %41, %42 : vector<16x1xf32>
    %44 = vector.broadcast %36 : vector<16x1xf32> to vector<16x32xf32>
    %45 = arith.subf %32, %44 : vector<16x32xf32>
    %cst_19 = arith.constant 9.99999974E-6 : f32
    %46 = vector.broadcast %cst_19 : f32 to vector<16x1xf32>
    %47 = arith.addf %43, %46 : vector<16x1xf32>
    %48 = math.rsqrt %47 : vector<16x1xf32>
    %49 = vector.broadcast %48 : vector<16x1xf32> to vector<16x32xf32>
    %50 = arith.mulf %45, %49 : vector<16x32xf32>
    %c0_20 = arith.constant 0 : index
    %c0_21 = arith.constant 0 : index
    %51 = vector.load %arg7[%c0_20, %c0_21] : memref<1x32xf32, #tpu.memory_space<vmem>>, vector<1x32xf32>
    %52 = vector.broadcast %51 : vector<1x32xf32> to vector<16x32xf32>
    %53 = arith.mulf %50, %52 : vector<16x32xf32>
    %c0_22 = arith.constant 0 : index
    %c0_23 = arith.constant 0 : index
    %54 = vector.load %arg8[%c0_22, %c0_23] : memref<1x32xf32, #tpu.memory_space<vmem>>, vector<1x32xf32>
    %55 = vector.broadcast %54 : vector<1x32xf32> to vector<16x32xf32>
    %56 = arith.addf %53, %55 : vector<16x32xf32>
    %cst_24 = arith.constant 0.000000e+00 : f32
    %57 = vector.broadcast %cst_24 : f32 to vector<16x32xf32>
    %58 = arith.maximumf %56, %57 : vector<16x32xf32>
    %59 = arith.addf %24, %58 : vector<16x32xf32>
    %c0_25 = arith.constant 0 : index
    %c0_26 = arith.constant 0 : index
    %60 = vector.load %arg9[%c0_25, %c0_26] : memref<16x32xf32, #tpu.memory_space<vmem>>, vector<16x32xf32>
    tpu.vector_store %arg9[%c0_25, %c0_26], %59 {strides = array<i32>} : memref<16x32xf32, #tpu.memory_space<vmem>>, vector<16x32xf32>,
    return
  }
  func.func @transform_0(%arg0: i32) -> (i32, i32) {
    %c0_i32 = arith.constant 0 : i32
    %c0_i32_0 = arith.constant 0 : i32
    return %arg0, %c0_i32 : i32, i32
  }
  func.func @transform_1(%arg0: i32) -> (i32, i32) {
    %c0_i32 = arith.constant 0 : i32
    %c0_i32_0 = arith.constant 0 : i32
    %c0_i32_1 = arith.constant 0 : i32
    return %c0_i32, %c0_i32_0 : i32, i32
  }
  func.func @transform_2(%arg0: i32) -> (i32, i32) {
    %c0_i32 = arith.constant 0 : i32
    %c0_i32_0 = arith.constant 0 : i32
    %c0_i32_1 = arith.constant 0 : i32
    return %c0_i32, %c0_i32_0 : i32, i32
  }
  func.func @transform_3(%arg0: i32) -> (i32, i32) {
    %c0_i32 = arith.constant 0 : i32
    %c0_i32_0 = arith.constant 0 : i32
    return %arg0, %c0_i32 : i32, i32
  }
  func.func @transform_4(%arg0: i32) -> (i32, i32) {
    %c0_i32 = arith.constant 0 : i32
    %c0_i32_0 = arith.constant 0 : i32
    %c0_i32_1 = arith.constant 0 : i32
    return %c0_i32, %c0_i32_0 : i32, i32
  }
  func.func @transform_5(%arg0: i32) -> (i32, i32) {
    %c0_i32 = arith.constant 0 : i32
    %c0_i32_0 = arith.constant 0 : i32
    %c0_i32_1 = arith.constant 0 : i32
    return %c0_i32, %c0_i32_0 : i32, i32
  }
  func.func @transform_6(%arg0: i32) -> (i32, i32) {
    %c0_i32 = arith.constant 0 : i32
    %c0_i32_0 = arith.constant 0 : i32
    %c0_i32_1 = arith.constant 0 : i32
    return %c0_i32, %c0_i32_0 : i32, i32
  }
  func.func @transform_7(%arg0: i32) -> (i32, i32) {
    %c0_i32 = arith.constant 0 : i32
    %c0_i32_0 = arith.constant 0 : i32
    %c0_i32_1 = arith.constant 0 : i32
    return %c0_i32, %c0_i32_0 : i32, i32
  }
  func.func @transform_8(%arg0: i32) -> (i32, i32) {
    %c0_i32 = arith.constant 0 : i32
    %c0_i32_0 = arith.constant 0 : i32
    return %arg0, %c0_i32 : i32, i32
  }
}

module attributes {stable_mosaic.version = 11 : i64} {
  func.func @_ffn_kernel(%arg0: i32, %arg1: memref<16x32xf32, #tpu.memory_space<vmem>>, %arg2: memref<32x128xf32, #tpu.memory_space<vmem>>, %arg3: memref<1x128xf32, #tpu.memory_space<vmem>>, %arg4: memref<128x32xf32, #tpu.memory_space<vmem>>, %arg5: memref<1x32xf32, #tpu.memory_space<vmem>>, %arg6: memref<1x32xf32, #tpu.memory_space<vmem>>, %arg7: memref<1x32xf32, #tpu.memory_space<vmem>>, %arg8: memref<16x32xf32, #tpu.memory_space<vmem>>) attributes {dimension_semantics = [#tpu.dimension_semantics<parallel>], iteration_bounds = array<i64: 1>, scalar_prefetch = 0 : i64, scratch_operands = 0 : i64, tpu.core_type = #tpu.core_type<tc>, window_params = [{transform_indices = @transform_0, window_bounds = array<i64: 16, 32>}, {pipeline_mode = #tpu.pipeline_mode<synchronous>, transform_indices = @transform_1, window_bounds = array<i64: 32, 128>}, {pipeline_mode = #tpu.pipeline_mode<synchronous>, transform_indices = @transform_2, window_bounds = array<i64: 1, 128>}, {pipeline_mode = #tpu.pipeline_mode<synchronous>, transform_indices = @transform_3, window_bounds = array<i64: 128, 32>}, {pipeline_mode = #tpu.pipeline_mode<synchronous>, transform_indices = @transform_4, window_bounds = array<i64: 1, 32>}, {pipeline_mode = #tpu.pipeline_mode<synchronous>, transform_indices = @transform_5, window_bounds = array<i64: 1, 32>}, {pipeline_mode = #tpu.pipeline_mode<synchronous>, transform_indices = @transform_6, window_bounds = array<i64: 1, 32>}, {transform_indices = @transform_7, window_bounds = array<i64: 16, 32>}]} {
    %c0 = arith.constant 0 : index
    %c0_0 = arith.constant 0 : index
    %0 = vector.load %arg1[%c0, %c0_0] : memref<16x32xf32, #tpu.memory_space<vmem>>, vector<16x32xf32>
    %c0_1 = arith.constant 0 : index
    %c0_2 = arith.constant 0 : index
    %1 = vector.load %arg2[%c0_1, %c0_2] : memref<32x128xf32, #tpu.memory_space<vmem>>, vector<32x128xf32>
    %cst = arith.constant dense<0.000000e+00> : vector<16x128xf32>
    %2 = tpu.matmul %0, %1, %cst {dimension_numbers = #tpu.dot_dimension_numbers<[1], [0], [0], [1], [0, 0, 1, 1], [], []>} : vector<16x32xf32>, vector<32x128xf32>, vector<16x128xf32> -> vector<16x128xf32>
    %c0_3 = arith.constant 0 : index
    %c0_4 = arith.constant 0 : index
    %3 = vector.load %arg3[%c0_3, %c0_4] : memref<1x128xf32, #tpu.memory_space<vmem>>, vector<1x128xf32>
    %4 = vector.broadcast %3 : vector<1x128xf32> to vector<16x128xf32>
    %5 = arith.addf %2, %4 : vector<16x128xf32>
    %6 = arith.mulf %5, %5 : vector<16x128xf32>
    %7 = arith.mulf %5, %6 : vector<16x128xf32>
    %cst_5 = arith.constant 4.471500e-02 : f32
    %8 = vector.broadcast %cst_5 : f32 to vector<16x128xf32>
    %9 = arith.mulf %8, %7 : vector<16x128xf32>
    %10 = arith.addf %5, %9 : vector<16x128xf32>
    %cst_6 = arith.constant 0.797884583 : f32
    %11 = vector.broadcast %cst_6 : f32 to vector<16x128xf32>
    %12 = arith.mulf %11, %10 : vector<16x128xf32>
    %13 = math.tanh %12 : vector<16x128xf32>
    %cst_7 = arith.constant 1.000000e+00 : f32
    %14 = vector.broadcast %cst_7 : f32 to vector<16x128xf32>
    %15 = arith.addf %14, %13 : vector<16x128xf32>
    %cst_8 = arith.constant 5.000000e-01 : f32
    %16 = vector.broadcast %cst_8 : f32 to vector<16x128xf32>
    %17 = arith.mulf %16, %15 : vector<16x128xf32>
    %18 = arith.mulf %5, %17 : vector<16x128xf32>
    %c0_9 = arith.constant 0 : index
    %c0_10 = arith.constant 0 : index
    %19 = vector.load %arg4[%c0_9, %c0_10] : memref<128x32xf32, #tpu.memory_space<vmem>>, vector<128x32xf32>
    %cst_11 = arith.constant dense<0.000000e+00> : vector<16x32xf32>
    %20 = tpu.matmul %18, %19, %cst_11 {dimension_numbers = #tpu.dot_dimension_numbers<[1], [0], [0], [1], [0, 0, 1, 1], [], []>} : vector<16x128xf32>, vector<128x32xf32>, vector<16x32xf32> -> vector<16x32xf32>
    %c0_12 = arith.constant 0 : index
    %c0_13 = arith.constant 0 : index
    %21 = vector.load %arg5[%c0_12, %c0_13] : memref<1x32xf32, #tpu.memory_space<vmem>>, vector<1x32xf32>
    %22 = vector.broadcast %21 : vector<1x32xf32> to vector<16x32xf32>
    %23 = arith.addf %20, %22 : vector<16x32xf32>
    %24 = arith.addf %23, %0 : vector<16x32xf32>
    %cst_14 = arith.constant dense<0.000000e+00> : vector<16xf32>
    %25 = vector.multi_reduction <add>, %24, %cst_14 [1] : vector<16x32xf32> to vector<16xf32>
    %26 = vector.shape_cast %25 : vector<16xf32> to vector<16x1xf32>
    %cst_15 = arith.constant 3.200000e+01 : f32
    %27 = vector.broadcast %cst_15 : f32 to vector<16x1xf32>
    %28 = arith.divf %26, %27 : vector<16x1xf32>
    %29 = vector.broadcast %28 : vector<16x1xf32> to vector<16x32xf32>
    %30 = arith.subf %24, %29 : vector<16x32xf32>
    %31 = arith.mulf %30, %30 : vector<16x32xf32>
    %cst_16 = arith.constant dense<0.000000e+00> : vector<16xf32>
    %32 = vector.multi_reduction <add>, %31, %cst_16 [1] : vector<16x32xf32> to vector<16xf32>
    %33 = vector.shape_cast %32 : vector<16xf32> to vector<16x1xf32>
    %cst_17 = arith.constant 3.200000e+01 : f32
    %34 = vector.broadcast %cst_17 : f32 to vector<16x1xf32>
    %35 = arith.divf %33, %34 : vector<16x1xf32>
    %36 = vector.broadcast %28 : vector<16x1xf32> to vector<16x32xf32>
    %37 = arith.subf %24, %36 : vector<16x32xf32>
    %cst_18 = arith.constant 9.99999996E-13 : f32
    %38 = vector.broadcast %cst_18 : f32 to vector<16x1xf32>
    %39 = arith.addf %35, %38 : vector<16x1xf32>
    %40 = math.rsqrt %39 : vector<16x1xf32>
    %41 = vector.broadcast %40 : vector<16x1xf32> to vector<16x32xf32>
    %42 = arith.mulf %37, %41 : vector<16x32xf32>
    %c0_19 = arith.constant 0 : index
    %c0_20 = arith.constant 0 : index
    %43 = vector.load %arg6[%c0_19, %c0_20] : memref<1x32xf32, #tpu.memory_space<vmem>>, vector<1x32xf32>
    %44 = vector.broadcast %43 : vector<1x32xf32> to vector<16x32xf32>
    %45 = arith.mulf %42, %44 : vector<16x32xf32>
    %c0_21 = arith.constant 0 : index
    %c0_22 = arith.constant 0 : index
    %46 = vector.load %arg7[%c0_21, %c0_22] : memref<1x32xf32, #tpu.memory_space<vmem>>, vector<1x32xf32>
    %47 = vector.broadcast %46 : vector<1x32xf32> to vector<16x32xf32>
    %48 = arith.addf %45, %47 : vector<16x32xf32>
    %c0_23 = arith.constant 0 : index
    %c0_24 = arith.constant 0 : index
    %49 = vector.load %arg8[%c0_23, %c0_24] : memref<16x32xf32, #tpu.memory_space<vmem>>, vector<16x32xf32>
    tpu.vector_store %arg8[%c0_23, %c0_24], %48 {strides = array<i32>} : memref<16x32xf32, #tpu.memory_space<vmem>>, vector<16x32xf32>,
    return
  }
  func.func @transform_0(%arg0: i32) -> (i32, i32) {
    %c0_i32 = arith.constant 0 : i32
    %c0_i32_0 = arith.constant 0 : i32
    return %arg0, %c0_i32 : i32, i32
  }
  func.func @transform_1(%arg0: i32) -> (i32, i32) {
    %c0_i32 = arith.constant 0 : i32
    %c0_i32_0 = arith.constant 0 : i32
    %c0_i32_1 = arith.constant 0 : i32
    return %c0_i32, %c0_i32_0 : i32, i32
  }
  func.func @transform_2(%arg0: i32) -> (i32, i32) {
    %c0_i32 = arith.constant 0 : i32
    %c0_i32_0 = arith.constant 0 : i32
    %c0_i32_1 = arith.constant 0 : i32
    return %c0_i32, %c0_i32_0 : i32, i32
  }
  func.func @transform_3(%arg0: i32) -> (i32, i32) {
    %c0_i32 = arith.constant 0 : i32
    %c0_i32_0 = arith.constant 0 : i32
    %c0_i32_1 = arith.constant 0 : i32
    return %c0_i32, %c0_i32_0 : i32, i32
  }
  func.func @transform_4(%arg0: i32) -> (i32, i32) {
    %c0_i32 = arith.constant 0 : i32
    %c0_i32_0 = arith.constant 0 : i32
    %c0_i32_1 = arith.constant 0 : i32
    return %c0_i32, %c0_i32_0 : i32, i32
  }
  func.func @transform_5(%arg0: i32) -> (i32, i32) {
    %c0_i32 = arith.constant 0 : i32
    %c0_i32_0 = arith.constant 0 : i32
    %c0_i32_1 = arith.constant 0 : i32
    return %c0_i32, %c0_i32_0 : i32, i32
  }
  func.func @transform_6(%arg0: i32) -> (i32, i32) {
    %c0_i32 = arith.constant 0 : i32
    %c0_i32_0 = arith.constant 0 : i32
    %c0_i32_1 = arith.constant 0 : i32
    return %c0_i32, %c0_i32_0 : i32, i32
  }
  func.func @transform_7(%arg0: i32) -> (i32, i32) {
    %c0_i32 = arith.constant 0 : i32
    %c0_i32_0 = arith.constant 0 : i32
    return %arg0, %c0_i32 : i32, i32
  }
}

module attributes {stable_mosaic.version = 11 : i64} {
  func.func @_attn_block_kernel(%arg0: i32, %arg1: memref<1x8x32xf32, #tpu.memory_space<vmem>>, %arg2: memref<32x96xf32, #tpu.memory_space<vmem>>, %arg3: memref<1x96xf32, #tpu.memory_space<vmem>>, %arg4: memref<1x4x8x8xf32, #tpu.memory_space<vmem>>, %arg5: memref<1x4x8x8xf32, #tpu.memory_space<vmem>>, %arg6: memref<1x1x8xf32, #tpu.memory_space<vmem>>, %arg7: memref<32x32xf32, #tpu.memory_space<vmem>>, %arg8: memref<1x32xf32, #tpu.memory_space<vmem>>, %arg9: memref<1x32xf32, #tpu.memory_space<vmem>>, %arg10: memref<1x32xf32, #tpu.memory_space<vmem>>, %arg11: memref<1x8x32xf32, #tpu.memory_space<vmem>>) attributes {dimension_semantics = [#tpu.dimension_semantics<parallel>], iteration_bounds = array<i64: 2>, scalar_prefetch = 0 : i64, scratch_operands = 0 : i64, tpu.core_type = #tpu.core_type<tc>, window_params = [{transform_indices = @transform_0, window_bounds = array<i64: 1, 8, 32>}, {pipeline_mode = #tpu.pipeline_mode<synchronous>, transform_indices = @transform_1, window_bounds = array<i64: 32, 96>}, {pipeline_mode = #tpu.pipeline_mode<synchronous>, transform_indices = @transform_2, window_bounds = array<i64: 1, 96>}, {transform_indices = @transform_3, window_bounds = array<i64: 1, 4, 8, 8>}, {transform_indices = @transform_4, window_bounds = array<i64: 1, 4, 8, 8>}, {transform_indices = @transform_5, window_bounds = array<i64: 1, 1, 8>}, {pipeline_mode = #tpu.pipeline_mode<synchronous>, transform_indices = @transform_6, window_bounds = array<i64: 32, 32>}, {pipeline_mode = #tpu.pipeline_mode<synchronous>, transform_indices = @transform_7, window_bounds = array<i64: 1, 32>}, {pipeline_mode = #tpu.pipeline_mode<synchronous>, transform_indices = @transform_8, window_bounds = array<i64: 1, 32>}, {pipeline_mode = #tpu.pipeline_mode<synchronous>, transform_indices = @transform_9, window_bounds = array<i64: 1, 32>}, {transform_indices = @transform_10, window_bounds = array<i64: 1, 8, 32>}]} {
    %c0 = arith.constant 0 : index
    %c0_0 = arith.constant 0 : index
    %c0_1 = arith.constant 0 : index
    %0 = vector.load %arg1[%c0, %c0_0, %c0_1] : memref<1x8x32xf32, #tpu.memory_space<vmem>>, vector<1x8x32xf32>
    %1 = vector.shape_cast %0 : vector<1x8x32xf32> to vector<8x32xf32>
    %c0_2 = arith.constant 0 : index
    %c0_3 = arith.constant 0 : index
    %2 = vector.load %arg2[%c0_2, %c0_3] : memref<32x96xf32, #tpu.memory_space<vmem>>, vector<32x96xf32>
    %cst = arith.constant dense<0.000000e+00> : vector<8x96xf32>
    %3 = tpu.matmul %1, %2, %cst {dimension_numbers = #tpu.dot_dimension_numbers<[1], [0], [0], [1], [0, 0, 1, 1], [], []>} : vector<8x32xf32>, vector<32x96xf32>, vector<8x96xf32> -> vector<8x96xf32>
    %c0_4 = arith.constant 0 : index
    %c0_5 = arith.constant 0 : index
    %4 = vector.load %arg3[%c0_4, %c0_5] : memref<1x96xf32, #tpu.memory_space<vmem>>, vector<1x96xf32>
    %5 = vector.broadcast %4 : vector<1x96xf32> to vector<8x96xf32>
    %6 = arith.addf %3, %5 : vector<8x96xf32>
    %7 = vector.extract_strided_slice %6 {offsets = [0, 0], sizes = [8, 32], strides = [1, 1]} : vector<8x96xf32> to vector<8x32xf32>
    %cst_6 = arith.constant 0.353553385 : f32
    %8 = vector.broadcast %cst_6 : f32 to vector<8x32xf32>
    %9 = arith.mulf %7, %8 : vector<8x32xf32>
    %10 = vector.shape_cast %9 : vector<8x32xf32> to vector<8x4x8xf32>
    %11 = vector.extract_strided_slice %6 {offsets = [0, 32], sizes = [8, 32], strides = [1, 1]} : vector<8x96xf32> to vector<8x32xf32>
    %12 = vector.shape_cast %11 : vector<8x32xf32> to vector<8x4x8xf32>
    %13 = vector.extract_strided_slice %6 {offsets = [0, 64], sizes = [8, 32], strides = [1, 1]} : vector<8x96xf32> to vector<8x32xf32>
    %14 = vector.shape_cast %13 : vector<8x32xf32> to vector<8x4x8xf32>
    %c0_7 = arith.constant 0 : index
    %c0_8 = arith.constant 0 : index
    %c0_9 = arith.constant 0 : index
    %c0_10 = arith.constant 0 : index
    %15 = vector.load %arg4[%c0_7, %c0_8, %c0_9, %c0_10] : memref<1x4x8x8xf32, #tpu.memory_space<vmem>>, vector<1x4x8x8xf32>
    %16 = vector.shape_cast %15 : vector<1x4x8x8xf32> to vector<4x8x8xf32>
    %c0_11 = arith.constant 0 : index
    %c0_12 = arith.constant 0 : index
    %c0_13 = arith.constant 0 : index
    %c0_14 = arith.constant 0 : index
    %17 = vector.load %arg5[%c0_11, %c0_12, %c0_13, %c0_14] : memref<1x4x8x8xf32, #tpu.memory_space<vmem>>, vector<1x4x8x8xf32>
    %18 = vector.shape_cast %17 : vector<1x4x8x8xf32> to vector<4x8x8xf32>
    %c0_15 = arith.constant 0 : index
    %c0_16 = arith.constant 0 : index
    %c0_17 = arith.constant 0 : index
    %19 = vector.load %arg6[%c0_15, %c0_16, %c0_17] : memref<1x1x8xf32, #tpu.memory_space<vmem>>, vector<1x1x8xf32>
    %20 = vector.shape_cast %19 : vector<1x1x8xf32> to vector<1x8xf32>
    "tpu.trace_start"() <{level = 10 : i32, message = "qhd,khd->hqk"}> : () -> ()
    %cst_18 = arith.constant dense<0.000000e+00> : vector<4x8x8xf32>
    %21 = tpu.matmul %10, %12, %cst_18 {dimension_numbers = #tpu.dot_dimension_numbers<[2], [2], [0], [0], [0, 1, 0, 0, 1, 0], [1], [1]>} : vector<8x4x8xf32>, vector<8x4x8xf32>, vector<4x8x8xf32> -> vector<4x8x8xf32>
    "tpu.trace_stop"() : () -> ()
    %22 = vector.shape_cast %20 : vector<1x8xf32> to vector<1x1x8xf32>
    %23 = vector.broadcast %22 : vector<1x1x8xf32> to vector<4x8x8xf32>
    %24 = arith.addf %21, %23 : vector<4x8x8xf32>
    "tpu.trace_start"() <{level = 10 : i32, message = "qhd,hkd->hqk"}> : () -> ()
    %cst_19 = arith.constant dense<0.000000e+00> : vector<4x8x8xf32>
    %25 = tpu.matmul %10, %16, %cst_19 {dimension_numbers = #tpu.dot_dimension_numbers<[2], [2], [0], [1], [0, 1, 0, 0, 1, 1], [1], [0]>} : vector<8x4x8xf32>, vector<4x8x8xf32>, vector<4x8x8xf32> -> vector<4x8x8xf32>
    "tpu.trace_stop"() : () -> ()
    %cst_20 = arith.constant 1.000000e+00 : f32
    %26 = vector.broadcast %cst_20 : f32 to vector<4x8x8xf32>
    %27 = arith.addf %25, %26 : vector<4x8x8xf32>
    %cst_21 = arith.constant dense<0xFF800000> : vector<4x8xf32>
    %28 = vector.multi_reduction <maximumf>, %24, %cst_21 [2] : vector<4x8x8xf32> to vector<4x8xf32>
    %29 = vector.shape_cast %28 : vector<4x8xf32> to vector<4x8x1xf32>
    %cst_22 = arith.constant dense<0xFF800000> : vector<4x8xf32>
    %30 = vector.multi_reduction <maximumf>, %27, %cst_22 [2] : vector<4x8x8xf32> to vector<4x8xf32>
    %31 = vector.shape_cast %30 : vector<4x8xf32> to vector<4x8x1xf32>
    %32 = arith.maximumf %29, %31 : vector<4x8x1xf32>
    %33 = vector.broadcast %32 : vector<4x8x1xf32> to vector<4x8x8xf32>
    %34 = arith.subf %24, %33 : vector<4x8x8xf32>
    %35 = math.exp %34 : vector<4x8x8xf32>
    %36 = vector.broadcast %32 : vector<4x8x1xf32> to vector<4x8x8xf32>
    %37 = arith.subf %27, %36 : vector<4x8x8xf32>
    %38 = math.exp %37 : vector<4x8x8xf32>
    %cst_23 = arith.constant dense<0.000000e+00> : vector<4x8xf32>
    %39 = vector.multi_reduction <add>, %35, %cst_23 [2] : vector<4x8x8xf32> to vector<4x8xf32>
    %40 = vector.shape_cast %39 : vector<4x8xf32> to vector<4x8x1xf32>
    %cst_24 = arith.constant dense<0.000000e+00> : vector<4x8xf32>
    %41 = vector.multi_reduction <add>, %38, %cst_24 [2] : vector<4x8x8xf32> to vector<4x8xf32>
    %42 = vector.shape_cast %41 : vector<4x8xf32> to vector<4x8x1xf32>
    %43 = arith.addf %40, %42 : vector<4x8x1xf32>
    %44 = tpu.reciprocal %43 {approx = true} : vector<4x8x1xf32> -> vector<4x8x1xf32>
    "tpu.trace_start"() <{level = 10 : i32, message = "hqk,khd->hqd"}> : () -> ()
    %cst_25 = arith.constant dense<0.000000e+00> : vector<4x8x8xf32>
    %45 = tpu.matmul %35, %14, %cst_25 {dimension_numbers = #tpu.dot_dimension_numbers<[2], [0], [1], [2], [0, 0, 0, 1, 1, 2], [0], [1]>} : vector<4x8x8xf32>, vector<8x4x8xf32>, vector<4x8x8xf32> -> vector<4x8x8xf32>
    "tpu.trace_stop"() : () -> ()
    "tpu.trace_start"() <{level = 10 : i32, message = "hqk,hkd->hqd"}> : () -> ()
    %cst_26 = arith.constant dense<0.000000e+00> : vector<4x8x8xf32>
    %46 = tpu.matmul %38, %18, %cst_26 {dimension_numbers = #tpu.dot_dimension_numbers<[2], [1], [1], [2], [0, 0, 0, 1, 1, 2], [0], [0]>} : vector<4x8x8xf32>, vector<4x8x8xf32>, vector<4x8x8xf32> -> vector<4x8x8xf32>
    "tpu.trace_stop"() : () -> ()
    %47 = arith.addf %45, %46 : vector<4x8x8xf32>
    %48 = vector.broadcast %44 : vector<4x8x1xf32> to vector<4x8x8xf32>
    %49 = arith.mulf %47, %48 : vector<4x8x8xf32>
    %50 = tpu.transpose %49, [1, 0, 2] : vector<4x8x8xf32> -> vector<8x4x8xf32>
    %51 = vector.shape_cast %50 : vector<8x4x8xf32> to vector<8x32xf32>
    %c0_27 = arith.constant 0 : index
    %c0_28 = arith.constant 0 : index
    %52 = vector.load %arg7[%c0_27, %c0_28] : memref<32x32xf32, #tpu.memory_space<vmem>>, vector<32x32xf32>
    %cst_29 = arith.constant dense<0.000000e+00> : vector<8x32xf32>
    %53 = tpu.matmul %51, %52, %cst_29 {dimension_numbers = #tpu.dot_dimension_numbers<[1], [0], [0], [1], [0, 0, 1, 1], [], []>} : vector<8x32xf32>, vector<32x32xf32>, vector<8x32xf32> -> vector<8x32xf32>
    %c0_30 = arith.constant 0 : index
    %c0_31 = arith.constant 0 : index
    %54 = vector.load %arg8[%c0_30, %c0_31] : memref<1x32xf32, #tpu.memory_space<vmem>>, vector<1x32xf32>
    %55 = vector.broadcast %54 : vector<1x32xf32> to vector<8x32xf32>
    %56 = arith.addf %53, %55 : vector<8x32xf32>
    %57 = arith.addf %56, %1 : vector<8x32xf32>
    %cst_32 = arith.constant dense<0.000000e+00> : vector<8xf32>
    %58 = vector.multi_reduction <add>, %57, %cst_32 [1] : vector<8x32xf32> to vector<8xf32>
    %59 = vector.shape_cast %58 : vector<8xf32> to vector<8x1xf32>
    %cst_33 = arith.constant 3.200000e+01 : f32
    %60 = vector.broadcast %cst_33 : f32 to vector<8x1xf32>
    %61 = arith.divf %59, %60 : vector<8x1xf32>
    %62 = vector.broadcast %61 : vector<8x1xf32> to vector<8x32xf32>
    %63 = arith.subf %57, %62 : vector<8x32xf32>
    %64 = arith.mulf %63, %63 : vector<8x32xf32>
    %cst_34 = arith.constant dense<0.000000e+00> : vector<8xf32>
    %65 = vector.multi_reduction <add>, %64, %cst_34 [1] : vector<8x32xf32> to vector<8xf32>
    %66 = vector.shape_cast %65 : vector<8xf32> to vector<8x1xf32>
    %cst_35 = arith.constant 3.200000e+01 : f32
    %67 = vector.broadcast %cst_35 : f32 to vector<8x1xf32>
    %68 = arith.divf %66, %67 : vector<8x1xf32>
    %69 = vector.broadcast %61 : vector<8x1xf32> to vector<8x32xf32>
    %70 = arith.subf %57, %69 : vector<8x32xf32>
    %cst_36 = arith.constant 9.99999996E-13 : f32
    %71 = vector.broadcast %cst_36 : f32 to vector<8x1xf32>
    %72 = arith.addf %68, %71 : vector<8x1xf32>
    %73 = math.rsqrt %72 : vector<8x1xf32>
    %74 = vector.broadcast %73 : vector<8x1xf32> to vector<8x32xf32>
    %75 = arith.mulf %70, %74 : vector<8x32xf32>
    %c0_37 = arith.constant 0 : index
    %c0_38 = arith.constant 0 : index
    %76 = vector.load %arg9[%c0_37, %c0_38] : memref<1x32xf32, #tpu.memory_space<vmem>>, vector<1x32xf32>
    %77 = vector.broadcast %76 : vector<1x32xf32> to vector<8x32xf32>
    %78 = arith.mulf %75, %77 : vector<8x32xf32>
    %c0_39 = arith.constant 0 : index
    %c0_40 = arith.constant 0 : index
    %79 = vector.load %arg10[%c0_39, %c0_40] : memref<1x32xf32, #tpu.memory_space<vmem>>, vector<1x32xf32>
    %80 = vector.broadcast %79 : vector<1x32xf32> to vector<8x32xf32>
    %81 = arith.addf %78, %80 : vector<8x32xf32>
    %c0_41 = arith.constant 0 : index
    %c0_42 = arith.constant 0 : index
    %c0_43 = arith.constant 0 : index
    %82 = vector.load %arg11[%c0_41, %c0_42, %c0_43] : memref<1x8x32xf32, #tpu.memory_space<vmem>>, vector<1x8x32xf32>
    %83 = vector.shape_cast %82 : vector<1x8x32xf32> to vector<8x32xf32>
    %84 = vector.shape_cast %81 : vector<8x32xf32> to vector<1x8x32xf32>
    tpu.vector_store %arg11[%c0_41, %c0_42, %c0_43], %84 {strides = array<i32>} : memref<1x8x32xf32, #tpu.memory_space<vmem>>, vector<1x8x32xf32>,
    return
  }
  func.func @transform_0(%arg0: i32) -> (i32, i32, i32) {
    %c0_i32 = arith.constant 0 : i32
    %c0_i32_0 = arith.constant 0 : i32
    %c0_i32_1 = arith.constant 0 : i32
    return %arg0, %c0_i32, %c0_i32_0 : i32, i32, i32
  }
  func.func @transform_1(%arg0: i32) -> (i32, i32) {
    %c0_i32 = arith.constant 0 : i32
    %c0_i32_0 = arith.constant 0 : i32
    %c0_i32_1 = arith.constant 0 : i32
    return %c0_i32, %c0_i32_0 : i32, i32
  }
  func.func @transform_2(%arg0: i32) -> (i32, i32) {
    %c0_i32 = arith.constant 0 : i32
    %c0_i32_0 = arith.constant 0 : i32
    %c0_i32_1 = arith.constant 0 : i32
    return %c0_i32, %c0_i32_0 : i32, i32
  }
  func.func @transform_3(%arg0: i32) -> (i32, i32, i32, i32) {
    %c0_i32 = arith.constant 0 : i32
    %c0_i32_0 = arith.constant 0 : i32
    %c0_i32_1 = arith.constant 0 : i32
    %c0_i32_2 = arith.constant 0 : i32
    return %arg0, %c0_i32, %c0_i32_0, %c0_i32_1 : i32, i32, i32, i32
  }
  func.func @transform_4(%arg0: i32) -> (i32, i32, i32, i32) {
    %c0_i32 = arith.constant 0 : i32
    %c0_i32_0 = arith.constant 0 : i32
    %c0_i32_1 = arith.constant 0 : i32
    %c0_i32_2 = arith.constant 0 : i32
    return %arg0, %c0_i32, %c0_i32_0, %c0_i32_1 : i32, i32, i32, i32
  }
  func.func @transform_5(%arg0: i32) -> (i32, i32, i32) {
    %c0_i32 = arith.constant 0 : i32
    %c0_i32_0 = arith.constant 0 : i32
    %c0_i32_1 = arith.constant 0 : i32
    return %arg0, %c0_i32, %c0_i32_0 : i32, i32, i32
  }
  func.func @transform_6(%arg0: i32) -> (i32, i32) {
    %c0_i32 = arith.constant 0 : i32
    %c0_i32_0 = arith.constant 0 : i32
    %c0_i32_1 = arith.constant 0 : i32
    return %c0_i32, %c0_i32_0 : i32, i32
  }
  func.func @transform_7(%arg0: i32) -> (i32, i32) {
    %c0_i32 = arith.constant 0 : i32
    %c0_i32_0 = arith.constant 0 : i32
    %c0_i32_1 = arith.constant 0 : i32
    return %c0_i32, %c0_i32_0 : i32, i32
  }
  func.func @transform_8(%arg0: i32) -> (i32, i32) {
    %c0_i32 = arith.constant 0 : i32
    %c0_i32_0 = arith.constant 0 : i32
    %c0_i32_1 = arith.constant 0 : i32
    return %c0_i32, %c0_i32_0 : i32, i32
  }
  func.func @transform_9(%arg0: i32) -> (i32, i32) {
    %c0_i32 = arith.constant 0 : i32
    %c0_i32_0 = arith.constant 0 : i32
    %c0_i32_1 = arith.constant 0 : i32
    return %c0_i32, %c0_i32_0 : i32, i32
  }
  func.func @transform_10(%arg0: i32) -> (i32, i32, i32) {
    %c0_i32 = arith.constant 0 : i32
    %c0_i32_0 = arith.constant 0 : i32
    %c0_i32_1 = arith.constant 0 : i32
    return %arg0, %c0_i32, %c0_i32_0 : i32, i32, i32
  }
}

module attributes {stable_mosaic.version = 11 : i64} {
  func.func @_ffn_kernel(%arg0: i32, %arg1: memref<16x32xf32, #tpu.memory_space<vmem>>, %arg2: memref<32x128xf32, #tpu.memory_space<vmem>>, %arg3: memref<1x128xf32, #tpu.memory_space<vmem>>, %arg4: memref<128x32xf32, #tpu.memory_space<vmem>>, %arg5: memref<1x32xf32, #tpu.memory_space<vmem>>, %arg6: memref<1x32xf32, #tpu.memory_space<vmem>>, %arg7: memref<1x32xf32, #tpu.memory_space<vmem>>, %arg8: memref<16x32xf32, #tpu.memory_space<vmem>>) attributes {dimension_semantics = [#tpu.dimension_semantics<parallel>], iteration_bounds = array<i64: 1>, scalar_prefetch = 0 : i64, scratch_operands = 0 : i64, tpu.core_type = #tpu.core_type<tc>, window_params = [{transform_indices = @transform_0, window_bounds = array<i64: 16, 32>}, {pipeline_mode = #tpu.pipeline_mode<synchronous>, transform_indices = @transform_1, window_bounds = array<i64: 32, 128>}, {pipeline_mode = #tpu.pipeline_mode<synchronous>, transform_indices = @transform_2, window_bounds = array<i64: 1, 128>}, {pipeline_mode = #tpu.pipeline_mode<synchronous>, transform_indices = @transform_3, window_bounds = array<i64: 128, 32>}, {pipeline_mode = #tpu.pipeline_mode<synchronous>, transform_indices = @transform_4, window_bounds = array<i64: 1, 32>}, {pipeline_mode = #tpu.pipeline_mode<synchronous>, transform_indices = @transform_5, window_bounds = array<i64: 1, 32>}, {pipeline_mode = #tpu.pipeline_mode<synchronous>, transform_indices = @transform_6, window_bounds = array<i64: 1, 32>}, {transform_indices = @transform_7, window_bounds = array<i64: 16, 32>}]} {
    %c0 = arith.constant 0 : index
    %c0_0 = arith.constant 0 : index
    %0 = vector.load %arg1[%c0, %c0_0] : memref<16x32xf32, #tpu.memory_space<vmem>>, vector<16x32xf32>
    %c0_1 = arith.constant 0 : index
    %c0_2 = arith.constant 0 : index
    %1 = vector.load %arg2[%c0_1, %c0_2] : memref<32x128xf32, #tpu.memory_space<vmem>>, vector<32x128xf32>
    %cst = arith.constant dense<0.000000e+00> : vector<16x128xf32>
    %2 = tpu.matmul %0, %1, %cst {dimension_numbers = #tpu.dot_dimension_numbers<[1], [0], [0], [1], [0, 0, 1, 1], [], []>} : vector<16x32xf32>, vector<32x128xf32>, vector<16x128xf32> -> vector<16x128xf32>
    %c0_3 = arith.constant 0 : index
    %c0_4 = arith.constant 0 : index
    %3 = vector.load %arg3[%c0_3, %c0_4] : memref<1x128xf32, #tpu.memory_space<vmem>>, vector<1x128xf32>
    %4 = vector.broadcast %3 : vector<1x128xf32> to vector<16x128xf32>
    %5 = arith.addf %2, %4 : vector<16x128xf32>
    %6 = arith.mulf %5, %5 : vector<16x128xf32>
    %7 = arith.mulf %5, %6 : vector<16x128xf32>
    %cst_5 = arith.constant 4.471500e-02 : f32
    %8 = vector.broadcast %cst_5 : f32 to vector<16x128xf32>
    %9 = arith.mulf %8, %7 : vector<16x128xf32>
    %10 = arith.addf %5, %9 : vector<16x128xf32>
    %cst_6 = arith.constant 0.797884583 : f32
    %11 = vector.broadcast %cst_6 : f32 to vector<16x128xf32>
    %12 = arith.mulf %11, %10 : vector<16x128xf32>
    %13 = math.tanh %12 : vector<16x128xf32>
    %cst_7 = arith.constant 1.000000e+00 : f32
    %14 = vector.broadcast %cst_7 : f32 to vector<16x128xf32>
    %15 = arith.addf %14, %13 : vector<16x128xf32>
    %cst_8 = arith.constant 5.000000e-01 : f32
    %16 = vector.broadcast %cst_8 : f32 to vector<16x128xf32>
    %17 = arith.mulf %16, %15 : vector<16x128xf32>
    %18 = arith.mulf %5, %17 : vector<16x128xf32>
    %c0_9 = arith.constant 0 : index
    %c0_10 = arith.constant 0 : index
    %19 = vector.load %arg4[%c0_9, %c0_10] : memref<128x32xf32, #tpu.memory_space<vmem>>, vector<128x32xf32>
    %cst_11 = arith.constant dense<0.000000e+00> : vector<16x32xf32>
    %20 = tpu.matmul %18, %19, %cst_11 {dimension_numbers = #tpu.dot_dimension_numbers<[1], [0], [0], [1], [0, 0, 1, 1], [], []>} : vector<16x128xf32>, vector<128x32xf32>, vector<16x32xf32> -> vector<16x32xf32>
    %c0_12 = arith.constant 0 : index
    %c0_13 = arith.constant 0 : index
    %21 = vector.load %arg5[%c0_12, %c0_13] : memref<1x32xf32, #tpu.memory_space<vmem>>, vector<1x32xf32>
    %22 = vector.broadcast %21 : vector<1x32xf32> to vector<16x32xf32>
    %23 = arith.addf %20, %22 : vector<16x32xf32>
    %24 = arith.addf %23, %0 : vector<16x32xf32>
    %cst_14 = arith.constant dense<0.000000e+00> : vector<16xf32>
    %25 = vector.multi_reduction <add>, %24, %cst_14 [1] : vector<16x32xf32> to vector<16xf32>
    %26 = vector.shape_cast %25 : vector<16xf32> to vector<16x1xf32>
    %cst_15 = arith.constant 3.200000e+01 : f32
    %27 = vector.broadcast %cst_15 : f32 to vector<16x1xf32>
    %28 = arith.divf %26, %27 : vector<16x1xf32>
    %29 = vector.broadcast %28 : vector<16x1xf32> to vector<16x32xf32>
    %30 = arith.subf %24, %29 : vector<16x32xf32>
    %31 = arith.mulf %30, %30 : vector<16x32xf32>
    %cst_16 = arith.constant dense<0.000000e+00> : vector<16xf32>
    %32 = vector.multi_reduction <add>, %31, %cst_16 [1] : vector<16x32xf32> to vector<16xf32>
    %33 = vector.shape_cast %32 : vector<16xf32> to vector<16x1xf32>
    %cst_17 = arith.constant 3.200000e+01 : f32
    %34 = vector.broadcast %cst_17 : f32 to vector<16x1xf32>
    %35 = arith.divf %33, %34 : vector<16x1xf32>
    %36 = vector.broadcast %28 : vector<16x1xf32> to vector<16x32xf32>
    %37 = arith.subf %24, %36 : vector<16x32xf32>
    %cst_18 = arith.constant 9.99999996E-13 : f32
    %38 = vector.broadcast %cst_18 : f32 to vector<16x1xf32>
    %39 = arith.addf %35, %38 : vector<16x1xf32>
    %40 = math.rsqrt %39 : vector<16x1xf32>
    %41 = vector.broadcast %40 : vector<16x1xf32> to vector<16x32xf32>
    %42 = arith.mulf %37, %41 : vector<16x32xf32>
    %c0_19 = arith.constant 0 : index
    %c0_20 = arith.constant 0 : index
    %43 = vector.load %arg6[%c0_19, %c0_20] : memref<1x32xf32, #tpu.memory_space<vmem>>, vector<1x32xf32>
    %44 = vector.broadcast %43 : vector<1x32xf32> to vector<16x32xf32>
    %45 = arith.mulf %42, %44 : vector<16x32xf32>
    %c0_21 = arith.constant 0 : index
    %c0_22 = arith.constant 0 : index
    %46 = vector.load %arg7[%c0_21, %c0_22] : memref<1x32xf32, #tpu.memory_space<vmem>>, vector<1x32xf32>
    %47 = vector.broadcast %46 : vector<1x32xf32> to vector<16x32xf32>
    %48 = arith.addf %45, %47 : vector<16x32xf32>
    %c0_23 = arith.constant 0 : index
    %c0_24 = arith.constant 0 : index
    %49 = vector.load %arg8[%c0_23, %c0_24] : memref<16x32xf32, #tpu.memory_space<vmem>>, vector<16x32xf32>
    tpu.vector_store %arg8[%c0_23, %c0_24], %48 {strides = array<i32>} : memref<16x32xf32, #tpu.memory_space<vmem>>, vector<16x32xf32>,
    return
  }
  func.func @transform_0(%arg0: i32) -> (i32, i32) {
    %c0_i32 = arith.constant 0 : i32
    %c0_i32_0 = arith.constant 0 : i32
    return %arg0, %c0_i32 : i32, i32
  }
  func.func @transform_1(%arg0: i32) -> (i32, i32) {
    %c0_i32 = arith.constant 0 : i32
    %c0_i32_0 = arith.constant 0 : i32
    %c0_i32_1 = arith.constant 0 : i32
    return %c0_i32, %c0_i32_0 : i32, i32
  }
  func.func @transform_2(%arg0: i32) -> (i32, i32) {
    %c0_i32 = arith.constant 0 : i32
    %c0_i32_0 = arith.constant 0 : i32
    %c0_i32_1 = arith.constant 0 : i32
    return %c0_i32, %c0_i32_0 : i32, i32
  }
  func.func @transform_3(%arg0: i32) -> (i32, i32) {
    %c0_i32 = arith.constant 0 : i32
    %c0_i32_0 = arith.constant 0 : i32
    %c0_i32_1 = arith.constant 0 : i32
    return %c0_i32, %c0_i32_0 : i32, i32
  }
  func.func @transform_4(%arg0: i32) -> (i32, i32) {
    %c0_i32 = arith.constant 0 : i32
    %c0_i32_0 = arith.constant 0 : i32
    %c0_i32_1 = arith.constant 0 : i32
    return %c0_i32, %c0_i32_0 : i32, i32
  }
  func.func @transform_5(%arg0: i32) -> (i32, i32) {
    %c0_i32 = arith.constant 0 : i32
    %c0_i32_0 = arith.constant 0 : i32
    %c0_i32_1 = arith.constant 0 : i32
    return %c0_i32, %c0_i32_0 : i32, i32
  }
  func.func @transform_6(%arg0: i32) -> (i32, i32) {
    %c0_i32 = arith.constant 0 : i32
    %c0_i32_0 = arith.constant 0 : i32
    %c0_i32_1 = arith.constant 0 : i32
    return %c0_i32, %c0_i32_0 : i32, i32
  }
  func.func @transform_7(%arg0: i32) -> (i32, i32) {
    %c0_i32 = arith.constant 0 : i32
    %c0_i32_0 = arith.constant 0 : i32
    return %arg0, %c0_i32 : i32, i32
  }
}

</mosaic_0001>

<llo_original>
// kernel: prompted_bert_forward.7
$region0: #{prompted_bert_forward.7}
  #allocation0 [shape = 'u32[]', space=smem, size = 0x4, offset = 0x4, fixed_abs, tag = 'smem constant byte address 0x4 - core index']
  #allocation1 [shape = 'u32[144,128]{1,0:T(1,128)}', space=vmem, size = 0x12000, scoped, tag = 'internal scratch']
  %s0 = inlined_call_operand.vmem [shape: f32[16,32], index: 0, kind: input, shape index: {}]
  %s1 = inlined_call_operand.vmem [shape: f32[32,128], index: 1, kind: input, shape index: {}]
  %s2 = inlined_call_operand.vmem [shape: f32[1,128], index: 2, kind: input, shape index: {}]
  %s3 = inlined_call_operand.vmem [shape: f32[128,32], index: 3, kind: input, shape index: {}]
  %s4 = inlined_call_operand.vmem [shape: f32[1,32], index: 4, kind: input, shape index: {}]
  %s5 = inlined_call_operand.vmem [shape: f32[1,32], index: 5, kind: input, shape index: {}]
  %s6 = inlined_call_operand.vmem [shape: f32[1,32], index: 6, kind: input, shape index: {}]
  %s7 = inlined_call_operand.vmem [shape: f32[16,32], index: 7, kind: output, shape index: {}]
  %s8 = sld [smem:[#allocation0]]
  $region38: #{prompted_bert_forward.7} parent=0
    _
  %s10 = ssub.s32 1, %s8
  %s11 = scalar_select 0, %s10, %s8
  // Predicated region
  $region2: #{prompted_bert_forward.7} parent=0 // pred_check
    _
  $region3: #{prompted_bert_forward.7} parent=0 // pred_check_branch
    %13 = sbr.rel (0) target = $region5
  $region4: #{prompted_bert_forward.7} parent=0 // pred_region
    _
  $region5: #{prompted_bert_forward.7} parent=0 // pred_fallthru
    _
  // Predicated region
  $region6: #{prompted_bert_forward.7} parent=0 // pred_check
    _
  $region7: #{prompted_bert_forward.7} parent=0 // pred_check_branch
    %15 = sbr.rel (0) target = $region9
  $region8: #{prompted_bert_forward.7} parent=0 // pred_region
    _
  $region9: #{prompted_bert_forward.7} parent=0 // pred_fallthru
    _
  // Predicated region
  $region10: #{prompted_bert_forward.7} parent=0 // pred_check
    _
  $region11: #{prompted_bert_forward.7} parent=0 // pred_check_branch
    %17 = sbr.rel (0) target = $region13
  $region12: #{prompted_bert_forward.7} parent=0 // pred_region
    _
  $region13: #{prompted_bert_forward.7} parent=0 // pred_fallthru
    _
  // Predicated region
  $region14: #{prompted_bert_forward.7} parent=0 // pred_check
    _
  $region15: #{prompted_bert_forward.7} parent=0 // pred_check_branch
    %19 = sbr.rel (0) target = $region17
  $region16: #{prompted_bert_forward.7} parent=0 // pred_region
    _
  $region17: #{prompted_bert_forward.7} parent=0 // pred_fallthru
    _
  // Predicated region
  $region18: #{prompted_bert_forward.7} parent=0 // pred_check
    _
  $region19: #{prompted_bert_forward.7} parent=0 // pred_check_branch
    %21 = sbr.rel (0) target = $region21
  $region20: #{prompted_bert_forward.7} parent=0 // pred_region
    _
  $region21: #{prompted_bert_forward.7} parent=0 // pred_fallthru
    _
  // Predicated region
  $region22: #{prompted_bert_forward.7} parent=0 // pred_check
    _
  $region23: #{prompted_bert_forward.7} parent=0 // pred_check_branch
    %23 = sbr.rel (0) target = $region25
  $region24: #{prompted_bert_forward.7} parent=0 // pred_region
    _
  $region25: #{prompted_bert_forward.7} parent=0 // pred_fallthru
    _
  // Predicated region
  $region26: #{prompted_bert_forward.7} parent=0 // pred_check
    _
  $region27: #{prompted_bert_forward.7} parent=0 // pred_check_branch
    %25 = sbr.rel (0) target = $region29
  $region28: #{prompted_bert_forward.7} parent=0 // pred_region
    _
  $region29: #{prompted_bert_forward.7} parent=0 // pred_fallthru
    _
  %v26 = vld [vmem:[%s0] sm:$0xff]
  %v27 = vld [vmem:[%s0 + $0x8] sm:$0xff]
  %v28 = vld [vmem:[%s1] sm:$0xff]
  %v29 = vld [vmem:[%s1 + $0x8] sm:$0xff]
  %v30 = vld [vmem:[%s1 + $0x10] sm:$0xff]
  %v31 = vld [vmem:[%s1 + $0x18] sm:$0xff]
  %v32 = vld [vmem:[%s2] sm:$0x1]
  %v34 = vlaneseq
  %v35 = vshrl.u32 %v34, 7
  %v36 = vsub.s32 0, %v35
  %v37 = vrot.slane %v32, %v36
  %vm39 = vcmask 261120
  %v41 = vsel %vm39, %v26, 0
  %v44 = vsel %vm39, %v27, 0
  %46 = vmatprep.subr.mxu0 0.0
  %47 = vmatpush1.msra.mxu0 %v28
  %48 = vmatprep.subr.mxu0 0.0
  %49 = vmatpush1.msra.mxu0 %v29
  %50 = vmatprep.subr.mxu0 0.0
  %51 = vmatpush1.msra.mxu0 %v30
  %52 = vmatprep.subr.mxu0 0.0
  %53 = vmatpush1.msra.mxu0 %v31
  %54 = vmatprep.subr.mxu0 0.0
  %55 = vmatpush1.msra.mxu0 0.0
  %56 = vmatprep.subr.mxu0 0.0
  %57 = vmatpush1.msra.mxu0 0.0
  %58 = vmatprep.subr.mxu0 0.0
  %59 = vmatpush1.msra.mxu0 0.0
  %60 = vmatprep.subr.mxu0 0.0
  %61 = vmatpush1.msra.mxu0 0.0
  %62 = vmatprep.subr.mxu0 0.0
  %63 = vmatpush1.msra.mxu0 0.0
  %64 = vmatprep.subr.mxu0 0.0
  %65 = vmatpush1.msra.mxu0 0.0
  %66 = vmatprep.subr.mxu0 0.0
  %67 = vmatpush1.msra.mxu0 0.0
  %68 = vmatprep.subr.mxu0 0.0
  %69 = vmatpush1.msra.mxu0 0.0
  %70 = vmatprep.subr.mxu0 0.0
  %71 = vmatpush1.msra.mxu0 0.0
  %72 = vmatprep.subr.mxu0 0.0
  %73 = vmatpush1.msra.mxu0 0.0
  %74 = vmatprep.subr.mxu0 0.0
  %75 = vmatpush1.msra.mxu0 0.0
  %76 = vmatprep.subr.mxu0 0.0
  %77 = vmatpush1.msra.mxu0 0.0
  %78 = vmatprep.subr.mxu0 0.0
  %79 = vmatpush1.msra.mxu0 0.0
  %80 = vmatprep.subr.mxu0 0.0
  %81 = vmatpush1.msra.mxu0 0.0
  %82 = vmatprep.subr.mxu0 0.0
  %83 = vmatpush1.msra.mxu0 0.0
  %84 = vmatprep.subr.mxu0 0.0
  %85 = vmatpush1.msra.mxu0 0.0
  %86 = vmatprep.subr.mxu0 0.0
  %87 = vmatpush1.msra.mxu0 0.0
  %88 = vmatprep.subr.mxu0 0.0
  %89 = vmatpush1.msra.mxu0 0.0
  %90 = vmatprep.subr.mxu0 0.0
  %91 = vmatpush1.msra.mxu0 0.0
  %92 = vmatprep.subr.mxu0 0.0
  %93 = vmatpush1.msra.mxu0 0.0
  %94 = vmatprep.subr.mxu0 0.0
  %95 = vmatpush1.msra.mxu0 0.0
  %96 = vmatprep.subr.mxu0 0.0
  %97 = vmatpush1.msra.mxu0 0.0
  %98 = vmatprep.subr.mxu0 0.0
  %99 = vmatpush1.msra.mxu0 0.0
  %100 = vmatprep.subr.mxu0 0.0
  %101 = vmatpush1.msra.mxu0 0.0
  %102 = vmatprep.subr.mxu0 0.0
  %103 = vmatpush1.msra.mxu0 0.0
  %104 = vmatprep.subr.mxu0 0.0
  %105 = vmatpush1.msra.mxu0 0.0
  %106 = vmatprep.subr.mxu0 0.0
  %107 = vmatpush1.msra.mxu0 0.0
  %108 = vmatprep.subr.mxu0 0.0
  %109 = vmatpush1.msra.mxu0 0.0
  %110 = vmatprep.mubr.f32.mxu0 0.0
  %111 = vmatmul.mubr.f32.gmra.mrb[0].mxu0 %v41
  %v112 = vpop.f32.mrb[0].mxu0
  %v113 = vadd.f32 %v37, %v112
  %v114 = vpop.f32.mrb[0].mxu0
  %115 = vmatprep.mubr.f32.mxu0 0.0
  %116 = vmatmul.mubr.f32.gmra.mrb[0].mxu0 %v44
  %v117 = vpop.f32.mrb[0].mxu0
  %v118 = vadd.f32 %v37, %v117
  %v119 = vpop.f32.mrb[0].mxu0
  %120 = vdwg.mxu0
  %v121 = vmul.f32 %v113, %v113
  %v122 = vmul.f32 %v118, %v118
  %v123 = vmul.f32 %v113, %v121
  %v124 = vmul.f32 %v118, %v122
  %v125 = vmul.f32 %v123, 0.044715
  %v126 = vmul.f32 %v124, 0.044715
  %v127 = vadd.f32 %v113, %v125
  %v128 = vadd.f32 %v118, %v126
  %v129 = vmul.f32 %v127, 0.7978846
  %v130 = vmul.f32 %v128, 0.7978846
  %v131 = vtanh.pop %v129
  %v132 = vtanh.pop %v130
  %v133 = vadd.f32 %v131, 1.0
  %v134 = vadd.f32 %v132, 1.0
  %v135 = vmul.f32 %v133, 0.5
  %v136 = vmul.f32 %v134, 0.5
  %v137 = vmul.f32 %v113, %v135
  %v138 = vmul.f32 %v118, %v136
  %v139 = vld [vmem:[%s3] sm:$0xff]
  %v140 = vld [vmem:[%s3 + $0x8] sm:$0xff]
  %v141 = vld [vmem:[%s3 + $0x10] sm:$0xff]
  %v142 = vld [vmem:[%s3 + $0x18] sm:$0xff]
  %v143 = vld [vmem:[%s3 + $0x20] sm:$0xff]
  %v144 = vld [vmem:[%s3 + $0x28] sm:$0xff]
  %v145 = vld [vmem:[%s3 + $0x30] sm:$0xff]
  %v146 = vld [vmem:[%s3 + $0x38] sm:$0xff]
  %v147 = vld [vmem:[%s3 + $0x40] sm:$0xff]
  %v148 = vld [vmem:[%s3 + $0x48] sm:$0xff]
  %v149 = vld [vmem:[%s3 + $0x50] sm:$0xff]
  %v150 = vld [vmem:[%s3 + $0x58] sm:$0xff]
  %v151 = vld [vmem:[%s3 + $0x60] sm:$0xff]
  %v152 = vld [vmem:[%s3 + $0x68] sm:$0xff]
  %v153 = vld [vmem:[%s3 + $0x70] sm:$0xff]
  %v154 = vld [vmem:[%s3 + $0x78] sm:$0xff]
  %v155 = vld [vmem:[%s4] sm:$0x1]
  %v157 = vlaneseq
  %v158 = vshrl.u32 %v157, 7
  %v159 = vsub.s32 0, %v158
  %v160 = vrot.slane %v155, %v159
  %162 = vmatprep.subr.mxu0 0.0
  %163 = vmatpush1.msra.mxu0 %v139
  %164 = vmatprep.subr.mxu0 0.0
  %165 = vmatpush1.msra.mxu0 %v140
  %166 = vmatprep.subr.mxu0 0.0
  %167 = vmatpush1.msra.mxu0 %v141
  %168 = vmatprep.subr.mxu0 0.0
  %169 = vmatpush1.msra.mxu0 %v142
  %170 = vmatprep.subr.mxu0 0.0
  %171 = vmatpush1.msra.mxu0 %v143
  %172 = vmatprep.subr.mxu0 0.0
  %173 = vmatpush1.msra.mxu0 %v144
  %174 = vmatprep.subr.mxu0 0.0
  %175 = vmatpush1.msra.mxu0 %v145
  %176 = vmatprep.subr.mxu0 0.0
  %177 = vmatpush1.msra.mxu0 %v146
  %178 = vmatprep.subr.mxu0 0.0
  %179 = vmatpush1.msra.mxu0 %v147
  %180 = vmatprep.subr.mxu0 0.0
  %181 = vmatpush1.msra.mxu0 %v148
  %182 = vmatprep.subr.mxu0 0.0
  %183 = vmatpush1.msra.mxu0 %v149
  %184 = vmatprep.subr.mxu0 0.0
  %185 = vmatpush1.msra.mxu0 %v150
  %186 = vmatprep.subr.mxu0 0.0
  %187 = vmatpush1.msra.mxu0 %v151
  %188 = vmatprep.subr.mxu0 0.0
  %189 = vmatpush1.msra.mxu0 %v152
  %190 = vmatprep.subr.mxu0 0.0
  %191 = vmatpush1.msra.mxu0 %v153
  %192 = vmatprep.subr.mxu0 0.0
  %193 = vmatpush1.msra.mxu0 %v154
  %194 = vmatprep.subr.mxu0 0.0
  %195 = vmatpush1.msra.mxu0 0.0
  %196 = vmatprep.subr.mxu0 0.0
  %197 = vmatpush1.msra.mxu0 0.0
  %198 = vmatprep.subr.mxu0 0.0
  %199 = vmatpush1.msra.mxu0 0.0
  %200 = vmatprep.subr.mxu0 0.0
  %201 = vmatpush1.msra.mxu0 0.0
  %202 = vmatprep.subr.mxu0 0.0
  %203 = vmatpush1.msra.mxu0 0.0
  %204 = vmatprep.subr.mxu0 0.0
  %205 = vmatpush1.msra.mxu0 0.0
  %206 = vmatprep.subr.mxu0 0.0
  %207 = vmatpush1.msra.mxu0 0.0
  %208 = vmatprep.subr.mxu0 0.0
  %209 = vmatpush1.msra.mxu0 0.0
  %210 = vmatprep.subr.mxu0 0.0
  %211 = vmatpush1.msra.mxu0 0.0
  %212 = vmatprep.subr.mxu0 0.0
  %213 = vmatpush1.msra.mxu0 0.0
  %214 = vmatprep.subr.mxu0 0.0
  %215 = vmatpush1.msra.mxu0 0.0
  %216 = vmatprep.subr.mxu0 0.0
  %217 = vmatpush1.msra.mxu0 0.0
  %218 = vmatprep.subr.mxu0 0.0
  %219 = vmatpush1.msra.mxu0 0.0
  %220 = vmatprep.subr.mxu0 0.0
  %221 = vmatpush1.msra.mxu0 0.0
  %222 = vmatprep.subr.mxu0 0.0
  %223 = vmatpush1.msra.mxu0 0.0
  %224 = vmatprep.subr.mxu0 0.0
  %225 = vmatpush1.msra.mxu0 0.0
  %226 = vmatprep.mubr.f32.mxu0 0.0
  %227 = vmatmul.mubr.f32.gmra.mrb[0].mxu0 %v137
  %v228 = vpop.f32.mrb[0].mxu0
  %v229 = vadd.f32 %v160, %v228
  %v230 = vpop.f32.mrb[0].mxu0
  %231 = vmatprep.mubr.f32.mxu0 0.0
  %232 = vmatmul.mubr.f32.gmra.mrb[0].mxu0 %v138
  %v233 = vpop.f32.mrb[0].mxu0
  %v234 = vadd.f32 %v160, %v233
  %v235 = vpop.f32.mrb[0].mxu0
  %236 = vdwg.mxu0
  %v237 = vadd.f32 %v229, %v26
  %v238 = vadd.f32 %v234, %v27
  %v239 = vsel %vm39, %v237, 0.0
  %240 = vadd.xlane.f32.xlu0 %v239
  %v241 = vpop.xlane.xlu0 %240
  %v242 = vsel %vm39, %v238, 0.0
  %243 = vadd.xlane.f32.xlu0 %v242
  %v244 = vpop.xlane.xlu0 %243
  %v245 = vrcp.pop 32.0
  %v246 = vmul.f32 %v241, %v245
  %v247 = vmul.f32 %v244, %v245
  %v248 = vsub.f32 %v237, %v246
  %v249 = vsub.f32 %v238, %v247
  %v250 = vmul.f32 %v248, %v248
  %v251 = vmul.f32 %v249, %v249
  %v252 = vsel %vm39, %v250, 0.0
  %253 = vadd.xlane.f32.xlu0 %v252
  %v254 = vpop.xlane.xlu0 %253
  %v255 = vsel %vm39, %v251, 0.0
  %256 = vadd.xlane.f32.xlu0 %v255
  %v257 = vpop.xlane.xlu0 %256
  %v258 = vmul.f32 %v254, %v245
  %v259 = vmul.f32 %v257, %v245
  %v260 = vadd.f32 %v258, 1e-12
  %v261 = vadd.f32 %v259, 1e-12
  %v262 = vrsqrt.pop %v260
  %v263 = vrsqrt.pop %v261
  %v264 = vmul.f32 %v248, %v262
  %v265 = vmul.f32 %v249, %v263
  %v266 = vld [vmem:[%s5] sm:$0x1]
  %v268 = vlaneseq
  %v269 = vshrl.u32 %v268, 7
  %v270 = vsub.s32 0, %v269
  %v271 = vrot.slane %v266, %v270
  %v273 = vmul.f32 %v264, %v271
  %v274 = vmul.f32 %v265, %v271
  %v275 = vld [vmem:[%s6] sm:$0x1]
  %v277 = vlaneseq
  %v278 = vshrl.u32 %v277, 7
  %v279 = vsub.s32 0, %v278
  %v280 = vrot.slane %v275, %v279
  %v282 = vadd.f32 %v273, %v280
  %v283 = vadd.f32 %v274, %v280
  %284 = vst.msk [vmem:[%s7] sm:$0xff] %vm39, %v282
  %285 = vst.msk [vmem:[%s7 + $0x8] sm:$0xff] %vm39, %v283
  // Predicated region
  $region30: #{prompted_bert_forward.7} parent=0 // pred_check
    _
  $region31: #{prompted_bert_forward.7} parent=0 // pred_check_branch
    %287 = sbr.rel (0) target = $region33
  $region32: #{prompted_bert_forward.7} parent=0 // pred_region
    _
  $region33: #{prompted_bert_forward.7} parent=0 // pred_fallthru
    _
  // Predicated region
  $region34: #{prompted_bert_forward.7} parent=0 // pred_check
    _
  $region35: #{prompted_bert_forward.7} parent=0 // pred_check_branch
    %289 = sbr.rel (0) target = $region37
  $region36: #{prompted_bert_forward.7} parent=0 // pred_region
    _
  $region37: #{prompted_bert_forward.7} parent=0 // pred_fallthru
    _

// kernel: prompted_bert_forward.9
$region0: #{prompted_bert_forward.9}
  #allocation0 [shape = 'u32[]', space=smem, size = 0x4, offset = 0x4, fixed_abs, tag = 'smem constant byte address 0x4 - core index']
  #allocation1 [shape = 'u32[144,128]{1,0:T(1,128)}', space=vmem, size = 0x12000, scoped, tag = 'internal scratch']
  %s0 = inlined_call_operand.vmem [shape: f32[16,32], index: 0, kind: input, shape index: {}]
  %s1 = inlined_call_operand.vmem [shape: f32[32,128], index: 1, kind: input, shape index: {}]
  %s2 = inlined_call_operand.vmem [shape: f32[1,128], index: 2, kind: input, shape index: {}]
  %s3 = inlined_call_operand.vmem [shape: f32[128,32], index: 3, kind: input, shape index: {}]
  %s4 = inlined_call_operand.vmem [shape: f32[1,32], index: 4, kind: input, shape index: {}]
  %s5 = inlined_call_operand.vmem [shape: f32[1,32], index: 5, kind: input, shape index: {}]
  %s6 = inlined_call_operand.vmem [shape: f32[1,32], index: 6, kind: input, shape index: {}]
  %s7 = inlined_call_operand.hbm [shape: f32[16,32], index: 7, kind: output, shape index: {}]
  %s8 = sld [smem:[#allocation0]]
  $region38: #{prompted_bert_forward.9} parent=0
    _
  %s10 = ssub.s32 1, %s8
  %s11 = scalar_select 0, %s10, %s8
  $region1: #{prompted_bert_forward.9} parent=0
    #allocation2 [shape = 'u8[8192]{0}', space=vmem, size = 0x2000, scoped, tag = 'output window, operand 0, single buffered']
    #allocation3 [shape = 's32[1]{0}', space=sflag, size = 0x4, scoped, tag = 'scoped memory for prompted_bert_forward.9']
    %12 = vsyncpa [#allocation3], 0
    // Predicated region
    $region2: #{prompted_bert_forward.9} parent=1 // pred_check
      _
    $region3: #{prompted_bert_forward.9} parent=1 // pred_check_branch
      %14 = sbr.rel (0) target = $region5
    $region4: #{prompted_bert_forward.9} parent=1 // pred_region
      _
    $region5: #{prompted_bert_forward.9} parent=1 // pred_fallthru
      _
    // Predicated region
    $region6: #{prompted_bert_forward.9} parent=1 // pred_check
      _
    $region7: #{prompted_bert_forward.9} parent=1 // pred_check_branch
      %16 = sbr.rel (0) target = $region9
    $region8: #{prompted_bert_forward.9} parent=1 // pred_region
      _
    $region9: #{prompted_bert_forward.9} parent=1 // pred_fallthru
      _
    // Predicated region
    $region10: #{prompted_bert_forward.9} parent=1 // pred_check
      _
    $region11: #{prompted_bert_forward.9} parent=1 // pred_check_branch
      %18 = sbr.rel (0) target = $region13
    $region12: #{prompted_bert_forward.9} parent=1 // pred_region
      _
    $region13: #{prompted_bert_forward.9} parent=1 // pred_fallthru
      _
    // Predicated region
    $region14: #{prompted_bert_forward.9} parent=1 // pred_check
      _
    $region15: #{prompted_bert_forward.9} parent=1 // pred_check_branch
      %20 = sbr.rel (0) target = $region17
    $region16: #{prompted_bert_forward.9} parent=1 // pred_region
      _
    $region17: #{prompted_bert_forward.9} parent=1 // pred_fallthru
      _
    // Predicated region
    $region18: #{prompted_bert_forward.9} parent=1 // pred_check
      _
    $region19: #{prompted_bert_forward.9} parent=1 // pred_check_branch
      %22 = sbr.rel (0) target = $region21
    $region20: #{prompted_bert_forward.9} parent=1 // pred_region
      _
    $region21: #{prompted_bert_forward.9} parent=1 // pred_fallthru
      _
    // Predicated region
    $region22: #{prompted_bert_forward.9} parent=1 // pred_check
      _
    $region23: #{prompted_bert_forward.9} parent=1 // pred_check_branch
      %24 = sbr.rel (0) target = $region25
    $region24: #{prompted_bert_forward.9} parent=1 // pred_region
      _
    $region25: #{prompted_bert_forward.9} parent=1 // pred_fallthru
      _
    // Predicated region
    $region26: #{prompted_bert_forward.9} parent=1 // pred_check
      _
    $region27: #{prompted_bert_forward.9} parent=1 // pred_check_branch
      %26 = sbr.rel (0) target = $region29
    $region28: #{prompted_bert_forward.9} parent=1 // pred_region
      _
    $region29: #{prompted_bert_forward.9} parent=1 // pred_fallthru
      _
    %v27 = vld [vmem:[%s0] sm:$0xff]
    %v28 = vld [vmem:[%s0 + $0x8] sm:$0xff]
    %v29 = vld [vmem:[%s1] sm:$0xff]
    %v30 = vld [vmem:[%s1 + $0x8] sm:$0xff]
    %v31 = vld [vmem:[%s1 + $0x10] sm:$0xff]
    %v32 = vld [vmem:[%s1 + $0x18] sm:$0xff]
    %v33 = vld [vmem:[%s2] sm:$0x1]
    %v35 = vlaneseq
    %v36 = vshrl.u32 %v35, 7
    %v37 = vsub.s32 0, %v36
    %v38 = vrot.slane %v33, %v37
    %vm40 = vcmask 261120
    %v42 = vsel %vm40, %v27, 0
    %v45 = vsel %vm40, %v28, 0
    %47 = vmatprep.subr.mxu0 0.0
    %48 = vmatpush1.msra.mxu0 %v29
    %49 = vmatprep.subr.mxu0 0.0
    %50 = vmatpush1.msra.mxu0 %v30
    %51 = vmatprep.subr.mxu0 0.0
    %52 = vmatpush1.msra.mxu0 %v31
    %53 = vmatprep.subr.mxu0 0.0
    %54 = vmatpush1.msra.mxu0 %v32
    %55 = vmatprep.subr.mxu0 0.0
    %56 = vmatpush1.msra.mxu0 0.0
    %57 = vmatprep.subr.mxu0 0.0
    %58 = vmatpush1.msra.mxu0 0.0
    %59 = vmatprep.subr.mxu0 0.0
    %60 = vmatpush1.msra.mxu0 0.0
    %61 = vmatprep.subr.mxu0 0.0
    %62 = vmatpush1.msra.mxu0 0.0
    %63 = vmatprep.subr.mxu0 0.0
    %64 = vmatpush1.msra.mxu0 0.0
    %65 = vmatprep.subr.mxu0 0.0
    %66 = vmatpush1.msra.mxu0 0.0
    %67 = vmatprep.subr.mxu0 0.0
    %68 = vmatpush1.msra.mxu0 0.0
    %69 = vmatprep.subr.mxu0 0.0
    %70 = vmatpush1.msra.mxu0 0.0
    %71 = vmatprep.subr.mxu0 0.0
    %72 = vmatpush1.msra.mxu0 0.0
    %73 = vmatprep.subr.mxu0 0.0
    %74 = vmatpush1.msra.mxu0 0.0
    %75 = vmatprep.subr.mxu0 0.0
    %76 = vmatpush1.msra.mxu0 0.0
    %77 = vmatprep.subr.mxu0 0.0
    %78 = vmatpush1.msra.mxu0 0.0
    %79 = vmatprep.subr.mxu0 0.0
    %80 = vmatpush1.msra.mxu0 0.0
    %81 = vmatprep.subr.mxu0 0.0
    %82 = vmatpush1.msra.mxu0 0.0
    %83 = vmatprep.subr.mxu0 0.0
    %84 = vmatpush1.msra.mxu0 0.0
    %85 = vmatprep.subr.mxu0 0.0
    %86 = vmatpush1.msra.mxu0 0.0
    %87 = vmatprep.subr.mxu0 0.0
    %88 = vmatpush1.msra.mxu0 0.0
    %89 = vmatprep.subr.mxu0 0.0
    %90 = vmatpush1.msra.mxu0 0.0
    %91 = vmatprep.subr.mxu0 0.0
    %92 = vmatpush1.msra.mxu0 0.0
    %93 = vmatprep.subr.mxu0 0.0
    %94 = vmatpush1.msra.mxu0 0.0
    %95 = vmatprep.subr.mxu0 0.0
    %96 = vmatpush1.msra.mxu0 0.0
    %97 = vmatprep.subr.mxu0 0.0
    %98 = vmatpush1.msra.mxu0 0.0
    %99 = vmatprep.subr.mxu0 0.0
    %100 = vmatpush1.msra.mxu0 0.0
    %101 = vmatprep.subr.mxu0 0.0
    %102 = vmatpush1.msra.mxu0 0.0
    %103 = vmatprep.subr.mxu0 0.0
    %104 = vmatpush1.msra.mxu0 0.0
    %105 = vmatprep.subr.mxu0 0.0
    %106 = vmatpush1.msra.mxu0 0.0
    %107 = vmatprep.subr.mxu0 0.0
    %108 = vmatpush1.msra.mxu0 0.0
    %109 = vmatprep.subr.mxu0 0.0
    %110 = vmatpush1.msra.mxu0 0.0
    %111 = vmatprep.mubr.f32.mxu0 0.0
    %112 = vmatmul.mubr.f32.gmra.mrb[0].mxu0 %v42
    %v113 = vpop.f32.mrb[0].mxu0
    %v114 = vadd.f32 %v38, %v113
    %v115 = vpop.f32.mrb[0].mxu0
    %116 = vmatprep.mubr.f32.mxu0 0.0
    %117 = vmatmul.mubr.f32.gmra.mrb[0].mxu0 %v45
    %v118 = vpop.f32.mrb[0].mxu0
    %v119 = vadd.f32 %v38, %v118
    %v120 = vpop.f32.mrb[0].mxu0
    %121 = vdwg.mxu0
    %v122 = vmul.f32 %v114, %v114
    %v123 = vmul.f32 %v119, %v119
    %v124 = vmul.f32 %v114, %v122
    %v125 = vmul.f32 %v119, %v123
    %v126 = vmul.f32 %v124, 0.044715
    %v127 = vmul.f32 %v125, 0.044715
    %v128 = vadd.f32 %v114, %v126
    %v129 = vadd.f32 %v119, %v127
    %v130 = vmul.f32 %v128, 0.7978846
    %v131 = vmul.f32 %v129, 0.7978846
    %v132 = vtanh.pop %v130
    %v133 = vtanh.pop %v131
    %v134 = vadd.f32 %v132, 1.0
    %v135 = vadd.f32 %v133, 1.0
    %v136 = vmul.f32 %v134, 0.5
    %v137 = vmul.f32 %v135, 0.5
    %v138 = vmul.f32 %v114, %v136
    %v139 = vmul.f32 %v119, %v137
    %v140 = vld [vmem:[%s3] sm:$0xff]
    %v141 = vld [vmem:[%s3 + $0x8] sm:$0xff]
    %v142 = vld [vmem:[%s3 + $0x10] sm:$0xff]
    %v143 = vld [vmem:[%s3 + $0x18] sm:$0xff]
    %v144 = vld [vmem:[%s3 + $0x20] sm:$0xff]
    %v145 = vld [vmem:[%s3 + $0x28] sm:$0xff]
    %v146 = vld [vmem:[%s3 + $0x30] sm:$0xff]
    %v147 = vld [vmem:[%s3 + $0x38] sm:$0xff]
    %v148 = vld [vmem:[%s3 + $0x40] sm:$0xff]
    %v149 = vld [vmem:[%s3 + $0x48] sm:$0xff]
    %v150 = vld [vmem:[%s3 + $0x50] sm:$0xff]
    %v151 = vld [vmem:[%s3 + $0x58] sm:$0xff]
    %v152 = vld [vmem:[%s3 + $0x60] sm:$0xff]
    %v153 = vld [vmem:[%s3 + $0x68] sm:$0xff]
    %v154 = vld [vmem:[%s3 + $0x70] sm:$0xff]
    %v155 = vld [vmem:[%s3 + $0x78] sm:$0xff]
    %v156 = vld [vmem:[%s4] sm:$0x1]
    %v158 = vlaneseq
    %v159 = vshrl.u32 %v158, 7
    %v160 = vsub.s32 0, %v159
    %v161 = vrot.slane %v156, %v160
    %163 = vmatprep.subr.mxu0 0.0
    %164 = vmatpush1.msra.mxu0 %v140
    %165 = vmatprep.subr.mxu0 0.0
    %166 = vmatpush1.msra.mxu0 %v141
    %167 = vmatprep.subr.mxu0 0.0
    %168 = vmatpush1.msra.mxu0 %v142
    %169 = vmatprep.subr.mxu0 0.0
    %170 = vmatpush1.msra.mxu0 %v143
    %171 = vmatprep.subr.mxu0 0.0
    %172 = vmatpush1.msra.mxu0 %v144
    %173 = vmatprep.subr.mxu0 0.0
    %174 = vmatpush1.msra.mxu0 %v145
    %175 = vmatprep.subr.mxu0 0.0
    %176 = vmatpush1.msra.mxu0 %v146
    %177 = vmatprep.subr.mxu0 0.0
    %178 = vmatpush1.msra.mxu0 %v147
    %179 = vmatprep.subr.mxu0 0.0
    %180 = vmatpush1.msra.mxu0 %v148
    %181 = vmatprep.subr.mxu0 0.0
    %182 = vmatpush1.msra.mxu0 %v149
    %183 = vmatprep.subr.mxu0 0.0
    %184 = vmatpush1.msra.mxu0 %v150
    %185 = vmatprep.subr.mxu0 0.0
    %186 = vmatpush1.msra.mxu0 %v151
    %187 = vmatprep.subr.mxu0 0.0
    %188 = vmatpush1.msra.mxu0 %v152
    %189 = vmatprep.subr.mxu0 0.0
    %190 = vmatpush1.msra.mxu0 %v153
    %191 = vmatprep.subr.mxu0 0.0
    %192 = vmatpush1.msra.mxu0 %v154
    %193 = vmatprep.subr.mxu0 0.0
    %194 = vmatpush1.msra.mxu0 %v155
    %195 = vmatprep.subr.mxu0 0.0
    %196 = vmatpush1.msra.mxu0 0.0
    %197 = vmatprep.subr.mxu0 0.0
    %198 = vmatpush1.msra.mxu0 0.0
    %199 = vmatprep.subr.mxu0 0.0
    %200 = vmatpush1.msra.mxu0 0.0
    %201 = vmatprep.subr.mxu0 0.0
    %202 = vmatpush1.msra.mxu0 0.0
    %203 = vmatprep.subr.mxu0 0.0
    %204 = vmatpush1.msra.mxu0 0.0
    %205 = vmatprep.subr.mxu0 0.0
    %206 = vmatpush1.msra.mxu0 0.0
    %207 = vmatprep.subr.mxu0 0.0
    %208 = vmatpush1.msra.mxu0 0.0
    %209 = vmatprep.subr.mxu0 0.0
    %210 = vmatpush1.msra.mxu0 0.0
    %211 = vmatprep.subr.mxu0 0.0
    %212 = vmatpush1.msra.mxu0 0.0
    %213 = vmatprep.subr.mxu0 0.0
    %214 = vmatpush1.msra.mxu0 0.0
    %215 = vmatprep.subr.mxu0 0.0
    %216 = vmatpush1.msra.mxu0 0.0
    %217 = vmatprep.subr.mxu0 0.0
    %218 = vmatpush1.msra.mxu0 0.0
    %219 = vmatprep.subr.mxu0 0.0
    %220 = vmatpush1.msra.mxu0 0.0
    %221 = vmatprep.subr.mxu0 0.0
    %222 = vmatpush1.msra.mxu0 0.0
    %223 = vmatprep.subr.mxu0 0.0
    %224 = vmatpush1.msra.mxu0 0.0
    %225 = vmatprep.subr.mxu0 0.0
    %226 = vmatpush1.msra.mxu0 0.0
    %227 = vmatprep.mubr.f32.mxu0 0.0
    %228 = vmatmul.mubr.f32.gmra.mrb[0].mxu0 %v138
    %v229 = vpop.f32.mrb[0].mxu0
    %v230 = vadd.f32 %v161, %v229
    %v231 = vpop.f32.mrb[0].mxu0
    %232 = vmatprep.mubr.f32.mxu0 0.0
    %233 = vmatmul.mubr.f32.gmra.mrb[0].mxu0 %v139
    %v234 = vpop.f32.mrb[0].mxu0
    %v235 = vadd.f32 %v161, %v234
    %v236 = vpop.f32.mrb[0].mxu0
    %237 = vdwg.mxu0
    %v238 = vadd.f32 %v230, %v27
    %v239 = vadd.f32 %v235, %v28
    %v240 = vsel %vm40, %v238, 0.0
    %241 = vadd.xlane.f32.xlu0 %v240
    %v242 = vpop.xlane.xlu0 %241
    %v243 = vsel %vm40, %v239, 0.0
    %244 = vadd.xlane.f32.xlu0 %v243
    %v245 = vpop.xlane.xlu0 %244
    %v246 = vrcp.pop 32.0
    %v247 = vmul.f32 %v242, %v246
    %v248 = vmul.f32 %v245, %v246
    %v249 = vsub.f32 %v238, %v247
    %v250 = vsub.f32 %v239, %v248
    %v251 = vmul.f32 %v249, %v249
    %v252 = vmul.f32 %v250, %v250
    %v253 = vsel %vm40, %v251, 0.0
    %254 = vadd.xlane.f32.xlu0 %v253
    %v255 = vpop.xlane.xlu0 %254
    %v256 = vsel %vm40, %v252, 0.0
    %257 = vadd.xlane.f32.xlu0 %v256
    %v258 = vpop.xlane.xlu0 %257
    %v259 = vmul.f32 %v255, %v246
    %v260 = vmul.f32 %v258, %v246
    %v261 = vadd.f32 %v259, 1e-12
    %v262 = vadd.f32 %v260, 1e-12
    %v263 = vrsqrt.pop %v261
    %v264 = vrsqrt.pop %v262
    %v265 = vmul.f32 %v249, %v263
    %v266 = vmul.f32 %v250, %v264
    %v267 = vld [vmem:[%s5] sm:$0x1]
    %v269 = vlaneseq
    %v270 = vshrl.u32 %v269, 7
    %v271 = vsub.s32 0, %v270
    %v272 = vrot.slane %v267, %v271
    %v274 = vmul.f32 %v265, %v272
    %v275 = vmul.f32 %v266, %v272
    %v276 = vld [vmem:[%s6] sm:$0x1]
    %v278 = vlaneseq
    %v279 = vshrl.u32 %v278, 7
    %v280 = vsub.s32 0, %v279
    %v281 = vrot.slane %v276, %v280
    %v283 = vadd.f32 %v274, %v281
    %v284 = vadd.f32 %v275, %v281
    %285 = vst.msk [vmem:[#allocation2] sm:$0xff] %vm40, %v283
    %286 = vst.msk [vmem:[#allocation2 + $0x8] sm:$0xff] %vm40, %v284
    // Predicated region
    $region30: #{prompted_bert_forward.9} parent=1 // pred_check
      _
    $region31: #{prompted_bert_forward.9} parent=1 // pred_check_branch
      %288 = sbr.rel (0) target = $region33
    $region32: #{prompted_bert_forward.9} parent=1 // pred_region
      %s290 = ssub.s32 256, 256
      %291 = vsyncadd [#allocation3], %s290
      %s292 = sshll.u32 [#allocation2], 4
      %s293 = int_to_ptr.vmem [resolvable:$true] %s292
      %298 = dma.vmem_to_hbm [thread:$0]  %s293, 256, %s7, [#allocation3], 128, 128, 8
    $region33: #{prompted_bert_forward.9} parent=1 // pred_fallthru
      _
    // Predicated region
    $region34: #{prompted_bert_forward.9} parent=1 // pred_check
      _
    $region35: #{prompted_bert_forward.9} parent=1 // pred_check_branch
      %300 = sbr.rel (0) target = $region37
    $region36: #{prompted_bert_forward.9} parent=1 // pred_region
      %301 = dma.done [#allocation3], 256
    $region37: #{prompted_bert_forward.9} parent=1 // pred_fallthru
      _
    %302 = vsyncpa [#allocation3], 1

// kernel: prompted_bert_forward.5
$region0: #{prompted_bert_forward.5}
  #allocation0 [shape = 'u32[]', space=smem, size = 0x4, offset = 0x4, fixed_abs, tag = 'smem constant byte address 0x4 - core index']
  #allocation1 [shape = 'u32[144,128]{1,0:T(1,128)}', space=vmem, size = 0x12000, scoped, tag = 'internal scratch']
  %s0 = inlined_call_operand.vmem [shape: f32[16,32], index: 0, kind: input, shape index: {}]
  %s1 = inlined_call_operand.vmem [shape: f32[1,32], index: 1, kind: input, shape index: {}]
  %s2 = inlined_call_operand.vmem [shape: f32[1,32], index: 2, kind: input, shape index: {}]
  %s3 = inlined_call_operand.vmem [shape: f32[16,1], index: 3, kind: input, shape index: {}]
  %s4 = inlined_call_operand.vmem [shape: f32[1,32], index: 4, kind: input, shape index: {}]
  %s5 = inlined_call_operand.vmem [shape: f32[1,32], index: 5, kind: input, shape index: {}]
  %s6 = inlined_call_operand.vmem [shape: f32[1,32], index: 6, kind: input, shape index: {}]
  %s7 = inlined_call_operand.vmem [shape: f32[1,32], index: 7, kind: input, shape index: {}]
  %s8 = inlined_call_operand.vmem [shape: f32[16,32], index: 8, kind: output, shape index: {}]
  %s9 = sld [smem:[#allocation0]]
  $region42: #{prompted_bert_forward.5} parent=0
    _
  %s11 = ssub.s32 1, %s9
  %s12 = scalar_select 0, %s11, %s9
  // Predicated region
  $region2: #{prompted_bert_forward.5} parent=0 // pred_check
    _
  $region3: #{prompted_bert_forward.5} parent=0 // pred_check_branch
    %14 = sbr.rel (0) target = $region5
  $region4: #{prompted_bert_forward.5} parent=0 // pred_region
    _
  $region5: #{prompted_bert_forward.5} parent=0 // pred_fallthru
    _
  // Predicated region
  $region6: #{prompted_bert_forward.5} parent=0 // pred_check
    _
  $region7: #{prompted_bert_forward.5} parent=0 // pred_check_branch
    %16 = sbr.rel (0) target = $region9
  $region8: #{prompted_bert_forward.5} parent=0 // pred_region
    _
  $region9: #{prompted_bert_forward.5} parent=0 // pred_fallthru
    _
  // Predicated region
  $region10: #{prompted_bert_forward.5} parent=0 // pred_check
    _
  $region11: #{prompted_bert_forward.5} parent=0 // pred_check_branch
    %18 = sbr.rel (0) target = $region13
  $region12: #{prompted_bert_forward.5} parent=0 // pred_region
    _
  $region13: #{prompted_bert_forward.5} parent=0 // pred_fallthru
    _
  // Predicated region
  $region14: #{prompted_bert_forward.5} parent=0 // pred_check
    _
  $region15: #{prompted_bert_forward.5} parent=0 // pred_check_branch
    %20 = sbr.rel (0) target = $region17
  $region16: #{prompted_bert_forward.5} parent=0 // pred_region
    _
  $region17: #{prompted_bert_forward.5} parent=0 // pred_fallthru
    _
  // Predicated region
  $region18: #{prompted_bert_forward.5} parent=0 // pred_check
    _
  $region19: #{prompted_bert_forward.5} parent=0 // pred_check_branch
    %22 = sbr.rel (0) target = $region21
  $region20: #{prompted_bert_forward.5} parent=0 // pred_region
    _
  $region21: #{prompted_bert_forward.5} parent=0 // pred_fallthru
    _
  // Predicated region
  $region22: #{prompted_bert_forward.5} parent=0 // pred_check
    _
  $region23: #{prompted_bert_forward.5} parent=0 // pred_check_branch
    %24 = sbr.rel (0) target = $region25
  $region24: #{prompted_bert_forward.5} parent=0 // pred_region
    _
  $region25: #{prompted_bert_forward.5} parent=0 // pred_fallthru
    _
  // Predicated region
  $region26: #{prompted_bert_forward.5} parent=0 // pred_check
    _
  $region27: #{prompted_bert_forward.5} parent=0 // pred_check_branch
    %26 = sbr.rel (0) target = $region29
  $region28: #{prompted_bert_forward.5} parent=0 // pred_region
    _
  $region29: #{prompted_bert_forward.5} parent=0 // pred_fallthru
    _
  // Predicated region
  $region30: #{prompted_bert_forward.5} parent=0 // pred_check
    _
  $region31: #{prompted_bert_forward.5} parent=0 // pred_check_branch
    %28 = sbr.rel (0) target = $region33
  $region32: #{prompted_bert_forward.5} parent=0 // pred_region
    _
  $region33: #{prompted_bert_forward.5} parent=0 // pred_fallthru
    _
  %v29 = vld [vmem:[%s0] sm:$0xff]
  %v30 = vld [vmem:[%s0 + $0x8] sm:$0xff]
  %vm31 = vcmask 261120
  %v32 = vsel %vm31, %v29, 0.0
  %33 = vadd.xlane.f32.xlu0 %v32
  %v34 = vpop.xlane.xlu0 %33
  %v35 = vsel %vm31, %v30, 0.0
  %36 = vadd.xlane.f32.xlu0 %v35
  %v37 = vpop.xlane.xlu0 %36
  %v38 = vrcp.pop 32.0
  %v39 = vmul.f32 %v34, %v38
  %v40 = vmul.f32 %v37, %v38
  %v41 = vsub.f32 %v29, %v39
  %v42 = vsub.f32 %v30, %v40
  %v43 = vmul.f32 %v41, %v41
  %v44 = vmul.f32 %v42, %v42
  %v45 = vsel %vm31, %v43, 0.0
  %46 = vadd.xlane.f32.xlu0 %v45
  %v47 = vpop.xlane.xlu0 %46
  %v48 = vsel %vm31, %v44, 0.0
  %49 = vadd.xlane.f32.xlu0 %v48
  %v50 = vpop.xlane.xlu0 %49
  %v51 = vmul.f32 %v47, %v38
  %v52 = vmul.f32 %v50, %v38
  %v53 = vadd.f32 %v51, 1e-12
  %v54 = vadd.f32 %v52, 1e-12
  %v55 = vrsqrt.pop %v53
  %v56 = vrsqrt.pop %v54
  %v57 = vmul.f32 %v41, %v55
  %v58 = vmul.f32 %v42, %v56
  %v59 = vld [vmem:[%s1] sm:$0x1]
  %v61 = vlaneseq
  %v62 = vshrl.u32 %v61, 7
  %v63 = vsub.s32 0, %v62
  %v64 = vrot.slane %v59, %v63
  %v66 = vmul.f32 %v57, %v64
  %v67 = vmul.f32 %v58, %v64
  %v68 = vld [vmem:[%s2] sm:$0x1]
  %v70 = vlaneseq
  %v71 = vshrl.u32 %v70, 7
  %v72 = vsub.s32 0, %v71
  %v73 = vrot.slane %v68, %v72
  %v75 = vadd.f32 %v66, %v73
  %v76 = vadd.f32 %v67, %v73
  %v77 = vld [vmem:[%s3] sm:$0xff]
  %v78 = vld [vmem:[%s3 + $0x8] sm:$0xff]
  %v79 = vld [vmem:[%s4] sm:$0x1]
  %81 = vset.pattern.permute.xlu0 0
  %82 = vperm.xlu0 %81, %v77
  %v83 = vpop.permute.xlu0 %82
  %86 = vset.pattern.permute.xlu0 0
  %87 = vperm.xlu0 %86, %v78
  %v88 = vpop.permute.xlu0 %87
  %v91 = vlaneseq
  %v92 = vshrl.u32 %v91, 7
  %v93 = vsub.s32 0, %v92
  %v94 = vrot.slane %v79, %v93
  %v96 = vmul.f32 %v83, %v94
  %v97 = vmul.f32 %v88, %v94
  %v98 = vld [vmem:[%s5] sm:$0x1]
  %v100 = vlaneseq
  %v101 = vshrl.u32 %v100, 7
  %v102 = vsub.s32 0, %v101
  %v103 = vrot.slane %v98, %v102
  %v105 = vadd.f32 %v96, %v103
  %v106 = vadd.f32 %v97, %v103
  %v107 = vsel %vm31, %v105, 0.0
  %108 = vadd.xlane.f32.xlu0 %v107
  %v109 = vpop.xlane.xlu0 %108
  %v110 = vsel %vm31, %v106, 0.0
  %111 = vadd.xlane.f32.xlu0 %v110
  %v112 = vpop.xlane.xlu0 %111
  %v113 = vmul.f32 %v109, %v38
  %v114 = vmul.f32 %v112, %v38
  %v115 = vsub.f32 %v105, %v113
  %v116 = vsub.f32 %v106, %v114
  %v117 = vmul.f32 %v115, %v115
  %v118 = vmul.f32 %v116, %v116
  %v119 = vsel %vm31, %v117, 0.0
  %120 = vadd.xlane.f32.xlu0 %v119
  %v121 = vpop.xlane.xlu0 %120
  %v122 = vsel %vm31, %v118, 0.0
  %123 = vadd.xlane.f32.xlu0 %v122
  %v124 = vpop.xlane.xlu0 %123
  %v125 = vmul.f32 %v121, %v38
  %v126 = vmul.f32 %v124, %v38
  %v127 = vadd.f32 %v125, 1e-05
  %v128 = vadd.f32 %v126, 1e-05
  %v129 = vrsqrt.pop %v127
  %v130 = vrsqrt.pop %v128
  %v131 = vmul.f32 %v115, %v129
  %v132 = vmul.f32 %v116, %v130
  %v133 = vld [vmem:[%s6] sm:$0x1]
  %v135 = vlaneseq
  %v136 = vshrl.u32 %v135, 7
  %v137 = vsub.s32 0, %v136
  %v138 = vrot.slane %v133, %v137
  %v140 = vmul.f32 %v131, %v138
  %v141 = vmul.f32 %v132, %v138
  %v142 = vld [vmem:[%s7] sm:$0x1]
  %v144 = vlaneseq
  %v145 = vshrl.u32 %v144, 7
  %v146 = vsub.s32 0, %v145
  %v147 = vrot.slane %v142, %v146
  %v149 = vadd.f32 %v140, %v147
  %v150 = vadd.f32 %v141, %v147
  %v151 = vmax.f32 %v149, 0.0
  %v152 = vmax.f32 %v150, 0.0
  %v153 = vadd.f32 %v75, %v151
  %v154 = vadd.f32 %v76, %v152
  %155 = vst.msk [vmem:[%s8] sm:$0xff] %vm31, %v153
  %156 = vst.msk [vmem:[%s8 + $0x8] sm:$0xff] %vm31, %v154
  // Predicated region
  $region34: #{prompted_bert_forward.5} parent=0 // pred_check
    _
  $region35: #{prompted_bert_forward.5} parent=0 // pred_check_branch
    %158 = sbr.rel (0) target = $region37
  $region36: #{prompted_bert_forward.5} parent=0 // pred_region
    _
  $region37: #{prompted_bert_forward.5} parent=0 // pred_fallthru
    _
  // Predicated region
  $region38: #{prompted_bert_forward.5} parent=0 // pred_check
    _
  $region39: #{prompted_bert_forward.5} parent=0 // pred_check_branch
    %160 = sbr.rel (0) target = $region41
  $region40: #{prompted_bert_forward.5} parent=0 // pred_region
    _
  $region41: #{prompted_bert_forward.5} parent=0 // pred_fallthru
    _

// kernel: prompted_bert_forward.6
$region0: #{prompted_bert_forward.6}
  #allocation0 [shape = 'u32[]', space=smem, size = 0x4, offset = 0x4, fixed_abs, tag = 'smem constant byte address 0x4 - core index']
  #allocation1 [shape = 'u32[144,128]{1,0:T(1,128)}', space=vmem, size = 0x12000, scoped, tag = 'internal scratch']
  %s0 = inlined_call_operand.vmem [shape: f32[2,8,32], index: 0, kind: input, shape index: {}]
  %s1 = inlined_call_operand.vmem [shape: f32[32,96], index: 1, kind: input, shape index: {}]
  %s2 = inlined_call_operand.vmem [shape: f32[1,96], index: 2, kind: input, shape index: {}]
  %s3 = inlined_call_operand.vmem [shape: f32[2,4,8,8], index: 3, kind: input, shape index: {}]
  %s4 = inlined_call_operand.vmem [shape: f32[2,4,8,8], index: 4, kind: input, shape index: {}]
  %s5 = inlined_call_operand.vmem [shape: f32[2,1,8], index: 5, kind: input, shape index: {}]
  %s6 = inlined_call_operand.vmem [shape: f32[32,32], index: 6, kind: input, shape index: {}]
  %s7 = inlined_call_operand.vmem [shape: f32[1,32], index: 7, kind: input, shape index: {}]
  %s8 = inlined_call_operand.vmem [shape: f32[1,32], index: 8, kind: input, shape index: {}]
  %s9 = inlined_call_operand.vmem [shape: f32[1,32], index: 9, kind: input, shape index: {}]
  %s10 = inlined_call_operand.vmem [shape: f32[2,8,32], index: 10, kind: output, shape index: {}]
  %s11 = sld [smem:[#allocation0]]
  $region73: #{prompted_bert_forward.6} parent=0
    _
  %s13 = ssub.s32 1, %s11
  %s14 = scalar_select 0, %s13, %s11
  loop: start=0, step=1, limit=4
  $region2: #{prompted_bert_forward.6} parent=0 // loop_pre_header
    _
  $region3: #{prompted_bert_forward.6} parent=0 // loop_header
    %s16 = sphi 0, %s20
    %p17 = scmp.ge.s32.totalorder %s16, 4
    %s26 = sphi 0, %s28
    %s29 = sphi 0, %s26
    %s30 = sphi 0, %s29
    %s46 = sphi 0, %s30
    %s50 = sphi 0, %s50
    %s52 = sphi 0, %s50
    %s53 = sphi 0, %s52
    %s67 = sphi 0, %s53
    %s71 = sphi 0, %s71
    %s73 = sphi 0, %s71
    %s74 = sphi 0, %s73
    %s88 = sphi 0, %s74
    %s94 = sphi 0, %s96
    %s97 = sphi 0, %s94
    %s98 = sphi 0, %s97
    %s114 = sphi 0, %s98
    %s120 = sphi 0, %s122
    %s123 = sphi 0, %s120
    %s124 = sphi 0, %s123
    %s140 = sphi 0, %s124
    %s146 = sphi 0, %s148
    %s149 = sphi 0, %s146
    %s150 = sphi 0, %s149
    %s166 = sphi 0, %s150
    %s170 = sphi 0, %s170
    %s172 = sphi 0, %s170
    %s173 = sphi 0, %s172
    %s187 = sphi 0, %s173
    %s191 = sphi 0, %s191
    %s193 = sphi 0, %s191
    %s194 = sphi 0, %s193
    %s208 = sphi 0, %s194
    %s212 = sphi 0, %s212
    %s214 = sphi 0, %s212
    %s215 = sphi 0, %s214
    %s229 = sphi 0, %s215
    %s233 = sphi 0, %s233
    %s235 = sphi 0, %s233
    %s236 = sphi 0, %s235
    %s250 = sphi 0, %s236
    %s256 = sphi 0, %s258
    %s259 = sphi 0, %s256
    %s260 = sphi 0, %s259
    %s276 = sphi 0, %s260
  $region4: #{prompted_bert_forward.6} parent=0 // loop_header_branch
    %19 = sbr.rel (%p17) target = $region8
  $region5: #{prompted_bert_forward.6} parent=0 // loop_body
    %s21 = ssub.s32 %s16, 1
    %s22 = ssub.s32 %s16, 2
    %s23 = sadd.s32 %s16, 1
    %s24 = ssub.s32 %s16, %s23
    %p25 = scmp.eq.s32.totalorder %s24, 0
    %s27 = sadd.s32 %s26, 1
    %s28 = scalar_select %p25, %s26, %s27
    %p31 = pneg %p25
    %p32 = scmp.eq.s32.totalorder %s16, 1
    %p33 = por %p31, %p32
    %p34 = scmp.ne.s32.totalorder %s26, %s29
    %p35 = scmp.eq.s32.totalorder %s16, 0
    %p36 = por %p34, %p35
    %p37 = scmp.ne.s32.totalorder %s26, %s29
    %p38 = scmp.eq.s32.totalorder %s21, 1
    %p39 = por %p37, %p38
    %p40 = scmp.ne.s32.totalorder %s29, %s30
    %p41 = scmp.eq.s32.totalorder %s21, 0
    %p42 = por %p40, %p41
    %p43 = scmp.ne.s32.totalorder %s29, %s30
    %p44 = scmp.eq.s32.totalorder %s22, 1
    %p45 = por %p43, %p44
    %p47 = scmp.ne.s32.totalorder %s30, %s46
    %p48 = scmp.eq.s32.totalorder %s22, 0
    %p49 = por %p47, %p48
    %s51 = sadd.s32 %s50, 1
    %p54 = scmp.eq.s32.totalorder %s16, 1
    %p55 = scmp.ne.s32.totalorder %s50, %s52
    %p56 = scmp.eq.s32.totalorder %s16, 0
    %p57 = por %p55, %p56
    %p58 = scmp.ne.s32.totalorder %s50, %s52
    %p59 = scmp.eq.s32.totalorder %s21, 1
    %p60 = por %p58, %p59
    %p61 = scmp.ne.s32.totalorder %s52, %s53
    %p62 = scmp.eq.s32.totalorder %s21, 0
    %p63 = por %p61, %p62
    %p64 = scmp.ne.s32.totalorder %s52, %s53
    %p65 = scmp.eq.s32.totalorder %s22, 1
    %p66 = por %p64, %p65
    %p68 = scmp.ne.s32.totalorder %s53, %s67
    %p69 = scmp.eq.s32.totalorder %s22, 0
    %p70 = por %p68, %p69
    %s72 = sadd.s32 %s71, 1
    %p75 = scmp.eq.s32.totalorder %s16, 1
    %p76 = scmp.ne.s32.totalorder %s71, %s73
    %p77 = scmp.eq.s32.totalorder %s16, 0
    %p78 = por %p76, %p77
    %p79 = scmp.ne.s32.totalorder %s71, %s73
    %p80 = scmp.eq.s32.totalorder %s21, 1
    %p81 = por %p79, %p80
    %p82 = scmp.ne.s32.totalorder %s73, %s74
    %p83 = scmp.eq.s32.totalorder %s21, 0
    %p84 = por %p82, %p83
    %p85 = scmp.ne.s32.totalorder %s73, %s74
    %p86 = scmp.eq.s32.totalorder %s22, 1
    %p87 = por %p85, %p86
    %p89 = scmp.ne.s32.totalorder %s74, %s88
    %p90 = scmp.eq.s32.totalorder %s22, 0
    %p91 = por %p89, %p90
    %s92 = ssub.s32 %s16, %s23
    %p93 = scmp.eq.s32.totalorder %s92, 0
    %s95 = sadd.s32 %s94, 1
    %s96 = scalar_select %p93, %s94, %s95
    %p99 = pneg %p93
    %p100 = scmp.eq.s32.totalorder %s16, 1
    %p101 = por %p99, %p100
    %p102 = scmp.ne.s32.totalorder %s94, %s97
    %p103 = scmp.eq.s32.totalorder %s16, 0
    %p104 = por %p102, %p103
    %p105 = scmp.ne.s32.totalorder %s94, %s97
    %p106 = scmp.eq.s32.totalorder %s21, 1
    %p107 = por %p105, %p106
    %p108 = scmp.ne.s32.totalorder %s97, %s98
    %p109 = scmp.eq.s32.totalorder %s21, 0
    %p110 = por %p108, %p109
    %p111 = scmp.ne.s32.totalorder %s97, %s98
    %p112 = scmp.eq.s32.totalorder %s22, 1
    %p113 = por %p111, %p112
    %p115 = scmp.ne.s32.totalorder %s98, %s114
    %p116 = scmp.eq.s32.totalorder %s22, 0
    %p117 = por %p115, %p116
    %s118 = ssub.s32 %s16, %s23
    %p119 = scmp.eq.s32.totalorder %s118, 0
    %s121 = sadd.s32 %s120, 1
    %s122 = scalar_select %p119, %s120, %s121
    %p125 = pneg %p119
    %p126 = scmp.eq.s32.totalorder %s16, 1
    %p127 = por %p125, %p126
    %p128 = scmp.ne.s32.totalorder %s120, %s123
    %p129 = scmp.eq.s32.totalorder %s16, 0
    %p130 = por %p128, %p129
    %p131 = scmp.ne.s32.totalorder %s120, %s123
    %p132 = scmp.eq.s32.totalorder %s21, 1
    %p133 = por %p131, %p132
    %p134 = scmp.ne.s32.totalorder %s123, %s124
    %p135 = scmp.eq.s32.totalorder %s21, 0
    %p136 = por %p134, %p135
    %p137 = scmp.ne.s32.totalorder %s123, %s124
    %p138 = scmp.eq.s32.totalorder %s22, 1
    %p139 = por %p137, %p138
    %p141 = scmp.ne.s32.totalorder %s124, %s140
    %p142 = scmp.eq.s32.totalorder %s22, 0
    %p143 = por %p141, %p142
    %s144 = ssub.s32 %s16, %s23
    %p145 = scmp.eq.s32.totalorder %s144, 0
    %s147 = sadd.s32 %s146, 1
    %s148 = scalar_select %p145, %s146, %s147
    %p151 = pneg %p145
    %p152 = scmp.eq.s32.totalorder %s16, 1
    %p153 = por %p151, %p152
    %p154 = scmp.ne.s32.totalorder %s146, %s149
    %p155 = scmp.eq.s32.totalorder %s16, 0
    %p156 = por %p154, %p155
    %p157 = scmp.ne.s32.totalorder %s146, %s149
    %p158 = scmp.eq.s32.totalorder %s21, 1
    %p159 = por %p157, %p158
    %p160 = scmp.ne.s32.totalorder %s149, %s150
    %p161 = scmp.eq.s32.totalorder %s21, 0
    %p162 = por %p160, %p161
    %p163 = scmp.ne.s32.totalorder %s149, %s150
    %p164 = scmp.eq.s32.totalorder %s22, 1
    %p165 = por %p163, %p164
    %p167 = scmp.ne.s32.totalorder %s150, %s166
    %p168 = scmp.eq.s32.totalorder %s22, 0
    %p169 = por %p167, %p168
    %s171 = sadd.s32 %s170, 1
    %p174 = scmp.eq.s32.totalorder %s16, 1
    %p175 = scmp.ne.s32.totalorder %s170, %s172
    %p176 = scmp.eq.s32.totalorder %s16, 0
    %p177 = por %p175, %p176
    %p178 = scmp.ne.s32.totalorder %s170, %s172
    %p179 = scmp.eq.s32.totalorder %s21, 1
    %p180 = por %p178, %p179
    %p181 = scmp.ne.s32.totalorder %s172, %s173
    %p182 = scmp.eq.s32.totalorder %s21, 0
    %p183 = por %p181, %p182
    %p184 = scmp.ne.s32.totalorder %s172, %s173
    %p185 = scmp.eq.s32.totalorder %s22, 1
    %p186 = por %p184, %p185
    %p188 = scmp.ne.s32.totalorder %s173, %s187
    %p189 = scmp.eq.s32.totalorder %s22, 0
    %p190 = por %p188, %p189
    %s192 = sadd.s32 %s191, 1
    %p195 = scmp.eq.s32.totalorder %s16, 1
    %p196 = scmp.ne.s32.totalorder %s191, %s193
    %p197 = scmp.eq.s32.totalorder %s16, 0
    %p198 = por %p196, %p197
    %p199 = scmp.ne.s32.totalorder %s191, %s193
    %p200 = scmp.eq.s32.totalorder %s21, 1
    %p201 = por %p199, %p200
    %p202 = scmp.ne.s32.totalorder %s193, %s194
    %p203 = scmp.eq.s32.totalorder %s21, 0
    %p204 = por %p202, %p203
    %p205 = scmp.ne.s32.totalorder %s193, %s194
    %p206 = scmp.eq.s32.totalorder %s22, 1
    %p207 = por %p205, %p206
    %p209 = scmp.ne.s32.totalorder %s194, %s208
    %p210 = scmp.eq.s32.totalorder %s22, 0
    %p211 = por %p209, %p210
    %s213 = sadd.s32 %s212, 1
    %p216 = scmp.eq.s32.totalorder %s16, 1
    %p217 = scmp.ne.s32.totalorder %s212, %s214
    %p218 = scmp.eq.s32.totalorder %s16, 0
    %p219 = por %p217, %p218
    %p220 = scmp.ne.s32.totalorder %s212, %s214
    %p221 = scmp.eq.s32.totalorder %s21, 1
    %p222 = por %p220, %p221
    %p223 = scmp.ne.s32.totalorder %s214, %s215
    %p224 = scmp.eq.s32.totalorder %s21, 0
    %p225 = por %p223, %p224
    %p226 = scmp.ne.s32.totalorder %s214, %s215
    %p227 = scmp.eq.s32.totalorder %s22, 1
    %p228 = por %p226, %p227
    %p230 = scmp.ne.s32.totalorder %s215, %s229
    %p231 = scmp.eq.s32.totalorder %s22, 0
    %p232 = por %p230, %p231
    %s234 = sadd.s32 %s233, 1
    %p237 = scmp.eq.s32.totalorder %s16, 1
    %p238 = scmp.ne.s32.totalorder %s233, %s235
    %p239 = scmp.eq.s32.totalorder %s16, 0
    %p240 = por %p238, %p239
    %p241 = scmp.ne.s32.totalorder %s233, %s235
    %p242 = scmp.eq.s32.totalorder %s21, 1
    %p243 = por %p241, %p242
    %p244 = scmp.ne.s32.totalorder %s235, %s236
    %p245 = scmp.eq.s32.totalorder %s21, 0
    %p246 = por %p244, %p245
    %p247 = scmp.ne.s32.totalorder %s235, %s236
    %p248 = scmp.eq.s32.totalorder %s22, 1
    %p249 = por %p247, %p248
    %p251 = scmp.ne.s32.totalorder %s236, %s250
    %p252 = scmp.eq.s32.totalorder %s22, 0
    %p253 = por %p251, %p252
    %s254 = ssub.s32 %s16, %s23
    %p255 = scmp.eq.s32.totalorder %s254, 0
    %s257 = sadd.s32 %s256, 1
    %s258 = scalar_select %p255, %s256, %s257
    %p261 = pneg %p255
    %p262 = scmp.eq.s32.totalorder %s16, 1
    %p263 = por %p261, %p262
    %p264 = scmp.ne.s32.totalorder %s256, %s259
    %p265 = scmp.eq.s32.totalorder %s16, 0
    %p266 = por %p264, %p265
    %p267 = scmp.ne.s32.totalorder %s256, %s259
    %p268 = scmp.eq.s32.totalorder %s21, 1
    %p269 = por %p267, %p268
    %p270 = scmp.ne.s32.totalorder %s259, %s260
    %p271 = scmp.eq.s32.totalorder %s21, 0
    %p272 = por %p270, %p271
    %p273 = scmp.ne.s32.totalorder %s259, %s260
    %p274 = scmp.eq.s32.totalorder %s22, 1
    %p275 = por %p273, %p274
    %p277 = scmp.ne.s32.totalorder %s260, %s276
    %p278 = scmp.eq.s32.totalorder %s22, 0
    %p279 = por %p277, %p278
    %p280 = scmp.le.s32.totalorder 1, %s16
    %p281 = scmp.lt.s32.totalorder %s16, 3
    %p282 = pnand %p280, %p281
    %p283 = pneg %p282
    // Predicated region
    $region9: #{prompted_bert_forward.6} parent=5 // pred_check
      _
    $region10: #{prompted_bert_forward.6} parent=5 // pred_check_branch
      %285 = sbr.rel (%p282) target = $region12
    $region11: #{prompted_bert_forward.6} parent=5 // pred_region
      %s286 = ssub.s32 %s16, 1
      // Predicated region
      $region13: #{prompted_bert_forward.6} parent=11 // pred_check
        %p287 = pneg %p63
      $region14: #{prompted_bert_forward.6} parent=11 // pred_check_branch
        %289 = sbr.rel (%p287) target = $region16
      $region15: #{prompted_bert_forward.6} parent=11 // pred_region
        _
      $region16: #{prompted_bert_forward.6} parent=11 // pred_fallthru
        _
      // Predicated region
      $region17: #{prompted_bert_forward.6} parent=11 // pred_check
        %p290 = pneg %p84
      $region18: #{prompted_bert_forward.6} parent=11 // pred_check_branch
        %292 = sbr.rel (%p290) target = $region20
      $region19: #{prompted_bert_forward.6} parent=11 // pred_region
        _
      $region20: #{prompted_bert_forward.6} parent=11 // pred_fallthru
        _
      // Predicated region
      $region21: #{prompted_bert_forward.6} parent=11 // pred_check
        %p293 = pneg %p183
      $region22: #{prompted_bert_forward.6} parent=11 // pred_check_branch
        %295 = sbr.rel (%p293) target = $region24
      $region23: #{prompted_bert_forward.6} parent=11 // pred_region
        _
      $region24: #{prompted_bert_forward.6} parent=11 // pred_fallthru
        _
      // Predicated region
      $region25: #{prompted_bert_forward.6} parent=11 // pred_check
        %p296 = pneg %p204
      $region26: #{prompted_bert_forward.6} parent=11 // pred_check_branch
        %298 = sbr.rel (%p296) target = $region28
      $region27: #{prompted_bert_forward.6} parent=11 // pred_region
        _
      $region28: #{prompted_bert_forward.6} parent=11 // pred_fallthru
        _
      // Predicated region
      $region29: #{prompted_bert_forward.6} parent=11 // pred_check
        %p299 = pneg %p225
      $region30: #{prompted_bert_forward.6} parent=11 // pred_check_branch
        %301 = sbr.rel (%p299) target = $region32
      $region31: #{prompted_bert_forward.6} parent=11 // pred_region
        _
      $region32: #{prompted_bert_forward.6} parent=11 // pred_fallthru
        _
      // Predicated region
      $region33: #{prompted_bert_forward.6} parent=11 // pred_check
        %p302 = pneg %p246
      $region34: #{prompted_bert_forward.6} parent=11 // pred_check_branch
        %304 = sbr.rel (%p302) target = $region36
      $region35: #{prompted_bert_forward.6} parent=11 // pred_region
        _
      $region36: #{prompted_bert_forward.6} parent=11 // pred_fallthru
        _
    $region12: #{prompted_bert_forward.6} parent=5 // pred_fallthru
      _
    %p305 = scmp.lt.s32.totalorder %s16, 2
    // Predicated region
    $region37: #{prompted_bert_forward.6} parent=5 // pred_check
      %p306 = pneg %p305
    $region38: #{prompted_bert_forward.6} parent=5 // pred_check_branch
      %308 = sbr.rel (%p306) target = $region40
    $region39: #{prompted_bert_forward.6} parent=5 // pred_region
      // Predicated region
      $region41: #{prompted_bert_forward.6} parent=39 // pred_check
        %p309 = pneg %p36
      $region42: #{prompted_bert_forward.6} parent=39 // pred_check_branch
        %311 = sbr.rel (%p309) target = $region44
      $region43: #{prompted_bert_forward.6} parent=39 // pred_region
        %p312 = scmp.lt.s32.totalorder %s16, 1
        %s313 = scalar_select %p312, %s16, 1
        %s314 = smul.addr %s313, 8
        %s315 = scalar_lea.vmem %s0, %s314
      $region44: #{prompted_bert_forward.6} parent=39 // pred_fallthru
        _
      // Predicated region
      $region45: #{prompted_bert_forward.6} parent=39 // pred_check
        %p316 = pneg %p104
      $region46: #{prompted_bert_forward.6} parent=39 // pred_check_branch
        %318 = sbr.rel (%p316) target = $region48
      $region47: #{prompted_bert_forward.6} parent=39 // pred_region
        %p319 = scmp.lt.s32.totalorder %s16, 1
        %s320 = scalar_select %p319, %s16, 1
        %s321 = smul.addr %s320, 4
        %s322 = smul.addr %s321, 8
        %s323 = scalar_lea.vmem %s3, %s322
      $region48: #{prompted_bert_forward.6} parent=39 // pred_fallthru
        _
      // Predicated region
      $region49: #{prompted_bert_forward.6} parent=39 // pred_check
        %p324 = pneg %p130
      $region50: #{prompted_bert_forward.6} parent=39 // pred_check_branch
        %326 = sbr.rel (%p324) target = $region52
      $region51: #{prompted_bert_forward.6} parent=39 // pred_region
        %p327 = scmp.lt.s32.totalorder %s16, 1
        %s328 = scalar_select %p327, %s16, 1
        %s329 = smul.addr %s328, 4
        %s330 = smul.addr %s329, 8
        %s331 = scalar_lea.vmem %s4, %s330
      $region52: #{prompted_bert_forward.6} parent=39 // pred_fallthru
        _
      // Predicated region
      $region53: #{prompted_bert_forward.6} parent=39 // pred_check
        %p332 = pneg %p156
      $region54: #{prompted_bert_forward.6} parent=39 // pred_check_branch
        %334 = sbr.rel (%p332) target = $region56
      $region55: #{prompted_bert_forward.6} parent=39 // pred_region
        %p335 = scmp.lt.s32.totalorder %s16, 1
        %s336 = scalar_select %p335, %s16, 1
        %s337 = scalar_lea.vmem %s5, %s336
      $region56: #{prompted_bert_forward.6} parent=39 // pred_fallthru
        _
    $region40: #{prompted_bert_forward.6} parent=5 // pred_fallthru
      _
    %p338 = scmp.le.s32.totalorder 1, %s16
    %p339 = scmp.lt.s32.totalorder %s16, 3
    %p340 = pnand %p338, %p339
    %p341 = pneg %p340
    // Predicated region
    $region57: #{prompted_bert_forward.6} parent=5 // pred_check
      _
    $region58: #{prompted_bert_forward.6} parent=5 // pred_check_branch
      %343 = sbr.rel (%p340) target = $region60
    $region59: #{prompted_bert_forward.6} parent=5 // pred_region
      %s344 = ssub.s32 %s16, 1
      %p345 = scmp.lt.s32.totalorder %s21, 1
      %s346 = scalar_select %p345, %s21, 1
      %s347 = smul.addr %s346, 8
      %s348 = scalar_lea.vmem %s0, %s347
      %p349 = pneg %p42
      %p350 = pneg %p39
      %p351 = pneg %p63
      %p352 = pneg %p60
      %p353 = pneg %p84
      %p354 = pneg %p81
      %p355 = scmp.lt.s32.totalorder %s21, 1
      %s356 = scalar_select %p355, %s21, 1
      %s357 = smul.addr %s356, 4
      %s358 = smul.addr %s357, 8
      %s359 = scalar_lea.vmem %s3, %s358
      %p360 = pneg %p110
      %p361 = pneg %p107
      %p362 = scmp.lt.s32.totalorder %s21, 1
      %s363 = scalar_select %p362, %s21, 1
      %s364 = smul.addr %s363, 4
      %s365 = smul.addr %s364, 8
      %s366 = scalar_lea.vmem %s4, %s365
      %p367 = pneg %p136
      %p368 = pneg %p133
      %p369 = scmp.lt.s32.totalorder %s21, 1
      %s370 = scalar_select %p369, %s21, 1
      %s371 = scalar_lea.vmem %s5, %s370
      %p372 = pneg %p162
      %p373 = pneg %p159
      %p374 = pneg %p183
      %p375 = pneg %p180
      %p376 = pneg %p204
      %p377 = pneg %p201
      %p378 = pneg %p225
      %p379 = pneg %p222
      %p380 = pneg %p246
      %p381 = pneg %p243
      %p382 = pneg %p272
      %p383 = pneg %p269
      %p384 = scmp.lt.s32.totalorder %s21, 1
      %s385 = scalar_select %p384, %s21, 1
      %s386 = smul.addr %s385, 8
      %s387 = scalar_lea.vmem %s10, %s386
      %p388 = scmp.lt.s32.totalorder %s21, 1
      %s389 = scalar_select %p388, %s21, 1
      %s390 = smul.addr %s389, 8
      %s391 = scalar_lea.vmem %s0, %s390
      %p392 = scmp.lt.s32.totalorder %s21, 1
      %s393 = scalar_select %p392, %s21, 1
      %s394 = smul.addr %s393, 4
      %s395 = smul.addr %s394, 8
      %s396 = scalar_lea.vmem %s3, %s395
      %p397 = scmp.lt.s32.totalorder %s21, 1
      %s398 = scalar_select %p397, %s21, 1
      %s399 = smul.addr %s398, 4
      %s400 = smul.addr %s399, 8
      %s401 = scalar_lea.vmem %s4, %s400
      %p402 = scmp.lt.s32.totalorder %s21, 1
      %s403 = scalar_select %p402, %s21, 1
      %s404 = scalar_lea.vmem %s5, %s403
      %p405 = scmp.lt.s32.totalorder %s21, 1
      %s406 = scalar_select %p405, %s21, 1
      %s407 = smul.addr %s406, 8
      %s408 = scalar_lea.vmem %s10, %s407
      %v409 = vld [vmem:[%s391] sm:$0xff]
      %v410 = vld [vmem:[%s1] sm:$0xff]
      %v411 = vld [vmem:[%s1 + $0x8] sm:$0xff]
      %v412 = vld [vmem:[%s1 + $0x10] sm:$0xff]
      %v413 = vld [vmem:[%s1 + $0x18] sm:$0xff]
      %v414 = vld [vmem:[%s2] sm:$0x1]
      %v416 = vlaneseq
      %v417 = vshrl.u32 %v416, 7
      %v418 = vsub.s32 0, %v417
      %v419 = vrot.slane %v414, %v418
      %vm421 = vcmask 261120
      %v423 = vsel %vm421, %v409, 0
      %425 = vmatprep.subr.mxu0 0.0
      %426 = vmatpush1.msra.mxu0 %v410
      %427 = vmatprep.subr.mxu0 0.0
      %428 = vmatpush1.msra.mxu0 %v411
      %429 = vmatprep.subr.mxu0 0.0
      %430 = vmatpush1.msra.mxu0 %v412
      %431 = vmatprep.subr.mxu0 0.0
      %432 = vmatpush1.msra.mxu0 %v413
      %433 = vmatprep.subr.mxu0 0.0
      %434 = vmatpush1.msra.mxu0 0.0
      %435 = vmatprep.subr.mxu0 0.0
      %436 = vmatpush1.msra.mxu0 0.0
      %437 = vmatprep.subr.mxu0 0.0
      %438 = vmatpush1.msra.mxu0 0.0
      %439 = vmatprep.subr.mxu0 0.0
      %440 = vmatpush1.msra.mxu0 0.0
      %441 = vmatprep.subr.mxu0 0.0
      %442 = vmatpush1.msra.mxu0 0.0
      %443 = vmatprep.subr.mxu0 0.0
      %444 = vmatpush1.msra.mxu0 0.0
      %445 = vmatprep.subr.mxu0 0.0
      %446 = vmatpush1.msra.mxu0 0.0
      %447 = vmatprep.subr.mxu0 0.0
      %448 = vmatpush1.msra.mxu0 0.0
      %449 = vmatprep.subr.mxu0 0.0
      %450 = vmatpush1.msra.mxu0 0.0
      %451 = vmatprep.subr.mxu0 0.0
      %452 = vmatpush1.msra.mxu0 0.0
      %453 = vmatprep.subr.mxu0 0.0
      %454 = vmatpush1.msra.mxu0 0.0
      %455 = vmatprep.subr.mxu0 0.0
      %456 = vmatpush1.msra.mxu0 0.0
      %457 = vmatprep.subr.mxu0 0.0
      %458 = vmatpush1.msra.mxu0 0.0
      %459 = vmatprep.subr.mxu0 0.0
      %460 = vmatpush1.msra.mxu0 0.0
      %461 = vmatprep.subr.mxu0 0.0
      %462 = vmatpush1.msra.mxu0 0.0
      %463 = vmatprep.subr.mxu0 0.0
      %464 = vmatpush1.msra.mxu0 0.0
      %465 = vmatprep.subr.mxu0 0.0
      %466 = vmatpush1.msra.mxu0 0.0
      %467 = vmatprep.subr.mxu0 0.0
      %468 = vmatpush1.msra.mxu0 0.0
      %469 = vmatprep.subr.mxu0 0.0
      %470 = vmatpush1.msra.mxu0 0.0
      %471 = vmatprep.subr.mxu0 0.0
      %472 = vmatpush1.msra.mxu0 0.0
      %473 = vmatprep.subr.mxu0 0.0
      %474 = vmatpush1.msra.mxu0 0.0
      %475 = vmatprep.subr.mxu0 0.0
      %476 = vmatpush1.msra.mxu0 0.0
      %477 = vmatprep.subr.mxu0 0.0
      %478 = vmatpush1.msra.mxu0 0.0
      %479 = vmatprep.subr.mxu0 0.0
      %480 = vmatpush1.msra.mxu0 0.0
      %481 = vmatprep.subr.mxu0 0.0
      %482 = vmatpush1.msra.mxu0 0.0
      %483 = vmatprep.subr.mxu0 0.0
      %484 = vmatpush1.msra.mxu0 0.0
      %485 = vmatprep.subr.mxu0 0.0
      %486 = vmatpush1.msra.mxu0 0.0
      %487 = vmatprep.subr.mxu0 0.0
      %488 = vmatpush1.msra.mxu0 0.0
      %489 = vmatprep.mubr.f32.mxu0 0.0
      %490 = vmatmul.mubr.f32.gmra.mrb[0].mxu0 %v423
      %v491 = vpop.f32.mrb[0].mxu0
      %v492 = vadd.f32 %v419, %v491
      %v493 = vpop.f32.mrb[0].mxu0
      %494 = vdwg.mxu0
      %v495 = vmul.f32 %v492, 0.35355338
      %497 = vrot.lane.b32.xlu0 %v495, 120
      %v498 = vpop.permute.xlu0 %497
      %499 = vrot.lane.b32.xlu0 %v495, 112
      %v500 = vpop.permute.xlu0 %499
      %501 = vrot.lane.b32.xlu0 %v495, 104
      %v502 = vpop.permute.xlu0 %501
      %504 = vrot.lane.b32.xlu0 %v492, 120
      %v505 = vpop.permute.xlu0 %504
      %506 = vrot.lane.b32.xlu0 %v492, 112
      %v507 = vpop.permute.xlu0 %506
      %508 = vrot.lane.b32.xlu0 %v492, 104
      %v509 = vpop.permute.xlu0 %508
      %v510 = vld [vmem:[%s396] sm:$0xff]
      %v511 = vld [vmem:[%s396 + $0x8] sm:$0xff]
      %v512 = vld [vmem:[%s396 + $0x10] sm:$0xff]
      %v513 = vld [vmem:[%s396 + $0x18] sm:$0xff]
      %v514 = vld [vmem:[%s401] sm:$0xff]
      %v515 = vld [vmem:[%s401 + $0x8] sm:$0xff]
      %v516 = vld [vmem:[%s401 + $0x10] sm:$0xff]
      %v517 = vld [vmem:[%s401 + $0x18] sm:$0xff]
      %v518 = vld [vmem:[%s404] sm:$0x1]
      %v520 = vlaneseq
      %v521 = vshrl.u32 %v520, 7
      %v522 = vsub.s32 0, %v521
      %v523 = vrot.slane %v518, %v522
      %525 = vrot.lane.b32.xlu0 %v492, 96
      %v526 = vpop.permute.xlu0 %525
      %527 = vrot.lane.b32.xlu0 %v505, 96
      %v528 = vpop.permute.xlu0 %527
      %529 = vrot.lane.b32.xlu0 %v507, 96
      %v530 = vpop.permute.xlu0 %529
      %531 = vrot.lane.b32.xlu0 %v509, 96
      %v532 = vpop.permute.xlu0 %531
      %537 = vxpose.xlu0.b32.start [1/16] %v526, 128
      %538 = vxpose.xlu0.b32.cont [2/16] 0.0, 128
      %539 = vxpose.xlu0.b32.cont [3/16] 0.0, 128
      %540 = vxpose.xlu0.b32.cont [4/16] 0.0, 128
      %541 = vxpose.xlu0.b32.cont [5/16] 0.0, 128
      %542 = vxpose.xlu0.b32.cont [6/16] 0.0, 128
      %543 = vxpose.xlu0.b32.cont [7/16] 0.0, 128
      %544 = vxpose.xlu0.b32.cont [8/16] 0.0, 128
      %545 = vxpose.xlu0.b32.cont [9/16] 0.0, 128
      %546 = vxpose.xlu0.b32.cont [10/16] 0.0, 128
      %547 = vxpose.xlu0.b32.cont [11/16] 0.0, 128
      %548 = vxpose.xlu0.b32.cont [12/16] 0.0, 128
      %549 = vxpose.xlu0.b32.cont [13/16] 0.0, 128
      %550 = vxpose.xlu0.b32.cont [14/16] 0.0, 128
      %551 = vxpose.xlu0.b32.cont [15/16] 0.0, 128
      %552 = vxpose.xlu0.b32.end [16/16] 0.0, 128
      %v553 = vpop.trf.xlu0
      %v554 = vpop.trf.xlu0
      %v555 = vpop.trf.xlu0
      %v556 = vpop.trf.xlu0
      %v557 = vpop.trf.xlu0
      %v558 = vpop.trf.xlu0
      %v559 = vpop.trf.xlu0
      %v560 = vpop.trf.xlu0
      %v561 = vpop.trf.xlu0
      %v562 = vpop.trf.xlu0
      %v563 = vpop.trf.xlu0
      %v564 = vpop.trf.xlu0
      %v565 = vpop.trf.xlu0
      %v566 = vpop.trf.xlu0
      %v567 = vpop.trf.xlu0
      %v568 = vpop.trf.xlu0
      %569 = vxpose.xlu0.b32.start [1/16] %v528, 128
      %570 = vxpose.xlu0.b32.cont [2/16] 0.0, 128
      %571 = vxpose.xlu0.b32.cont [3/16] 0.0, 128
      %572 = vxpose.xlu0.b32.cont [4/16] 0.0, 128
      %573 = vxpose.xlu0.b32.cont [5/16] 0.0, 128
      %574 = vxpose.xlu0.b32.cont [6/16] 0.0, 128
      %575 = vxpose.xlu0.b32.cont [7/16] 0.0, 128
      %576 = vxpose.xlu0.b32.cont [8/16] 0.0, 128
      %577 = vxpose.xlu0.b32.cont [9/16] 0.0, 128
      %578 = vxpose.xlu0.b32.cont [10/16] 0.0, 128
      %579 = vxpose.xlu0.b32.cont [11/16] 0.0, 128
      %580 = vxpose.xlu0.b32.cont [12/16] 0.0, 128
      %581 = vxpose.xlu0.b32.cont [13/16] 0.0, 128
      %582 = vxpose.xlu0.b32.cont [14/16] 0.0, 128
      %583 = vxpose.xlu0.b32.cont [15/16] 0.0, 128
      %584 = vxpose.xlu0.b32.end [16/16] 0.0, 128
      %v585 = vpop.trf.xlu0
      %v586 = vpop.trf.xlu0
      %v587 = vpop.trf.xlu0
      %v588 = vpop.trf.xlu0
      %v589 = vpop.trf.xlu0
      %v590 = vpop.trf.xlu0
      %v591 = vpop.trf.xlu0
      %v592 = vpop.trf.xlu0
      %v593 = vpop.trf.xlu0
      %v594 = vpop.trf.xlu0
      %v595 = vpop.trf.xlu0
      %v596 = vpop.trf.xlu0
      %v597 = vpop.trf.xlu0
      %v598 = vpop.trf.xlu0
      %v599 = vpop.trf.xlu0
      %v600 = vpop.trf.xlu0
      %601 = vxpose.xlu0.b32.start [1/16] %v530, 128
      %602 = vxpose.xlu0.b32.cont [2/16] 0.0, 128
      %603 = vxpose.xlu0.b32.cont [3/16] 0.0, 128
      %604 = vxpose.xlu0.b32.cont [4/16] 0.0, 128
      %605 = vxpose.xlu0.b32.cont [5/16] 0.0, 128
      %606 = vxpose.xlu0.b32.cont [6/16] 0.0, 128
      %607 = vxpose.xlu0.b32.cont [7/16] 0.0, 128
      %608 = vxpose.xlu0.b32.cont [8/16] 0.0, 128
      %609 = vxpose.xlu0.b32.cont [9/16] 0.0, 128
      %610 = vxpose.xlu0.b32.cont [10/16] 0.0, 128
      %611 = vxpose.xlu0.b32.cont [11/16] 0.0, 128
      %612 = vxpose.xlu0.b32.cont [12/16] 0.0, 128
      %613 = vxpose.xlu0.b32.cont [13/16] 0.0, 128
      %614 = vxpose.xlu0.b32.cont [14/16] 0.0, 128
      %615 = vxpose.xlu0.b32.cont [15/16] 0.0, 128
      %616 = vxpose.xlu0.b32.end [16/16] 0.0, 128
      %v617 = vpop.trf.xlu0
      %v618 = vpop.trf.xlu0
      %v619 = vpop.trf.xlu0
      %v620 = vpop.trf.xlu0
      %v621 = vpop.trf.xlu0
      %v622 = vpop.trf.xlu0
      %v623 = vpop.trf.xlu0
      %v624 = vpop.trf.xlu0
      %v625 = vpop.trf.xlu0
      %v626 = vpop.trf.xlu0
      %v627 = vpop.trf.xlu0
      %v628 = vpop.trf.xlu0
      %v629 = vpop.trf.xlu0
      %v630 = vpop.trf.xlu0
      %v631 = vpop.trf.xlu0
      %v632 = vpop.trf.xlu0
      %633 = vxpose.xlu0.b32.start [1/16] %v532, 128
      %634 = vxpose.xlu0.b32.cont [2/16] 0.0, 128
      %635 = vxpose.xlu0.b32.cont [3/16] 0.0, 128
      %636 = vxpose.xlu0.b32.cont [4/16] 0.0, 128
      %637 = vxpose.xlu0.b32.cont [5/16] 0.0, 128
      %638 = vxpose.xlu0.b32.cont [6/16] 0.0, 128
      %639 = vxpose.xlu0.b32.cont [7/16] 0.0, 128
      %640 = vxpose.xlu0.b32.cont [8/16] 0.0, 128
      %641 = vxpose.xlu0.b32.cont [9/16] 0.0, 128
      %642 = vxpose.xlu0.b32.cont [10/16] 0.0, 128
      %643 = vxpose.xlu0.b32.cont [11/16] 0.0, 128
      %644 = vxpose.xlu0.b32.cont [12/16] 0.0, 128
      %645 = vxpose.xlu0.b32.cont [13/16] 0.0, 128
      %646 = vxpose.xlu0.b32.cont [14/16] 0.0, 128
      %647 = vxpose.xlu0.b32.cont [15/16] 0.0, 128
      %648 = vxpose.xlu0.b32.end [16/16] 0.0, 128
      %v649 = vpop.trf.xlu0
      %v650 = vpop.trf.xlu0
      %v651 = vpop.trf.xlu0
      %v652 = vpop.trf.xlu0
      %v653 = vpop.trf.xlu0
      %v654 = vpop.trf.xlu0
      %v655 = vpop.trf.xlu0
      %v656 = vpop.trf.xlu0
      %v657 = vpop.trf.xlu0
      %v658 = vpop.trf.xlu0
      %v659 = vpop.trf.xlu0
      %v660 = vpop.trf.xlu0
      %v661 = vpop.trf.xlu0
      %v662 = vpop.trf.xlu0
      %v663 = vpop.trf.xlu0
      %v664 = vpop.trf.xlu0
      %vm665 = vcmask 64512
      %v666 = vsel %vm665, %v495, 0
      %668 = vmatprep.subr.mxu0 0.0
      %669 = vmatpush1.msra.mxu0 %v553
      %670 = vmatprep.subr.mxu0 0.0
      %671 = vmatpush1.msra.mxu0 0.0
      %672 = vmatprep.subr.mxu0 0.0
      %673 = vmatpush1.msra.mxu0 0.0
      %674 = vmatprep.subr.mxu0 0.0
      %675 = vmatpush1.msra.mxu0 0.0
      %676 = vmatprep.subr.mxu0 0.0
      %677 = vmatpush1.msra.mxu0 0.0
      %678 = vmatprep.subr.mxu0 0.0
      %679 = vmatpush1.msra.mxu0 0.0
      %680 = vmatprep.subr.mxu0 0.0
      %681 = vmatpush1.msra.mxu0 0.0
      %682 = vmatprep.subr.mxu0 0.0
      %683 = vmatpush1.msra.mxu0 0.0
      %684 = vmatprep.subr.mxu0 0.0
      %685 = vmatpush1.msra.mxu0 0.0
      %686 = vmatprep.subr.mxu0 0.0
      %687 = vmatpush1.msra.mxu0 0.0
      %688 = vmatprep.subr.mxu0 0.0
      %689 = vmatpush1.msra.mxu0 0.0
      %690 = vmatprep.subr.mxu0 0.0
      %691 = vmatpush1.msra.mxu0 0.0
      %692 = vmatprep.subr.mxu0 0.0
      %693 = vmatpush1.msra.mxu0 0.0
      %694 = vmatprep.subr.mxu0 0.0
      %695 = vmatpush1.msra.mxu0 0.0
      %696 = vmatprep.subr.mxu0 0.0
      %697 = vmatpush1.msra.mxu0 0.0
      %698 = vmatprep.subr.mxu0 0.0
      %699 = vmatpush1.msra.mxu0 0.0
      %700 = vmatprep.subr.mxu0 0.0
      %701 = vmatpush1.msra.mxu0 0.0
      %702 = vmatprep.subr.mxu0 0.0
      %703 = vmatpush1.msra.mxu0 0.0
      %704 = vmatprep.subr.mxu0 0.0
      %705 = vmatpush1.msra.mxu0 0.0
      %706 = vmatprep.subr.mxu0 0.0
      %707 = vmatpush1.msra.mxu0 0.0
      %708 = vmatprep.subr.mxu0 0.0
      %709 = vmatpush1.msra.mxu0 0.0
      %710 = vmatprep.subr.mxu0 0.0
      %711 = vmatpush1.msra.mxu0 0.0
      %712 = vmatprep.subr.mxu0 0.0
      %713 = vmatpush1.msra.mxu0 0.0
      %714 = vmatprep.subr.mxu0 0.0
      %715 = vmatpush1.msra.mxu0 0.0
      %716 = vmatprep.subr.mxu0 0.0
      %717 = vmatpush1.msra.mxu0 0.0
      %718 = vmatprep.subr.mxu0 0.0
      %719 = vmatpush1.msra.mxu0 0.0
      %720 = vmatprep.subr.mxu0 0.0
      %721 = vmatpush1.msra.mxu0 0.0
      %722 = vmatprep.subr.mxu0 0.0
      %723 = vmatpush1.msra.mxu0 0.0
      %724 = vmatprep.subr.mxu0 0.0
      %725 = vmatpush1.msra.mxu0 0.0
      %726 = vmatprep.subr.mxu0 0.0
      %727 = vmatpush1.msra.mxu0 0.0
      %728 = vmatprep.subr.mxu0 0.0
      %729 = vmatpush1.msra.mxu0 0.0
      %730 = vmatprep.subr.mxu0 0.0
      %731 = vmatpush1.msra.mxu0 0.0
      %732 = vmatprep.mubr.f32.mxu0 0.0
      %733 = vmatmul.mubr.f32.gmra.mrb[0].mxu0 %v666
      %v734 = vpop.f32.mrb[0].mxu0
      %v735 = vadd.f32 %v523, %v734
      %v736 = vpop.f32.mrb[0].mxu0
      %737 = vdwg.mxu0
      %v738 = vsel %vm665, %v498, 0
      %740 = vmatprep.subr.mxu0 0.0
      %741 = vmatpush1.msra.mxu0 %v585
      %742 = vmatprep.subr.mxu0 0.0
      %743 = vmatpush1.msra.mxu0 0.0
      %744 = vmatprep.subr.mxu0 0.0
      %745 = vmatpush1.msra.mxu0 0.0
      %746 = vmatprep.subr.mxu0 0.0
      %747 = vmatpush1.msra.mxu0 0.0
      %748 = vmatprep.subr.mxu0 0.0
      %749 = vmatpush1.msra.mxu0 0.0
      %750 = vmatprep.subr.mxu0 0.0
      %751 = vmatpush1.msra.mxu0 0.0
      %752 = vmatprep.subr.mxu0 0.0
      %753 = vmatpush1.msra.mxu0 0.0
      %754 = vmatprep.subr.mxu0 0.0
      %755 = vmatpush1.msra.mxu0 0.0
      %756 = vmatprep.subr.mxu0 0.0
      %757 = vmatpush1.msra.mxu0 0.0
      %758 = vmatprep.subr.mxu0 0.0
      %759 = vmatpush1.msra.mxu0 0.0
      %760 = vmatprep.subr.mxu0 0.0
      %761 = vmatpush1.msra.mxu0 0.0
      %762 = vmatprep.subr.mxu0 0.0
      %763 = vmatpush1.msra.mxu0 0.0
      %764 = vmatprep.subr.mxu0 0.0
      %765 = vmatpush1.msra.mxu0 0.0
      %766 = vmatprep.subr.mxu0 0.0
      %767 = vmatpush1.msra.mxu0 0.0
      %768 = vmatprep.subr.mxu0 0.0
      %769 = vmatpush1.msra.mxu0 0.0
      %770 = vmatprep.subr.mxu0 0.0
      %771 = vmatpush1.msra.mxu0 0.0
      %772 = vmatprep.subr.mxu0 0.0
      %773 = vmatpush1.msra.mxu0 0.0
      %774 = vmatprep.subr.mxu0 0.0
      %775 = vmatpush1.msra.mxu0 0.0
      %776 = vmatprep.subr.mxu0 0.0
      %777 = vmatpush1.msra.mxu0 0.0
      %778 = vmatprep.subr.mxu0 0.0
      %779 = vmatpush1.msra.mxu0 0.0
      %780 = vmatprep.subr.mxu0 0.0
      %781 = vmatpush1.msra.mxu0 0.0
      %782 = vmatprep.subr.mxu0 0.0
      %783 = vmatpush1.msra.mxu0 0.0
      %784 = vmatprep.subr.mxu0 0.0
      %785 = vmatpush1.msra.mxu0 0.0
      %786 = vmatprep.subr.mxu0 0.0
      %787 = vmatpush1.msra.mxu0 0.0
      %788 = vmatprep.subr.mxu0 0.0
      %789 = vmatpush1.msra.mxu0 0.0
      %790 = vmatprep.subr.mxu0 0.0
      %791 = vmatpush1.msra.mxu0 0.0
      %792 = vmatprep.subr.mxu0 0.0
      %793 = vmatpush1.msra.mxu0 0.0
      %794 = vmatprep.subr.mxu0 0.0
      %795 = vmatpush1.msra.mxu0 0.0
      %796 = vmatprep.subr.mxu0 0.0
      %797 = vmatpush1.msra.mxu0 0.0
      %798 = vmatprep.subr.mxu0 0.0
      %799 = vmatpush1.msra.mxu0 0.0
      %800 = vmatprep.subr.mxu0 0.0
      %801 = vmatpush1.msra.mxu0 0.0
      %802 = vmatprep.subr.mxu0 0.0
      %803 = vmatpush1.msra.mxu0 0.0
      %804 = vmatprep.mubr.f32.mxu0 0.0
      %805 = vmatmul.mubr.f32.gmra.mrb[0].mxu0 %v738
      %v806 = vpop.f32.mrb[0].mxu0
      %v807 = vadd.f32 %v523, %v806
      %v808 = vpop.f32.mrb[0].mxu0
      %809 = vdwg.mxu0
      %v810 = vsel %vm665, %v500, 0
      %812 = vmatprep.subr.mxu0 0.0
      %813 = vmatpush1.msra.mxu0 %v617
      %814 = vmatprep.subr.mxu0 0.0
      %815 = vmatpush1.msra.mxu0 0.0
      %816 = vmatprep.subr.mxu0 0.0
      %817 = vmatpush1.msra.mxu0 0.0
      %818 = vmatprep.subr.mxu0 0.0
      %819 = vmatpush1.msra.mxu0 0.0
      %820 = vmatprep.subr.mxu0 0.0
      %821 = vmatpush1.msra.mxu0 0.0
      %822 = vmatprep.subr.mxu0 0.0
      %823 = vmatpush1.msra.mxu0 0.0
      %824 = vmatprep.subr.mxu0 0.0
      %825 = vmatpush1.msra.mxu0 0.0
      %826 = vmatprep.subr.mxu0 0.0
      %827 = vmatpush1.msra.mxu0 0.0
      %828 = vmatprep.subr.mxu0 0.0
      %829 = vmatpush1.msra.mxu0 0.0
      %830 = vmatprep.subr.mxu0 0.0
      %831 = vmatpush1.msra.mxu0 0.0
      %832 = vmatprep.subr.mxu0 0.0
      %833 = vmatpush1.msra.mxu0 0.0
      %834 = vmatprep.subr.mxu0 0.0
      %835 = vmatpush1.msra.mxu0 0.0
      %836 = vmatprep.subr.mxu0 0.0
      %837 = vmatpush1.msra.mxu0 0.0
      %838 = vmatprep.subr.mxu0 0.0
      %839 = vmatpush1.msra.mxu0 0.0
      %840 = vmatprep.subr.mxu0 0.0
      %841 = vmatpush1.msra.mxu0 0.0
      %842 = vmatprep.subr.mxu0 0.0
      %843 = vmatpush1.msra.mxu0 0.0
      %844 = vmatprep.subr.mxu0 0.0
      %845 = vmatpush1.msra.mxu0 0.0
      %846 = vmatprep.subr.mxu0 0.0
      %847 = vmatpush1.msra.mxu0 0.0
      %848 = vmatprep.subr.mxu0 0.0
      %849 = vmatpush1.msra.mxu0 0.0
      %850 = vmatprep.subr.mxu0 0.0
      %851 = vmatpush1.msra.mxu0 0.0
      %852 = vmatprep.subr.mxu0 0.0
      %853 = vmatpush1.msra.mxu0 0.0
      %854 = vmatprep.subr.mxu0 0.0
      %855 = vmatpush1.msra.mxu0 0.0
      %856 = vmatprep.subr.mxu0 0.0
      %857 = vmatpush1.msra.mxu0 0.0
      %858 = vmatprep.subr.mxu0 0.0
      %859 = vmatpush1.msra.mxu0 0.0
      %860 = vmatprep.subr.mxu0 0.0
      %861 = vmatpush1.msra.mxu0 0.0
      %862 = vmatprep.subr.mxu0 0.0
      %863 = vmatpush1.msra.mxu0 0.0
      %864 = vmatprep.subr.mxu0 0.0
      %865 = vmatpush1.msra.mxu0 0.0
      %866 = vmatprep.subr.mxu0 0.0
      %867 = vmatpush1.msra.mxu0 0.0
      %868 = vmatprep.subr.mxu0 0.0
      %869 = vmatpush1.msra.mxu0 0.0
      %870 = vmatprep.subr.mxu0 0.0
      %871 = vmatpush1.msra.mxu0 0.0
      %872 = vmatprep.subr.mxu0 0.0
      %873 = vmatpush1.msra.mxu0 0.0
      %874 = vmatprep.subr.mxu0 0.0
      %875 = vmatpush1.msra.mxu0 0.0
      %876 = vmatprep.mubr.f32.mxu0 0.0
      %877 = vmatmul.mubr.f32.gmra.mrb[0].mxu0 %v810
      %v878 = vpop.f32.mrb[0].mxu0
      %v879 = vadd.f32 %v523, %v878
      %v880 = vpop.f32.mrb[0].mxu0
      %881 = vdwg.mxu0
      %v882 = vsel %vm665, %v502, 0
      %884 = vmatprep.subr.mxu0 0.0
      %885 = vmatpush1.msra.mxu0 %v649
      %886 = vmatprep.subr.mxu0 0.0
      %887 = vmatpush1.msra.mxu0 0.0
      %888 = vmatprep.subr.mxu0 0.0
      %889 = vmatpush1.msra.mxu0 0.0
      %890 = vmatprep.subr.mxu0 0.0
      %891 = vmatpush1.msra.mxu0 0.0
      %892 = vmatprep.subr.mxu0 0.0
      %893 = vmatpush1.msra.mxu0 0.0
      %894 = vmatprep.subr.mxu0 0.0
      %895 = vmatpush1.msra.mxu0 0.0
      %896 = vmatprep.subr.mxu0 0.0
      %897 = vmatpush1.msra.mxu0 0.0
      %898 = vmatprep.subr.mxu0 0.0
      %899 = vmatpush1.msra.mxu0 0.0
      %900 = vmatprep.subr.mxu0 0.0
      %901 = vmatpush1.msra.mxu0 0.0
      %902 = vmatprep.subr.mxu0 0.0
      %903 = vmatpush1.msra.mxu0 0.0
      %904 = vmatprep.subr.mxu0 0.0
      %905 = vmatpush1.msra.mxu0 0.0
      %906 = vmatprep.subr.mxu0 0.0
      %907 = vmatpush1.msra.mxu0 0.0
      %908 = vmatprep.subr.mxu0 0.0
      %909 = vmatpush1.msra.mxu0 0.0
      %910 = vmatprep.subr.mxu0 0.0
      %911 = vmatpush1.msra.mxu0 0.0
      %912 = vmatprep.subr.mxu0 0.0
      %913 = vmatpush1.msra.mxu0 0.0
      %914 = vmatprep.subr.mxu0 0.0
      %915 = vmatpush1.msra.mxu0 0.0
      %916 = vmatprep.subr.mxu0 0.0
      %917 = vmatpush1.msra.mxu0 0.0
      %918 = vmatprep.subr.mxu0 0.0
      %919 = vmatpush1.msra.mxu0 0.0
      %920 = vmatprep.subr.mxu0 0.0
      %921 = vmatpush1.msra.mxu0 0.0
      %922 = vmatprep.subr.mxu0 0.0
      %923 = vmatpush1.msra.mxu0 0.0
      %924 = vmatprep.subr.mxu0 0.0
      %925 = vmatpush1.msra.mxu0 0.0
      %926 = vmatprep.subr.mxu0 0.0
      %927 = vmatpush1.msra.mxu0 0.0
      %928 = vmatprep.subr.mxu0 0.0
      %929 = vmatpush1.msra.mxu0 0.0
      %930 = vmatprep.subr.mxu0 0.0
      %931 = vmatpush1.msra.mxu0 0.0
      %932 = vmatprep.subr.mxu0 0.0
      %933 = vmatpush1.msra.mxu0 0.0
      %934 = vmatprep.subr.mxu0 0.0
      %935 = vmatpush1.msra.mxu0 0.0
      %936 = vmatprep.subr.mxu0 0.0
      %937 = vmatpush1.msra.mxu0 0.0
      %938 = vmatprep.subr.mxu0 0.0
      %939 = vmatpush1.msra.mxu0 0.0
      %940 = vmatprep.subr.mxu0 0.0
      %941 = vmatpush1.msra.mxu0 0.0
      %942 = vmatprep.subr.mxu0 0.0
      %943 = vmatpush1.msra.mxu0 0.0
      %944 = vmatprep.subr.mxu0 0.0
      %945 = vmatpush1.msra.mxu0 0.0
      %946 = vmatprep.subr.mxu0 0.0
      %947 = vmatpush1.msra.mxu0 0.0
      %948 = vmatprep.mubr.f32.mxu0 0.0
      %949 = vmatmul.mubr.f32.gmra.mrb[0].mxu0 %v882
      %v950 = vpop.f32.mrb[0].mxu0
      %v951 = vadd.f32 %v523, %v950
      %v952 = vpop.f32.mrb[0].mxu0
      %953 = vdwg.mxu0
      %v955 = vsel %vm665, %v510, 0
      %957 = vmatprep.subr.mxu0 0.0
      %958 = vmatpush1.xpose.msra.mxu0 %v955
      %959 = vmatprep.subr.mxu0 0.0
      %960 = vmatpush1.xpose.msra.mxu0 0.0
      %961 = vmatprep.subr.mxu0 0.0
      %962 = vmatpush1.xpose.msra.mxu0 0.0
      %963 = vmatprep.subr.mxu0 0.0
      %964 = vmatpush1.xpose.msra.mxu0 0.0
      %965 = vmatprep.subr.mxu0 0.0
      %966 = vmatpush1.xpose.msra.mxu0 0.0
      %967 = vmatprep.subr.mxu0 0.0
      %968 = vmatpush1.xpose.msra.mxu0 0.0
      %969 = vmatprep.subr.mxu0 0.0
      %970 = vmatpush1.xpose.msra.mxu0 0.0
      %971 = vmatprep.subr.mxu0 0.0
      %972 = vmatpush1.xpose.msra.mxu0 0.0
      %973 = vmatprep.subr.mxu0 0.0
      %974 = vmatpush1.xpose.msra.mxu0 0.0
      %975 = vmatprep.subr.mxu0 0.0
      %976 = vmatpush1.xpose.msra.mxu0 0.0
      %977 = vmatprep.subr.mxu0 0.0
      %978 = vmatpush1.xpose.msra.mxu0 0.0
      %979 = vmatprep.subr.mxu0 0.0
      %980 = vmatpush1.xpose.msra.mxu0 0.0
      %981 = vmatprep.subr.mxu0 0.0
      %982 = vmatpush1.xpose.msra.mxu0 0.0
      %983 = vmatprep.subr.mxu0 0.0
      %984 = vmatpush1.xpose.msra.mxu0 0.0
      %985 = vmatprep.subr.mxu0 0.0
      %986 = vmatpush1.xpose.msra.mxu0 0.0
      %987 = vmatprep.subr.mxu0 0.0
      %988 = vmatpush1.xpose.msra.mxu0 0.0
      %989 = vmatprep.subr.mxu0 0.0
      %990 = vmatpush1.xpose.msra.mxu0 0.0
      %991 = vmatprep.subr.mxu0 0.0
      %992 = vmatpush1.xpose.msra.mxu0 0.0
      %993 = vmatprep.subr.mxu0 0.0
      %994 = vmatpush1.xpose.msra.mxu0 0.0
      %995 = vmatprep.subr.mxu0 0.0
      %996 = vmatpush1.xpose.msra.mxu0 0.0
      %997 = vmatprep.subr.mxu0 0.0
      %998 = vmatpush1.xpose.msra.mxu0 0.0
      %999 = vmatprep.subr.mxu0 0.0
      %1000 = vmatpush1.xpose.msra.mxu0 0.0
      %1001 = vmatprep.subr.mxu0 0.0
      %1002 = vmatpush1.xpose.msra.mxu0 0.0
      %1003 = vmatprep.subr.mxu0 0.0
      %1004 = vmatpush1.xpose.msra.mxu0 0.0
      %1005 = vmatprep.subr.mxu0 0.0
      %1006 = vmatpush1.xpose.msra.mxu0 0.0
      %1007 = vmatprep.subr.mxu0 0.0
      %1008 = vmatpush1.xpose.msra.mxu0 0.0
      %1009 = vmatprep.subr.mxu0 0.0
      %1010 = vmatpush1.xpose.msra.mxu0 0.0
      %1011 = vmatprep.subr.mxu0 0.0
      %1012 = vmatpush1.xpose.msra.mxu0 0.0
      %1013 = vmatprep.subr.mxu0 0.0
      %1014 = vmatpush1.xpose.msra.mxu0 0.0
      %1015 = vmatprep.subr.mxu0 0.0
      %1016 = vmatpush1.xpose.msra.mxu0 0.0
      %1017 = vmatprep.subr.mxu0 0.0
      %1018 = vmatpush1.xpose.msra.mxu0 0.0
      %1019 = vmatprep.subr.mxu0 0.0
      %1020 = vmatpush1.xpose.msra.mxu0 0.0
      %1021 = vmatprep.mubr.f32.mxu0 0.0
      %1022 = vmatmul.mubr.f32.gmra.mrb[0].mxu0 %v666
      %v1023 = vpop.f32.mrb[0].mxu0
      %v1024 = vadd.f32 1.0, %v1023
      %v1025 = vpop.f32.mrb[0].mxu0
      %1026 = vdwg.mxu0
      %v1028 = vsel %vm665, %v511, 0
      %1030 = vmatprep.subr.mxu0 0.0
      %1031 = vmatpush1.xpose.msra.mxu0 %v1028
      %1032 = vmatprep.subr.mxu0 0.0
      %1033 = vmatpush1.xpose.msra.mxu0 0.0
      %1034 = vmatprep.subr.mxu0 0.0
      %1035 = vmatpush1.xpose.msra.mxu0 0.0
      %1036 = vmatprep.subr.mxu0 0.0
      %1037 = vmatpush1.xpose.msra.mxu0 0.0
      %1038 = vmatprep.subr.mxu0 0.0
      %1039 = vmatpush1.xpose.msra.mxu0 0.0
      %1040 = vmatprep.subr.mxu0 0.0
      %1041 = vmatpush1.xpose.msra.mxu0 0.0
      %1042 = vmatprep.subr.mxu0 0.0
      %1043 = vmatpush1.xpose.msra.mxu0 0.0
      %1044 = vmatprep.subr.mxu0 0.0
      %1045 = vmatpush1.xpose.msra.mxu0 0.0
      %1046 = vmatprep.subr.mxu0 0.0
      %1047 = vmatpush1.xpose.msra.mxu0 0.0
      %1048 = vmatprep.subr.mxu0 0.0
      %1049 = vmatpush1.xpose.msra.mxu0 0.0
      %1050 = vmatprep.subr.mxu0 0.0
      %1051 = vmatpush1.xpose.msra.mxu0 0.0
      %1052 = vmatprep.subr.mxu0 0.0
      %1053 = vmatpush1.xpose.msra.mxu0 0.0
      %1054 = vmatprep.subr.mxu0 0.0
      %1055 = vmatpush1.xpose.msra.mxu0 0.0
      %1056 = vmatprep.subr.mxu0 0.0
      %1057 = vmatpush1.xpose.msra.mxu0 0.0
      %1058 = vmatprep.subr.mxu0 0.0
      %1059 = vmatpush1.xpose.msra.mxu0 0.0
      %1060 = vmatprep.subr.mxu0 0.0
      %1061 = vmatpush1.xpose.msra.mxu0 0.0
      %1062 = vmatprep.subr.mxu0 0.0
      %1063 = vmatpush1.xpose.msra.mxu0 0.0
      %1064 = vmatprep.subr.mxu0 0.0
      %1065 = vmatpush1.xpose.msra.mxu0 0.0
      %1066 = vmatprep.subr.mxu0 0.0
      %1067 = vmatpush1.xpose.msra.mxu0 0.0
      %1068 = vmatprep.subr.mxu0 0.0
      %1069 = vmatpush1.xpose.msra.mxu0 0.0
      %1070 = vmatprep.subr.mxu0 0.0
      %1071 = vmatpush1.xpose.msra.mxu0 0.0
      %1072 = vmatprep.subr.mxu0 0.0
      %1073 = vmatpush1.xpose.msra.mxu0 0.0
      %1074 = vmatprep.subr.mxu0 0.0
      %1075 = vmatpush1.xpose.msra.mxu0 0.0
      %1076 = vmatprep.subr.mxu0 0.0
      %1077 = vmatpush1.xpose.msra.mxu0 0.0
      %1078 = vmatprep.subr.mxu0 0.0
      %1079 = vmatpush1.xpose.msra.mxu0 0.0
      %1080 = vmatprep.subr.mxu0 0.0
      %1081 = vmatpush1.xpose.msra.mxu0 0.0
      %1082 = vmatprep.subr.mxu0 0.0
      %1083 = vmatpush1.xpose.msra.mxu0 0.0
      %1084 = vmatprep.subr.mxu0 0.0
      %1085 = vmatpush1.xpose.msra.mxu0 0.0
      %1086 = vmatprep.subr.mxu0 0.0
      %1087 = vmatpush1.xpose.msra.mxu0 0.0
      %1088 = vmatprep.subr.mxu0 0.0
      %1089 = vmatpush1.xpose.msra.mxu0 0.0
      %1090 = vmatprep.subr.mxu0 0.0
      %1091 = vmatpush1.xpose.msra.mxu0 0.0
      %1092 = vmatprep.subr.mxu0 0.0
      %1093 = vmatpush1.xpose.msra.mxu0 0.0
      %1094 = vmatprep.mubr.f32.mxu0 0.0
      %1095 = vmatmul.mubr.f32.gmra.mrb[0].mxu0 %v738
      %v1096 = vpop.f32.mrb[0].mxu0
      %v1097 = vadd.f32 1.0, %v1096
      %v1098 = vpop.f32.mrb[0].mxu0
      %1099 = vdwg.mxu0
      %v1101 = vsel %vm665, %v512, 0
      %1103 = vmatprep.subr.mxu0 0.0
      %1104 = vmatpush1.xpose.msra.mxu0 %v1101
      %1105 = vmatprep.subr.mxu0 0.0
      %1106 = vmatpush1.xpose.msra.mxu0 0.0
      %1107 = vmatprep.subr.mxu0 0.0
      %1108 = vmatpush1.xpose.msra.mxu0 0.0
      %1109 = vmatprep.subr.mxu0 0.0
      %1110 = vmatpush1.xpose.msra.mxu0 0.0
      %1111 = vmatprep.subr.mxu0 0.0
      %1112 = vmatpush1.xpose.msra.mxu0 0.0
      %1113 = vmatprep.subr.mxu0 0.0
      %1114 = vmatpush1.xpose.msra.mxu0 0.0
      %1115 = vmatprep.subr.mxu0 0.0
      %1116 = vmatpush1.xpose.msra.mxu0 0.0
      %1117 = vmatprep.subr.mxu0 0.0
      %1118 = vmatpush1.xpose.msra.mxu0 0.0
      %1119 = vmatprep.subr.mxu0 0.0
      %1120 = vmatpush1.xpose.msra.mxu0 0.0
      %1121 = vmatprep.subr.mxu0 0.0
      %1122 = vmatpush1.xpose.msra.mxu0 0.0
      %1123 = vmatprep.subr.mxu0 0.0
      %1124 = vmatpush1.xpose.msra.mxu0 0.0
      %1125 = vmatprep.subr.mxu0 0.0
      %1126 = vmatpush1.xpose.msra.mxu0 0.0
      %1127 = vmatprep.subr.mxu0 0.0
      %1128 = vmatpush1.xpose.msra.mxu0 0.0
      %1129 = vmatprep.subr.mxu0 0.0
      %1130 = vmatpush1.xpose.msra.mxu0 0.0
      %1131 = vmatprep.subr.mxu0 0.0
      %1132 = vmatpush1.xpose.msra.mxu0 0.0
      %1133 = vmatprep.subr.mxu0 0.0
      %1134 = vmatpush1.xpose.msra.mxu0 0.0
      %1135 = vmatprep.subr.mxu0 0.0
      %1136 = vmatpush1.xpose.msra.mxu0 0.0
      %1137 = vmatprep.subr.mxu0 0.0
      %1138 = vmatpush1.xpose.msra.mxu0 0.0
      %1139 = vmatprep.subr.mxu0 0.0
      %1140 = vmatpush1.xpose.msra.mxu0 0.0
      %1141 = vmatprep.subr.mxu0 0.0
      %1142 = vmatpush1.xpose.msra.mxu0 0.0
      %1143 = vmatprep.subr.mxu0 0.0
      %1144 = vmatpush1.xpose.msra.mxu0 0.0
      %1145 = vmatprep.subr.mxu0 0.0
      %1146 = vmatpush1.xpose.msra.mxu0 0.0
      %1147 = vmatprep.subr.mxu0 0.0
      %1148 = vmatpush1.xpose.msra.mxu0 0.0
      %1149 = vmatprep.subr.mxu0 0.0
      %1150 = vmatpush1.xpose.msra.mxu0 0.0
      %1151 = vmatprep.subr.mxu0 0.0
      %1152 = vmatpush1.xpose.msra.mxu0 0.0
      %1153 = vmatprep.subr.mxu0 0.0
      %1154 = vmatpush1.xpose.msra.mxu0 0.0
      %1155 = vmatprep.subr.mxu0 0.0
      %1156 = vmatpush1.xpose.msra.mxu0 0.0
      %1157 = vmatprep.subr.mxu0 0.0
      %1158 = vmatpush1.xpose.msra.mxu0 0.0
      %1159 = vmatprep.subr.mxu0 0.0
      %1160 = vmatpush1.xpose.msra.mxu0 0.0
      %1161 = vmatprep.subr.mxu0 0.0
      %1162 = vmatpush1.xpose.msra.mxu0 0.0
      %1163 = vmatprep.subr.mxu0 0.0
      %1164 = vmatpush1.xpose.msra.mxu0 0.0
      %1165 = vmatprep.subr.mxu0 0.0
      %1166 = vmatpush1.xpose.msra.mxu0 0.0
      %1167 = vmatprep.mubr.f32.mxu0 0.0
      %1168 = vmatmul.mubr.f32.gmra.mrb[0].mxu0 %v810
      %v1169 = vpop.f32.mrb[0].mxu0
      %v1170 = vadd.f32 1.0, %v1169
      %v1171 = vpop.f32.mrb[0].mxu0
      %1172 = vdwg.mxu0
      %v1174 = vsel %vm665, %v513, 0
      %1176 = vmatprep.subr.mxu0 0.0
      %1177 = vmatpush1.xpose.msra.mxu0 %v1174
      %1178 = vmatprep.subr.mxu0 0.0
      %1179 = vmatpush1.xpose.msra.mxu0 0.0
      %1180 = vmatprep.subr.mxu0 0.0
      %1181 = vmatpush1.xpose.msra.mxu0 0.0
      %1182 = vmatprep.subr.mxu0 0.0
      %1183 = vmatpush1.xpose.msra.mxu0 0.0
      %1184 = vmatprep.subr.mxu0 0.0
      %1185 = vmatpush1.xpose.msra.mxu0 0.0
      %1186 = vmatprep.subr.mxu0 0.0
      %1187 = vmatpush1.xpose.msra.mxu0 0.0
      %1188 = vmatprep.subr.mxu0 0.0
      %1189 = vmatpush1.xpose.msra.mxu0 0.0
      %1190 = vmatprep.subr.mxu0 0.0
      %1191 = vmatpush1.xpose.msra.mxu0 0.0
      %1192 = vmatprep.subr.mxu0 0.0
      %1193 = vmatpush1.xpose.msra.mxu0 0.0
      %1194 = vmatprep.subr.mxu0 0.0
      %1195 = vmatpush1.xpose.msra.mxu0 0.0
      %1196 = vmatprep.subr.mxu0 0.0
      %1197 = vmatpush1.xpose.msra.mxu0 0.0
      %1198 = vmatprep.subr.mxu0 0.0
      %1199 = vmatpush1.xpose.msra.mxu0 0.0
      %1200 = vmatprep.subr.mxu0 0.0
      %1201 = vmatpush1.xpose.msra.mxu0 0.0
      %1202 = vmatprep.subr.mxu0 0.0
      %1203 = vmatpush1.xpose.msra.mxu0 0.0
      %1204 = vmatprep.subr.mxu0 0.0
      %1205 = vmatpush1.xpose.msra.mxu0 0.0
      %1206 = vmatprep.subr.mxu0 0.0
      %1207 = vmatpush1.xpose.msra.mxu0 0.0
      %1208 = vmatprep.subr.mxu0 0.0
      %1209 = vmatpush1.xpose.msra.mxu0 0.0
      %1210 = vmatprep.subr.mxu0 0.0
      %1211 = vmatpush1.xpose.msra.mxu0 0.0
      %1212 = vmatprep.subr.mxu0 0.0
      %1213 = vmatpush1.xpose.msra.mxu0 0.0
      %1214 = vmatprep.subr.mxu0 0.0
      %1215 = vmatpush1.xpose.msra.mxu0 0.0
      %1216 = vmatprep.subr.mxu0 0.0
      %1217 = vmatpush1.xpose.msra.mxu0 0.0
      %1218 = vmatprep.subr.mxu0 0.0
      %1219 = vmatpush1.xpose.msra.mxu0 0.0
      %1220 = vmatprep.subr.mxu0 0.0
      %1221 = vmatpush1.xpose.msra.mxu0 0.0
      %1222 = vmatprep.subr.mxu0 0.0
      %1223 = vmatpush1.xpose.msra.mxu0 0.0
      %1224 = vmatprep.subr.mxu0 0.0
      %1225 = vmatpush1.xpose.msra.mxu0 0.0
      %1226 = vmatprep.subr.mxu0 0.0
      %1227 = vmatpush1.xpose.msra.mxu0 0.0
      %1228 = vmatprep.subr.mxu0 0.0
      %1229 = vmatpush1.xpose.msra.mxu0 0.0
      %1230 = vmatprep.subr.mxu0 0.0
      %1231 = vmatpush1.xpose.msra.mxu0 0.0
      %1232 = vmatprep.subr.mxu0 0.0
      %1233 = vmatpush1.xpose.msra.mxu0 0.0
      %1234 = vmatprep.subr.mxu0 0.0
      %1235 = vmatpush1.xpose.msra.mxu0 0.0
      %1236 = vmatprep.subr.mxu0 0.0
      %1237 = vmatpush1.xpose.msra.mxu0 0.0
      %1238 = vmatprep.subr.mxu0 0.0
      %1239 = vmatpush1.xpose.msra.mxu0 0.0
      %1240 = vmatprep.mubr.f32.mxu0 0.0
      %1241 = vmatmul.mubr.f32.gmra.mrb[0].mxu0 %v882
      %v1242 = vpop.f32.mrb[0].mxu0
      %v1243 = vadd.f32 1.0, %v1242
      %v1244 = vpop.f32.mrb[0].mxu0
      %1245 = vdwg.mxu0
      %v1246 = vsel %vm665, %v735, -inf
      %1247 = vmax.xlane.f32.xlu0 %v1246
      %v1248 = vpop.xlane.xlu0 %1247
      %v1249 = vsel %vm665, %v807, -inf
      %1250 = vmax.xlane.f32.xlu0 %v1249
      %v1251 = vpop.xlane.xlu0 %1250
      %v1252 = vsel %vm665, %v879, -inf
      %1253 = vmax.xlane.f32.xlu0 %v1252
      %v1254 = vpop.xlane.xlu0 %1253
      %v1255 = vsel %vm665, %v951, -inf
      %1256 = vmax.xlane.f32.xlu0 %v1255
      %v1257 = vpop.xlane.xlu0 %1256
      %v1258 = vsel %vm665, %v1024, -inf
      %1259 = vmax.xlane.f32.xlu0 %v1258
      %v1260 = vpop.xlane.xlu0 %1259
      %v1261 = vsel %vm665, %v1097, -inf
      %1262 = vmax.xlane.f32.xlu0 %v1261
      %v1263 = vpop.xlane.xlu0 %1262
      %v1264 = vsel %vm665, %v1170, -inf
      %1265 = vmax.xlane.f32.xlu0 %v1264
      %v1266 = vpop.xlane.xlu0 %1265
      %v1267 = vsel %vm665, %v1243, -inf
      %1268 = vmax.xlane.f32.xlu0 %v1267
      %v1269 = vpop.xlane.xlu0 %1268
      %v1270 = vmax.f32 %v1248, %v1260
      %v1271 = vmax.f32 %v1251, %v1263
      %v1272 = vmax.f32 %v1254, %v1266
      %v1273 = vmax.f32 %v1257, %v1269
      %v1274 = vsub.f32 %v735, %v1270
      %v1275 = vsub.f32 %v807, %v1271
      %v1276 = vsub.f32 %v879, %v1272
      %v1277 = vsub.f32 %v951, %v1273
      %v1278 = vmul.f32 %v1274, 1.442695
      %v1279 = vpow.pop %v1278
      %v1280 = vmul.f32 %v1275, 1.442695
      %v1281 = vpow.pop %v1280
      %v1282 = vmul.f32 %v1276, 1.442695
      %v1283 = vpow.pop %v1282
      %v1284 = vmul.f32 %v1277, 1.442695
      %v1285 = vpow.pop %v1284
      %v1286 = vsub.f32 %v1024, %v1270
      %v1287 = vsub.f32 %v1097, %v1271
      %v1288 = vsub.f32 %v1170, %v1272
      %v1289 = vsub.f32 %v1243, %v1273
      %v1290 = vmul.f32 %v1286, 1.442695
      %v1291 = vpow.pop %v1290
      %v1292 = vmul.f32 %v1287, 1.442695
      %v1293 = vpow.pop %v1292
      %v1294 = vmul.f32 %v1288, 1.442695
      %v1295 = vpow.pop %v1294
      %v1296 = vmul.f32 %v1289, 1.442695
      %v1297 = vpow.pop %v1296
      %v1298 = vsel %vm665, %v1279, 0.0
      %1299 = vadd.xlane.f32.xlu0 %v1298
      %v1300 = vpop.xlane.xlu0 %1299
      %v1301 = vsel %vm665, %v1281, 0.0
      %1302 = vadd.xlane.f32.xlu0 %v1301
      %v1303 = vpop.xlane.xlu0 %1302
      %v1304 = vsel %vm665, %v1283, 0.0
      %1305 = vadd.xlane.f32.xlu0 %v1304
      %v1306 = vpop.xlane.xlu0 %1305
      %v1307 = vsel %vm665, %v1285, 0.0
      %1308 = vadd.xlane.f32.xlu0 %v1307
      %v1309 = vpop.xlane.xlu0 %1308
      %v1310 = vsel %vm665, %v1291, 0.0
      %1311 = vadd.xlane.f32.xlu0 %v1310
      %v1312 = vpop.xlane.xlu0 %1311
      %v1313 = vsel %vm665, %v1293, 0.0
      %1314 = vadd.xlane.f32.xlu0 %v1313
      %v1315 = vpop.xlane.xlu0 %1314
      %v1316 = vsel %vm665, %v1295, 0.0
      %1317 = vadd.xlane.f32.xlu0 %v1316
      %v1318 = vpop.xlane.xlu0 %1317
      %v1319 = vsel %vm665, %v1297, 0.0
      %1320 = vadd.xlane.f32.xlu0 %v1319
      %v1321 = vpop.xlane.xlu0 %1320
      %v1322 = vadd.f32 %v1300, %v1312
      %v1323 = vadd.f32 %v1303, %v1315
      %v1324 = vadd.f32 %v1306, %v1318
      %v1325 = vadd.f32 %v1309, %v1321
      %v1326 = vrcp.pop %v1322
      %v1327 = vrcp.pop %v1323
      %v1328 = vrcp.pop %v1324
      %v1329 = vrcp.pop %v1325
      %v1331 = vsel %vm665, %v1291, 0
      %1333 = vmatprep.subr.mxu0 0.0
      %1334 = vmatpush1.msra.mxu0 %v514
      %1335 = vmatprep.subr.mxu0 0.0
      %1336 = vmatpush1.msra.mxu0 0.0
      %1337 = vmatprep.subr.mxu0 0.0
      %1338 = vmatpush1.msra.mxu0 0.0
      %1339 = vmatprep.subr.mxu0 0.0
      %1340 = vmatpush1.msra.mxu0 0.0
      %1341 = vmatprep.subr.mxu0 0.0
      %1342 = vmatpush1.msra.mxu0 0.0
      %1343 = vmatprep.subr.mxu0 0.0
      %1344 = vmatpush1.msra.mxu0 0.0
      %1345 = vmatprep.subr.mxu0 0.0
      %1346 = vmatpush1.msra.mxu0 0.0
      %1347 = vmatprep.subr.mxu0 0.0
      %1348 = vmatpush1.msra.mxu0 0.0
      %1349 = vmatprep.subr.mxu0 0.0
      %1350 = vmatpush1.msra.mxu0 0.0
      %1351 = vmatprep.subr.mxu0 0.0
      %1352 = vmatpush1.msra.mxu0 0.0
      %1353 = vmatprep.subr.mxu0 0.0
      %1354 = vmatpush1.msra.mxu0 0.0
      %1355 = vmatprep.subr.mxu0 0.0
      %1356 = vmatpush1.msra.mxu0 0.0
      %1357 = vmatprep.subr.mxu0 0.0
      %1358 = vmatpush1.msra.mxu0 0.0
      %1359 = vmatprep.subr.mxu0 0.0
      %1360 = vmatpush1.msra.mxu0 0.0
      %1361 = vmatprep.subr.mxu0 0.0
      %1362 = vmatpush1.msra.mxu0 0.0
      %1363 = vmatprep.subr.mxu0 0.0
      %1364 = vmatpush1.msra.mxu0 0.0
      %1365 = vmatprep.subr.mxu0 0.0
      %1366 = vmatpush1.msra.mxu0 0.0
      %1367 = vmatprep.subr.mxu0 0.0
      %1368 = vmatpush1.msra.mxu0 0.0
      %1369 = vmatprep.subr.mxu0 0.0
      %1370 = vmatpush1.msra.mxu0 0.0
      %1371 = vmatprep.subr.mxu0 0.0
      %1372 = vmatpush1.msra.mxu0 0.0
      %1373 = vmatprep.subr.mxu0 0.0
      %1374 = vmatpush1.msra.mxu0 0.0
      %1375 = vmatprep.subr.mxu0 0.0
      %1376 = vmatpush1.msra.mxu0 0.0
      %1377 = vmatprep.subr.mxu0 0.0
      %1378 = vmatpush1.msra.mxu0 0.0
      %1379 = vmatprep.subr.mxu0 0.0
      %1380 = vmatpush1.msra.mxu0 0.0
      %1381 = vmatprep.subr.mxu0 0.0
      %1382 = vmatpush1.msra.mxu0 0.0
      %1383 = vmatprep.subr.mxu0 0.0
      %1384 = vmatpush1.msra.mxu0 0.0
      %1385 = vmatprep.subr.mxu0 0.0
      %1386 = vmatpush1.msra.mxu0 0.0
      %1387 = vmatprep.subr.mxu0 0.0
      %1388 = vmatpush1.msra.mxu0 0.0
      %1389 = vmatprep.subr.mxu0 0.0
      %1390 = vmatpush1.msra.mxu0 0.0
      %1391 = vmatprep.subr.mxu0 0.0
      %1392 = vmatpush1.msra.mxu0 0.0
      %1393 = vmatprep.subr.mxu0 0.0
      %1394 = vmatpush1.msra.mxu0 0.0
      %1395 = vmatprep.subr.mxu0 0.0
      %1396 = vmatpush1.msra.mxu0 0.0
      %1397 = vmatprep.mubr.f32.mxu0 0.0
      %1398 = vmatmul.mubr.f32.gmra.mrb[0].mxu0 %v1331
      %v1399 = vpop.f32.mrb[0].mxu0
      %v1400 = vadd.f32 0.0, %v1399
      %v1401 = vpop.f32.mrb[0].mxu0
      %1402 = vdwg.mxu0
      %v1404 = vsel %vm665, %v1293, 0
      %1406 = vmatprep.subr.mxu0 0.0
      %1407 = vmatpush1.msra.mxu0 %v515
      %1408 = vmatprep.subr.mxu0 0.0
      %1409 = vmatpush1.msra.mxu0 0.0
      %1410 = vmatprep.subr.mxu0 0.0
      %1411 = vmatpush1.msra.mxu0 0.0
      %1412 = vmatprep.subr.mxu0 0.0
      %1413 = vmatpush1.msra.mxu0 0.0
      %1414 = vmatprep.subr.mxu0 0.0
      %1415 = vmatpush1.msra.mxu0 0.0
      %1416 = vmatprep.subr.mxu0 0.0
      %1417 = vmatpush1.msra.mxu0 0.0
      %1418 = vmatprep.subr.mxu0 0.0
      %1419 = vmatpush1.msra.mxu0 0.0
      %1420 = vmatprep.subr.mxu0 0.0
      %1421 = vmatpush1.msra.mxu0 0.0
      %1422 = vmatprep.subr.mxu0 0.0
      %1423 = vmatpush1.msra.mxu0 0.0
      %1424 = vmatprep.subr.mxu0 0.0
      %1425 = vmatpush1.msra.mxu0 0.0
      %1426 = vmatprep.subr.mxu0 0.0
      %1427 = vmatpush1.msra.mxu0 0.0
      %1428 = vmatprep.subr.mxu0 0.0
      %1429 = vmatpush1.msra.mxu0 0.0
      %1430 = vmatprep.subr.mxu0 0.0
      %1431 = vmatpush1.msra.mxu0 0.0
      %1432 = vmatprep.subr.mxu0 0.0
      %1433 = vmatpush1.msra.mxu0 0.0
      %1434 = vmatprep.subr.mxu0 0.0
      %1435 = vmatpush1.msra.mxu0 0.0
      %1436 = vmatprep.subr.mxu0 0.0
      %1437 = vmatpush1.msra.mxu0 0.0
      %1438 = vmatprep.subr.mxu0 0.0
      %1439 = vmatpush1.msra.mxu0 0.0
      %1440 = vmatprep.subr.mxu0 0.0
      %1441 = vmatpush1.msra.mxu0 0.0
      %1442 = vmatprep.subr.mxu0 0.0
      %1443 = vmatpush1.msra.mxu0 0.0
      %1444 = vmatprep.subr.mxu0 0.0
      %1445 = vmatpush1.msra.mxu0 0.0
      %1446 = vmatprep.subr.mxu0 0.0
      %1447 = vmatpush1.msra.mxu0 0.0
      %1448 = vmatprep.subr.mxu0 0.0
      %1449 = vmatpush1.msra.mxu0 0.0
      %1450 = vmatprep.subr.mxu0 0.0
      %1451 = vmatpush1.msra.mxu0 0.0
      %1452 = vmatprep.subr.mxu0 0.0
      %1453 = vmatpush1.msra.mxu0 0.0
      %1454 = vmatprep.subr.mxu0 0.0
      %1455 = vmatpush1.msra.mxu0 0.0
      %1456 = vmatprep.subr.mxu0 0.0
      %1457 = vmatpush1.msra.mxu0 0.0
      %1458 = vmatprep.subr.mxu0 0.0
      %1459 = vmatpush1.msra.mxu0 0.0
      %1460 = vmatprep.subr.mxu0 0.0
      %1461 = vmatpush1.msra.mxu0 0.0
      %1462 = vmatprep.subr.mxu0 0.0
      %1463 = vmatpush1.msra.mxu0 0.0
      %1464 = vmatprep.subr.mxu0 0.0
      %1465 = vmatpush1.msra.mxu0 0.0
      %1466 = vmatprep.subr.mxu0 0.0
      %1467 = vmatpush1.msra.mxu0 0.0
      %1468 = vmatprep.subr.mxu0 0.0
      %1469 = vmatpush1.msra.mxu0 0.0
      %1470 = vmatprep.mubr.f32.mxu0 0.0
      %1471 = vmatmul.mubr.f32.gmra.mrb[0].mxu0 %v1404
      %v1472 = vpop.f32.mrb[0].mxu0
      %v1473 = vadd.f32 0.0, %v1472
      %v1474 = vpop.f32.mrb[0].mxu0
      %1475 = vdwg.mxu0
      %v1477 = vsel %vm665, %v1295, 0
      %1479 = vmatprep.subr.mxu0 0.0
      %1480 = vmatpush1.msra.mxu0 %v516
      %1481 = vmatprep.subr.mxu0 0.0
      %1482 = vmatpush1.msra.mxu0 0.0
      %1483 = vmatprep.subr.mxu0 0.0
      %1484 = vmatpush1.msra.mxu0 0.0
      %1485 = vmatprep.subr.mxu0 0.0
      %1486 = vmatpush1.msra.mxu0 0.0
      %1487 = vmatprep.subr.mxu0 0.0
      %1488 = vmatpush1.msra.mxu0 0.0
      %1489 = vmatprep.subr.mxu0 0.0
      %1490 = vmatpush1.msra.mxu0 0.0
      %1491 = vmatprep.subr.mxu0 0.0
      %1492 = vmatpush1.msra.mxu0 0.0
      %1493 = vmatprep.subr.mxu0 0.0
      %1494 = vmatpush1.msra.mxu0 0.0
      %1495 = vmatprep.subr.mxu0 0.0
      %1496 = vmatpush1.msra.mxu0 0.0
      %1497 = vmatprep.subr.mxu0 0.0
      %1498 = vmatpush1.msra.mxu0 0.0
      %1499 = vmatprep.subr.mxu0 0.0
      %1500 = vmatpush1.msra.mxu0 0.0
      %1501 = vmatprep.subr.mxu0 0.0
      %1502 = vmatpush1.msra.mxu0 0.0
      %1503 = vmatprep.subr.mxu0 0.0
      %1504 = vmatpush1.msra.mxu0 0.0
      %1505 = vmatprep.subr.mxu0 0.0
      %1506 = vmatpush1.msra.mxu0 0.0
      %1507 = vmatprep.subr.mxu0 0.0
      %1508 = vmatpush1.msra.mxu0 0.0
      %1509 = vmatprep.subr.mxu0 0.0
      %1510 = vmatpush1.msra.mxu0 0.0
      %1511 = vmatprep.subr.mxu0 0.0
      %1512 = vmatpush1.msra.mxu0 0.0
      %1513 = vmatprep.subr.mxu0 0.0
      %1514 = vmatpush1.msra.mxu0 0.0
      %1515 = vmatprep.subr.mxu0 0.0
      %1516 = vmatpush1.msra.mxu0 0.0
      %1517 = vmatprep.subr.mxu0 0.0
      %1518 = vmatpush1.msra.mxu0 0.0
      %1519 = vmatprep.subr.mxu0 0.0
      %1520 = vmatpush1.msra.mxu0 0.0
      %1521 = vmatprep.subr.mxu0 0.0
      %1522 = vmatpush1.msra.mxu0 0.0
      %1523 = vmatprep.subr.mxu0 0.0
      %1524 = vmatpush1.msra.mxu0 0.0
      %1525 = vmatprep.subr.mxu0 0.0
      %1526 = vmatpush1.msra.mxu0 0.0
      %1527 = vmatprep.subr.mxu0 0.0
      %1528 = vmatpush1.msra.mxu0 0.0
      %1529 = vmatprep.subr.mxu0 0.0
      %1530 = vmatpush1.msra.mxu0 0.0
      %1531 = vmatprep.subr.mxu0 0.0
      %1532 = vmatpush1.msra.mxu0 0.0
      %1533 = vmatprep.subr.mxu0 0.0
      %1534 = vmatpush1.msra.mxu0 0.0
      %1535 = vmatprep.subr.mxu0 0.0
      %1536 = vmatpush1.msra.mxu0 0.0
      %1537 = vmatprep.subr.mxu0 0.0
      %1538 = vmatpush1.msra.mxu0 0.0
      %1539 = vmatprep.subr.mxu0 0.0
      %1540 = vmatpush1.msra.mxu0 0.0
      %1541 = vmatprep.subr.mxu0 0.0
      %1542 = vmatpush1.msra.mxu0 0.0
      %1543 = vmatprep.mubr.f32.mxu0 0.0
      %1544 = vmatmul.mubr.f32.gmra.mrb[0].mxu0 %v1477
      %v1545 = vpop.f32.mrb[0].mxu0
      %v1546 = vadd.f32 0.0, %v1545
      %v1547 = vpop.f32.mrb[0].mxu0
      %1548 = vdwg.mxu0
      %v1550 = vsel %vm665, %v1297, 0
      %1552 = vmatprep.subr.mxu0 0.0
      %1553 = vmatpush1.msra.mxu0 %v517
      %1554 = vmatprep.subr.mxu0 0.0
      %1555 = vmatpush1.msra.mxu0 0.0
      %1556 = vmatprep.subr.mxu0 0.0
      %1557 = vmatpush1.msra.mxu0 0.0
      %1558 = vmatprep.subr.mxu0 0.0
      %1559 = vmatpush1.msra.mxu0 0.0
      %1560 = vmatprep.subr.mxu0 0.0
      %1561 = vmatpush1.msra.mxu0 0.0
      %1562 = vmatprep.subr.mxu0 0.0
      %1563 = vmatpush1.msra.mxu0 0.0
      %1564 = vmatprep.subr.mxu0 0.0
      %1565 = vmatpush1.msra.mxu0 0.0
      %1566 = vmatprep.subr.mxu0 0.0
      %1567 = vmatpush1.msra.mxu0 0.0
      %1568 = vmatprep.subr.mxu0 0.0
      %1569 = vmatpush1.msra.mxu0 0.0
      %1570 = vmatprep.subr.mxu0 0.0
      %1571 = vmatpush1.msra.mxu0 0.0
      %1572 = vmatprep.subr.mxu0 0.0
      %1573 = vmatpush1.msra.mxu0 0.0
      %1574 = vmatprep.subr.mxu0 0.0
      %1575 = vmatpush1.msra.mxu0 0.0
      %1576 = vmatprep.subr.mxu0 0.0
      %1577 = vmatpush1.msra.mxu0 0.0
      %1578 = vmatprep.subr.mxu0 0.0
      %1579 = vmatpush1.msra.mxu0 0.0
      %1580 = vmatprep.subr.mxu0 0.0
      %1581 = vmatpush1.msra.mxu0 0.0
      %1582 = vmatprep.subr.mxu0 0.0
      %1583 = vmatpush1.msra.mxu0 0.0
      %1584 = vmatprep.subr.mxu0 0.0
      %1585 = vmatpush1.msra.mxu0 0.0
      %1586 = vmatprep.subr.mxu0 0.0
      %1587 = vmatpush1.msra.mxu0 0.0
      %1588 = vmatprep.subr.mxu0 0.0
      %1589 = vmatpush1.msra.mxu0 0.0
      %1590 = vmatprep.subr.mxu0 0.0
      %1591 = vmatpush1.msra.mxu0 0.0
      %1592 = vmatprep.subr.mxu0 0.0
      %1593 = vmatpush1.msra.mxu0 0.0
      %1594 = vmatprep.subr.mxu0 0.0
      %1595 = vmatpush1.msra.mxu0 0.0
      %1596 = vmatprep.subr.mxu0 0.0
      %1597 = vmatpush1.msra.mxu0 0.0
      %1598 = vmatprep.subr.mxu0 0.0
      %1599 = vmatpush1.msra.mxu0 0.0
      %1600 = vmatprep.subr.mxu0 0.0
      %1601 = vmatpush1.msra.mxu0 0.0
      %1602 = vmatprep.subr.mxu0 0.0
      %1603 = vmatpush1.msra.mxu0 0.0
      %1604 = vmatprep.subr.mxu0 0.0
      %1605 = vmatpush1.msra.mxu0 0.0
      %1606 = vmatprep.subr.mxu0 0.0
      %1607 = vmatpush1.msra.mxu0 0.0
      %1608 = vmatprep.subr.mxu0 0.0
      %1609 = vmatpush1.msra.mxu0 0.0
      %1610 = vmatprep.subr.mxu0 0.0
      %1611 = vmatpush1.msra.mxu0 0.0
      %1612 = vmatprep.subr.mxu0 0.0
      %1613 = vmatpush1.msra.mxu0 0.0
      %1614 = vmatprep.subr.mxu0 0.0
      %1615 = vmatpush1.msra.mxu0 0.0
      %1616 = vmatprep.mubr.f32.mxu0 0.0
      %1617 = vmatmul.mubr.f32.gmra.mrb[0].mxu0 %v1550
      %v1618 = vpop.f32.mrb[0].mxu0
      %v1619 = vadd.f32 0.0, %v1618
      %v1620 = vpop.f32.mrb[0].mxu0
      %1621 = vdwg.mxu0
      %1622 = vrot.lane.b32.xlu0 %v492, 64
      %v1623 = vpop.permute.xlu0 %1622
      %v1626 = vsel %vm665, %v1279, 0
      %1628 = vmatprep.subr.mxu0 0.0
      %1629 = vmatpush1.msra.mxu0 %v1623
      %1630 = vmatprep.subr.mxu0 0.0
      %1631 = vmatpush1.msra.mxu0 0.0
      %1632 = vmatprep.subr.mxu0 0.0
      %1633 = vmatpush1.msra.mxu0 0.0
      %1634 = vmatprep.subr.mxu0 0.0
      %1635 = vmatpush1.msra.mxu0 0.0
      %1636 = vmatprep.subr.mxu0 0.0
      %1637 = vmatpush1.msra.mxu0 0.0
      %1638 = vmatprep.subr.mxu0 0.0
      %1639 = vmatpush1.msra.mxu0 0.0
      %1640 = vmatprep.subr.mxu0 0.0
      %1641 = vmatpush1.msra.mxu0 0.0
      %1642 = vmatprep.subr.mxu0 0.0
      %1643 = vmatpush1.msra.mxu0 0.0
      %1644 = vmatprep.subr.mxu0 0.0
      %1645 = vmatpush1.msra.mxu0 0.0
      %1646 = vmatprep.subr.mxu0 0.0
      %1647 = vmatpush1.msra.mxu0 0.0
      %1648 = vmatprep.subr.mxu0 0.0
      %1649 = vmatpush1.msra.mxu0 0.0
      %1650 = vmatprep.subr.mxu0 0.0
      %1651 = vmatpush1.msra.mxu0 0.0
      %1652 = vmatprep.subr.mxu0 0.0
      %1653 = vmatpush1.msra.mxu0 0.0
      %1654 = vmatprep.subr.mxu0 0.0
      %1655 = vmatpush1.msra.mxu0 0.0
      %1656 = vmatprep.subr.mxu0 0.0
      %1657 = vmatpush1.msra.mxu0 0.0
      %1658 = vmatprep.subr.mxu0 0.0
      %1659 = vmatpush1.msra.mxu0 0.0
      %1660 = vmatprep.subr.mxu0 0.0
      %1661 = vmatpush1.msra.mxu0 0.0
      %1662 = vmatprep.subr.mxu0 0.0
      %1663 = vmatpush1.msra.mxu0 0.0
      %1664 = vmatprep.subr.mxu0 0.0
      %1665 = vmatpush1.msra.mxu0 0.0
      %1666 = vmatprep.subr.mxu0 0.0
      %1667 = vmatpush1.msra.mxu0 0.0
      %1668 = vmatprep.subr.mxu0 0.0
      %1669 = vmatpush1.msra.mxu0 0.0
      %1670 = vmatprep.subr.mxu0 0.0
      %1671 = vmatpush1.msra.mxu0 0.0
      %1672 = vmatprep.subr.mxu0 0.0
      %1673 = vmatpush1.msra.mxu0 0.0
      %1674 = vmatprep.subr.mxu0 0.0
      %1675 = vmatpush1.msra.mxu0 0.0
      %1676 = vmatprep.subr.mxu0 0.0
      %1677 = vmatpush1.msra.mxu0 0.0
      %1678 = vmatprep.subr.mxu0 0.0
      %1679 = vmatpush1.msra.mxu0 0.0
      %1680 = vmatprep.subr.mxu0 0.0
      %1681 = vmatpush1.msra.mxu0 0.0
      %1682 = vmatprep.subr.mxu0 0.0
      %1683 = vmatpush1.msra.mxu0 0.0
      %1684 = vmatprep.subr.mxu0 0.0
      %1685 = vmatpush1.msra.mxu0 0.0
      %1686 = vmatprep.subr.mxu0 0.0
      %1687 = vmatpush1.msra.mxu0 0.0
      %1688 = vmatprep.subr.mxu0 0.0
      %1689 = vmatpush1.msra.mxu0 0.0
      %1690 = vmatprep.subr.mxu0 0.0
      %1691 = vmatpush1.msra.mxu0 0.0
      %1692 = vmatprep.mubr.f32.mxu0 0.0
      %1693 = vmatmul.mubr.f32.gmra.mrb[0].mxu0 %v1626
      %v1694 = vpop.f32.mrb[0].mxu0
      %v1695 = vadd.f32 %v1400, %v1694
      %v1696 = vpop.f32.mrb[0].mxu0
      %1697 = vdwg.mxu0
      %1698 = vrot.lane.b32.xlu0 %v505, 64
      %v1699 = vpop.permute.xlu0 %1698
      %v1702 = vsel %vm665, %v1281, 0
      %1704 = vmatprep.subr.mxu0 0.0
      %1705 = vmatpush1.msra.mxu0 %v1699
      %1706 = vmatprep.subr.mxu0 0.0
      %1707 = vmatpush1.msra.mxu0 0.0
      %1708 = vmatprep.subr.mxu0 0.0
      %1709 = vmatpush1.msra.mxu0 0.0
      %1710 = vmatprep.subr.mxu0 0.0
      %1711 = vmatpush1.msra.mxu0 0.0
      %1712 = vmatprep.subr.mxu0 0.0
      %1713 = vmatpush1.msra.mxu0 0.0
      %1714 = vmatprep.subr.mxu0 0.0
      %1715 = vmatpush1.msra.mxu0 0.0
      %1716 = vmatprep.subr.mxu0 0.0
      %1717 = vmatpush1.msra.mxu0 0.0
      %1718 = vmatprep.subr.mxu0 0.0
      %1719 = vmatpush1.msra.mxu0 0.0
      %1720 = vmatprep.subr.mxu0 0.0
      %1721 = vmatpush1.msra.mxu0 0.0
      %1722 = vmatprep.subr.mxu0 0.0
      %1723 = vmatpush1.msra.mxu0 0.0
      %1724 = vmatprep.subr.mxu0 0.0
      %1725 = vmatpush1.msra.mxu0 0.0
      %1726 = vmatprep.subr.mxu0 0.0
      %1727 = vmatpush1.msra.mxu0 0.0
      %1728 = vmatprep.subr.mxu0 0.0
      %1729 = vmatpush1.msra.mxu0 0.0
      %1730 = vmatprep.subr.mxu0 0.0
      %1731 = vmatpush1.msra.mxu0 0.0
      %1732 = vmatprep.subr.mxu0 0.0
      %1733 = vmatpush1.msra.mxu0 0.0
      %1734 = vmatprep.subr.mxu0 0.0
      %1735 = vmatpush1.msra.mxu0 0.0
      %1736 = vmatprep.subr.mxu0 0.0
      %1737 = vmatpush1.msra.mxu0 0.0
      %1738 = vmatprep.subr.mxu0 0.0
      %1739 = vmatpush1.msra.mxu0 0.0
      %1740 = vmatprep.subr.mxu0 0.0
      %1741 = vmatpush1.msra.mxu0 0.0
      %1742 = vmatprep.subr.mxu0 0.0
      %1743 = vmatpush1.msra.mxu0 0.0
      %1744 = vmatprep.subr.mxu0 0.0
      %1745 = vmatpush1.msra.mxu0 0.0
      %1746 = vmatprep.subr.mxu0 0.0
      %1747 = vmatpush1.msra.mxu0 0.0
      %1748 = vmatprep.subr.mxu0 0.0
      %1749 = vmatpush1.msra.mxu0 0.0
      %1750 = vmatprep.subr.mxu0 0.0
      %1751 = vmatpush1.msra.mxu0 0.0
      %1752 = vmatprep.subr.mxu0 0.0
      %1753 = vmatpush1.msra.mxu0 0.0
      %1754 = vmatprep.subr.mxu0 0.0
      %1755 = vmatpush1.msra.mxu0 0.0
      %1756 = vmatprep.subr.mxu0 0.0
      %1757 = vmatpush1.msra.mxu0 0.0
      %1758 = vmatprep.subr.mxu0 0.0
      %1759 = vmatpush1.msra.mxu0 0.0
      %1760 = vmatprep.subr.mxu0 0.0
      %1761 = vmatpush1.msra.mxu0 0.0
      %1762 = vmatprep.subr.mxu0 0.0
      %1763 = vmatpush1.msra.mxu0 0.0
      %1764 = vmatprep.subr.mxu0 0.0
      %1765 = vmatpush1.msra.mxu0 0.0
      %1766 = vmatprep.subr.mxu0 0.0
      %1767 = vmatpush1.msra.mxu0 0.0
      %1768 = vmatprep.mubr.f32.mxu0 0.0
      %1769 = vmatmul.mubr.f32.gmra.mrb[0].mxu0 %v1702
      %v1770 = vpop.f32.mrb[0].mxu0
      %v1771 = vadd.f32 %v1473, %v1770
      %v1772 = vpop.f32.mrb[0].mxu0
      %1773 = vdwg.mxu0
      %1774 = vrot.lane.b32.xlu0 %v507, 64
      %v1775 = vpop.permute.xlu0 %1774
      %v1778 = vsel %vm665, %v1283, 0
      %1780 = vmatprep.subr.mxu0 0.0
      %1781 = vmatpush1.msra.mxu0 %v1775
      %1782 = vmatprep.subr.mxu0 0.0
      %1783 = vmatpush1.msra.mxu0 0.0
      %1784 = vmatprep.subr.mxu0 0.0
      %1785 = vmatpush1.msra.mxu0 0.0
      %1786 = vmatprep.subr.mxu0 0.0
      %1787 = vmatpush1.msra.mxu0 0.0
      %1788 = vmatprep.subr.mxu0 0.0
      %1789 = vmatpush1.msra.mxu0 0.0
      %1790 = vmatprep.subr.mxu0 0.0
      %1791 = vmatpush1.msra.mxu0 0.0
      %1792 = vmatprep.subr.mxu0 0.0
      %1793 = vmatpush1.msra.mxu0 0.0
      %1794 = vmatprep.subr.mxu0 0.0
      %1795 = vmatpush1.msra.mxu0 0.0
      %1796 = vmatprep.subr.mxu0 0.0
      %1797 = vmatpush1.msra.mxu0 0.0
      %1798 = vmatprep.subr.mxu0 0.0
      %1799 = vmatpush1.msra.mxu0 0.0
      %1800 = vmatprep.subr.mxu0 0.0
      %1801 = vmatpush1.msra.mxu0 0.0
      %1802 = vmatprep.subr.mxu0 0.0
      %1803 = vmatpush1.msra.mxu0 0.0
      %1804 = vmatprep.subr.mxu0 0.0
      %1805 = vmatpush1.msra.mxu0 0.0
      %1806 = vmatprep.subr.mxu0 0.0
      %1807 = vmatpush1.msra.mxu0 0.0
      %1808 = vmatprep.subr.mxu0 0.0
      %1809 = vmatpush1.msra.mxu0 0.0
      %1810 = vmatprep.subr.mxu0 0.0
      %1811 = vmatpush1.msra.mxu0 0.0
      %1812 = vmatprep.subr.mxu0 0.0
      %1813 = vmatpush1.msra.mxu0 0.0
      %1814 = vmatprep.subr.mxu0 0.0
      %1815 = vmatpush1.msra.mxu0 0.0
      %1816 = vmatprep.subr.mxu0 0.0
      %1817 = vmatpush1.msra.mxu0 0.0
      %1818 = vmatprep.subr.mxu0 0.0
      %1819 = vmatpush1.msra.mxu0 0.0
      %1820 = vmatprep.subr.mxu0 0.0
      %1821 = vmatpush1.msra.mxu0 0.0
      %1822 = vmatprep.subr.mxu0 0.0
      %1823 = vmatpush1.msra.mxu0 0.0
      %1824 = vmatprep.subr.mxu0 0.0
      %1825 = vmatpush1.msra.mxu0 0.0
      %1826 = vmatprep.subr.mxu0 0.0
      %1827 = vmatpush1.msra.mxu0 0.0
      %1828 = vmatprep.subr.mxu0 0.0
      %1829 = vmatpush1.msra.mxu0 0.0
      %1830 = vmatprep.subr.mxu0 0.0
      %1831 = vmatpush1.msra.mxu0 0.0
      %1832 = vmatprep.subr.mxu0 0.0
      %1833 = vmatpush1.msra.mxu0 0.0
      %1834 = vmatprep.subr.mxu0 0.0
      %1835 = vmatpush1.msra.mxu0 0.0
      %1836 = vmatprep.subr.mxu0 0.0
      %1837 = vmatpush1.msra.mxu0 0.0
      %1838 = vmatprep.subr.mxu0 0.0
      %1839 = vmatpush1.msra.mxu0 0.0
      %1840 = vmatprep.subr.mxu0 0.0
      %1841 = vmatpush1.msra.mxu0 0.0
      %1842 = vmatprep.subr.mxu0 0.0
      %1843 = vmatpush1.msra.mxu0 0.0
      %1844 = vmatprep.mubr.f32.mxu0 0.0
      %1845 = vmatmul.mubr.f32.gmra.mrb[0].mxu0 %v1778
      %v1846 = vpop.f32.mrb[0].mxu0
      %v1847 = vadd.f32 %v1546, %v1846
      %v1848 = vpop.f32.mrb[0].mxu0
      %1849 = vdwg.mxu0
      %1850 = vrot.lane.b32.xlu0 %v509, 64
      %v1851 = vpop.permute.xlu0 %1850
      %v1854 = vsel %vm665, %v1285, 0
      %1856 = vmatprep.subr.mxu0 0.0
      %1857 = vmatpush1.msra.mxu0 %v1851
      %1858 = vmatprep.subr.mxu0 0.0
      %1859 = vmatpush1.msra.mxu0 0.0
      %1860 = vmatprep.subr.mxu0 0.0
      %1861 = vmatpush1.msra.mxu0 0.0
      %1862 = vmatprep.subr.mxu0 0.0
      %1863 = vmatpush1.msra.mxu0 0.0
      %1864 = vmatprep.subr.mxu0 0.0
      %1865 = vmatpush1.msra.mxu0 0.0
      %1866 = vmatprep.subr.mxu0 0.0
      %1867 = vmatpush1.msra.mxu0 0.0
      %1868 = vmatprep.subr.mxu0 0.0
      %1869 = vmatpush1.msra.mxu0 0.0
      %1870 = vmatprep.subr.mxu0 0.0
      %1871 = vmatpush1.msra.mxu0 0.0
      %1872 = vmatprep.subr.mxu0 0.0
      %1873 = vmatpush1.msra.mxu0 0.0
      %1874 = vmatprep.subr.mxu0 0.0
      %1875 = vmatpush1.msra.mxu0 0.0
      %1876 = vmatprep.subr.mxu0 0.0
      %1877 = vmatpush1.msra.mxu0 0.0
      %1878 = vmatprep.subr.mxu0 0.0
      %1879 = vmatpush1.msra.mxu0 0.0
      %1880 = vmatprep.subr.mxu0 0.0
      %1881 = vmatpush1.msra.mxu0 0.0
      %1882 = vmatprep.subr.mxu0 0.0
      %1883 = vmatpush1.msra.mxu0 0.0
      %1884 = vmatprep.subr.mxu0 0.0
      %1885 = vmatpush1.msra.mxu0 0.0
      %1886 = vmatprep.subr.mxu0 0.0
      %1887 = vmatpush1.msra.mxu0 0.0
      %1888 = vmatprep.subr.mxu0 0.0
      %1889 = vmatpush1.msra.mxu0 0.0
      %1890 = vmatprep.subr.mxu0 0.0
      %1891 = vmatpush1.msra.mxu0 0.0
      %1892 = vmatprep.subr.mxu0 0.0
      %1893 = vmatpush1.msra.mxu0 0.0
      %1894 = vmatprep.subr.mxu0 0.0
      %1895 = vmatpush1.msra.mxu0 0.0
      %1896 = vmatprep.subr.mxu0 0.0
      %1897 = vmatpush1.msra.mxu0 0.0
      %1898 = vmatprep.subr.mxu0 0.0
      %1899 = vmatpush1.msra.mxu0 0.0
      %1900 = vmatprep.subr.mxu0 0.0
      %1901 = vmatpush1.msra.mxu0 0.0
      %1902 = vmatprep.subr.mxu0 0.0
      %1903 = vmatpush1.msra.mxu0 0.0
      %1904 = vmatprep.subr.mxu0 0.0
      %1905 = vmatpush1.msra.mxu0 0.0
      %1906 = vmatprep.subr.mxu0 0.0
      %1907 = vmatpush1.msra.mxu0 0.0
      %1908 = vmatprep.subr.mxu0 0.0
      %1909 = vmatpush1.msra.mxu0 0.0
      %1910 = vmatprep.subr.mxu0 0.0
      %1911 = vmatpush1.msra.mxu0 0.0
      %1912 = vmatprep.subr.mxu0 0.0
      %1913 = vmatpush1.msra.mxu0 0.0
      %1914 = vmatprep.subr.mxu0 0.0
      %1915 = vmatpush1.msra.mxu0 0.0
      %1916 = vmatprep.subr.mxu0 0.0
      %1917 = vmatpush1.msra.mxu0 0.0
      %1918 = vmatprep.subr.mxu0 0.0
      %1919 = vmatpush1.msra.mxu0 0.0
      %1920 = vmatprep.mubr.f32.mxu0 0.0
      %1921 = vmatmul.mubr.f32.gmra.mrb[0].mxu0 %v1854
      %v1922 = vpop.f32.mrb[0].mxu0
      %v1923 = vadd.f32 %v1619, %v1922
      %v1924 = vpop.f32.mrb[0].mxu0
      %1925 = vdwg.mxu0
      %v1926 = vmul.f32 %v1695, %v1326
      %v1927 = vmul.f32 %v1771, %v1327
      %v1928 = vmul.f32 %v1847, %v1328
      %v1929 = vmul.f32 %v1923, %v1329
      %v1930 = vcombine.low %v1926, %v1928
      %v1931 = vcombine.high %v1926, %v1928
      %v1933 = vunpack.c.l.s4 1983009808
      %v1934 = vunpack.c.0.s8 %v1933
      %v1935 = vlaneseq
      %v1936 = vshrl.u32 %v1935, 7
      %v1937 = vsub.s32 %v1934, %v1936
      %v1938 = vrot.slane %v1930, %v1937
      %v1940 = vunpack.c.l.s4 1983009808
      %v1941 = vunpack.c.0.s8 %v1940
      %v1942 = vlaneseq
      %v1943 = vshrl.u32 %v1942, 7
      %v1944 = vsub.s32 %v1941, %v1943
      %v1945 = vrot.slane %v1931, %v1944
      %v1946 = vcombine.low %v1927, %v1929
      %v1947 = vcombine.high %v1927, %v1929
      %v1949 = vunpack.c.l.s4 1983009808
      %v1950 = vunpack.c.0.s8 %v1949
      %v1951 = vlaneseq
      %v1952 = vshrl.u32 %v1951, 7
      %v1953 = vsub.s32 %v1950, %v1952
      %v1954 = vrot.slane %v1946, %v1953
      %v1956 = vunpack.c.l.s4 1983009808
      %v1957 = vunpack.c.0.s8 %v1956
      %v1958 = vlaneseq
      %v1959 = vshrl.u32 %v1958, 7
      %v1960 = vsub.s32 %v1957, %v1959
      %v1961 = vrot.slane %v1947, %v1960
      %v1962 = vcombine.low %v1938, %v1954
      %v1963 = vcombine.high %v1938, %v1954
      %v1965 = vunpack.c.l.s4 1934713408
      %v1966 = vunpack.c.0.s8 %v1965
      %v1967 = vlaneseq
      %v1968 = vshrl.u32 %v1967, 7
      %v1969 = vsub.s32 %v1966, %v1968
      %v1970 = vrot.slane %v1962, %v1969
      %v1972 = vunpack.c.l.s4 1934713408
      %v1973 = vunpack.c.0.s8 %v1972
      %v1974 = vlaneseq
      %v1975 = vshrl.u32 %v1974, 7
      %v1976 = vsub.s32 %v1973, %v1975
      %v1977 = vrot.slane %v1963, %v1976
      %v1978 = vcombine.low %v1945, %v1961
      %v1979 = vcombine.high %v1945, %v1961
      %v1981 = vunpack.c.l.s4 1934713408
      %v1982 = vunpack.c.0.s8 %v1981
      %v1983 = vlaneseq
      %v1984 = vshrl.u32 %v1983, 7
      %v1985 = vsub.s32 %v1982, %v1984
      %v1986 = vrot.slane %v1978, %v1985
      %v1988 = vunpack.c.l.s4 1934713408
      %v1989 = vunpack.c.0.s8 %v1988
      %v1990 = vlaneseq
      %v1991 = vshrl.u32 %v1990, 7
      %v1992 = vsub.s32 %v1989, %v1991
      %v1993 = vrot.slane %v1979, %v1992
      %v1994 = vcombine.high %v1970, 0.0
      %v1995 = vcombine.high %v1977, 0.0
      %v1996 = vcombine.high %v1986, 0.0
      %v1997 = vcombine.high %v1993, 0.0
      %v1998 = vcombine.low %v1970, %v1977
      %v2000 = vunpack.c.l.s4 1983009808
      %v2001 = vunpack.c.0.s8 %v2000
      %v2002 = vlaneseq
      %v2003 = vshrl.u32 %v2002, 7
      %v2004 = vsub.s32 %v2001, %v2003
      %v2005 = vrot.slane %v1998, %v2004
      %v2006 = vcombine.low %v1994, %v1995
      %v2008 = vunpack.c.l.s4 1983009808
      %v2009 = vunpack.c.0.s8 %v2008
      %v2010 = vlaneseq
      %v2011 = vshrl.u32 %v2010, 7
      %v2012 = vsub.s32 %v2009, %v2011
      %v2013 = vrot.slane %v2006, %v2012
      %v2014 = vcombine.low %v1986, %v1993
      %v2016 = vunpack.c.l.s4 1983009808
      %v2017 = vunpack.c.0.s8 %v2016
      %v2018 = vlaneseq
      %v2019 = vshrl.u32 %v2018, 7
      %v2020 = vsub.s32 %v2017, %v2019
      %v2021 = vrot.slane %v2014, %v2020
      %v2022 = vcombine.low %v1996, %v1997
      %v2024 = vunpack.c.l.s4 1983009808
      %v2025 = vunpack.c.0.s8 %v2024
      %v2026 = vlaneseq
      %v2027 = vshrl.u32 %v2026, 7
      %v2028 = vsub.s32 %v2025, %v2027
      %v2029 = vrot.slane %v2022, %v2028
      %v2030 = vcombine.low %v2005, %v2013
      %v2031 = vcombine.high %v2005, %v2013
      %v2033 = vunpack.c.l.s4 1934713408
      %v2034 = vunpack.c.0.s8 %v2033
      %v2035 = vlaneseq
      %v2036 = vshrl.u32 %v2035, 7
      %v2037 = vsub.s32 %v2034, %v2036
      %v2038 = vrot.slane %v2030, %v2037
      %v2040 = vunpack.c.l.s4 1934713408
      %v2041 = vunpack.c.0.s8 %v2040
      %v2042 = vlaneseq
      %v2043 = vshrl.u32 %v2042, 7
      %v2044 = vsub.s32 %v2041, %v2043
      %v2045 = vrot.slane %v2031, %v2044
      %v2046 = vcombine.low %v2021, %v2029
      %v2047 = vcombine.high %v2021, %v2029
      %v2049 = vunpack.c.l.s4 1934713408
      %v2050 = vunpack.c.0.s8 %v2049
      %v2051 = vlaneseq
      %v2052 = vshrl.u32 %v2051, 7
      %v2053 = vsub.s32 %v2050, %v2052
      %v2054 = vrot.slane %v2046, %v2053
      %v2056 = vunpack.c.l.s4 1934713408
      %v2057 = vunpack.c.0.s8 %v2056
      %v2058 = vlaneseq
      %v2059 = vshrl.u32 %v2058, 7
      %v2060 = vsub.s32 %v2057, %v2059
      %v2061 = vrot.slane %v2047, %v2060
      %v2062 = vcombine.low %v2038, %v2054
      %v2063 = vcombine.high %v2038, %v2054
      %v2064 = vcombine.low %v2045, %v2061
      %v2065 = vcombine.high %v2045, %v2061
      %2067 = vrot.lane.b32.xlu0 %v2063, 8
      %v2068 = vpop.permute.xlu0 %2067
      %2071 = vrot.lane.b32.xlu0 %v2064, 16
      %v2072 = vpop.permute.xlu0 %2071
      %2075 = vrot.lane.b32.xlu0 %v2065, 24
      %v2076 = vpop.permute.xlu0 %2075
      %v2078 = vsel %vm665, %v2062, %v2068
      %vm2079 = vcmask 130048
      %v2080 = vsel %vm2079, %v2078, %v2072
      %vm2081 = vcmask 195584
      %v2082 = vsel %vm2081, %v2080, %v2076
      %v2083 = vld [vmem:[%s6] sm:$0xff]
      %v2084 = vld [vmem:[%s6 + $0x8] sm:$0xff]
      %v2085 = vld [vmem:[%s6 + $0x10] sm:$0xff]
      %v2086 = vld [vmem:[%s6 + $0x18] sm:$0xff]
      %v2087 = vld [vmem:[%s7] sm:$0x1]
      %v2089 = vlaneseq
      %v2090 = vshrl.u32 %v2089, 7
      %v2091 = vsub.s32 0, %v2090
      %v2092 = vrot.slane %v2087, %v2091
      %v2095 = vsel %vm421, %v2082, 0
      %2097 = vmatprep.subr.mxu0 0.0
      %2098 = vmatpush1.msra.mxu0 %v2083
      %2099 = vmatprep.subr.mxu0 0.0
      %2100 = vmatpush1.msra.mxu0 %v2084
      %2101 = vmatprep.subr.mxu0 0.0
      %2102 = vmatpush1.msra.mxu0 %v2085
      %2103 = vmatprep.subr.mxu0 0.0
      %2104 = vmatpush1.msra.mxu0 %v2086
      %2105 = vmatprep.subr.mxu0 0.0
      %2106 = vmatpush1.msra.mxu0 0.0
      %2107 = vmatprep.subr.mxu0 0.0
      %2108 = vmatpush1.msra.mxu0 0.0
      %2109 = vmatprep.subr.mxu0 0.0
      %2110 = vmatpush1.msra.mxu0 0.0
      %2111 = vmatprep.subr.mxu0 0.0
      %2112 = vmatpush1.msra.mxu0 0.0
      %2113 = vmatprep.subr.mxu0 0.0
      %2114 = vmatpush1.msra.mxu0 0.0
      %2115 = vmatprep.subr.mxu0 0.0
      %2116 = vmatpush1.msra.mxu0 0.0
      %2117 = vmatprep.subr.mxu0 0.0
      %2118 = vmatpush1.msra.mxu0 0.0
      %2119 = vmatprep.subr.mxu0 0.0
      %2120 = vmatpush1.msra.mxu0 0.0
      %2121 = vmatprep.subr.mxu0 0.0
      %2122 = vmatpush1.msra.mxu0 0.0
      %2123 = vmatprep.subr.mxu0 0.0
      %2124 = vmatpush1.msra.mxu0 0.0
      %2125 = vmatprep.subr.mxu0 0.0
      %2126 = vmatpush1.msra.mxu0 0.0
      %2127 = vmatprep.subr.mxu0 0.0
      %2128 = vmatpush1.msra.mxu0 0.0
      %2129 = vmatprep.subr.mxu0 0.0
      %2130 = vmatpush1.msra.mxu0 0.0
      %2131 = vmatprep.subr.mxu0 0.0
      %2132 = vmatpush1.msra.mxu0 0.0
      %2133 = vmatprep.subr.mxu0 0.0
      %2134 = vmatpush1.msra.mxu0 0.0
      %2135 = vmatprep.subr.mxu0 0.0
      %2136 = vmatpush1.msra.mxu0 0.0
      %2137 = vmatprep.subr.mxu0 0.0
      %2138 = vmatpush1.msra.mxu0 0.0
      %2139 = vmatprep.subr.mxu0 0.0
      %2140 = vmatpush1.msra.mxu0 0.0
      %2141 = vmatprep.subr.mxu0 0.0
      %2142 = vmatpush1.msra.mxu0 0.0
      %2143 = vmatprep.subr.mxu0 0.0
      %2144 = vmatpush1.msra.mxu0 0.0
      %2145 = vmatprep.subr.mxu0 0.0
      %2146 = vmatpush1.msra.mxu0 0.0
      %2147 = vmatprep.subr.mxu0 0.0
      %2148 = vmatpush1.msra.mxu0 0.0
      %2149 = vmatprep.subr.mxu0 0.0
      %2150 = vmatpush1.msra.mxu0 0.0
      %2151 = vmatprep.subr.mxu0 0.0
      %2152 = vmatpush1.msra.mxu0 0.0
      %2153 = vmatprep.subr.mxu0 0.0
      %2154 = vmatpush1.msra.mxu0 0.0
      %2155 = vmatprep.subr.mxu0 0.0
      %2156 = vmatpush1.msra.mxu0 0.0
      %2157 = vmatprep.subr.mxu0 0.0
      %2158 = vmatpush1.msra.mxu0 0.0
      %2159 = vmatprep.subr.mxu0 0.0
      %2160 = vmatpush1.msra.mxu0 0.0
      %2161 = vmatprep.mubr.f32.mxu0 0.0
      %2162 = vmatmul.mubr.f32.gmra.mrb[0].mxu0 %v2095
      %v2163 = vpop.f32.mrb[0].mxu0
      %v2164 = vadd.f32 %v2092, %v2163
      %v2165 = vpop.f32.mrb[0].mxu0
      %2166 = vdwg.mxu0
      %v2167 = vadd.f32 %v2164, %v409
      %v2168 = vsel %vm421, %v2167, 0.0
      %2169 = vadd.xlane.f32.xlu0 %v2168
      %v2170 = vpop.xlane.xlu0 %2169
      %v2171 = vrcp.pop 32.0
      %v2172 = vmul.f32 %v2170, %v2171
      %v2173 = vsub.f32 %v2167, %v2172
      %v2174 = vmul.f32 %v2173, %v2173
      %v2175 = vsel %vm421, %v2174, 0.0
      %2176 = vadd.xlane.f32.xlu0 %v2175
      %v2177 = vpop.xlane.xlu0 %2176
      %v2178 = vmul.f32 %v2177, %v2171
      %v2179 = vadd.f32 %v2178, 1e-12
      %v2180 = vrsqrt.pop %v2179
      %v2181 = vmul.f32 %v2173, %v2180
      %v2182 = vld [vmem:[%s8] sm:$0x1]
      %v2184 = vlaneseq
      %v2185 = vshrl.u32 %v2184, 7
      %v2186 = vsub.s32 0, %v2185
      %v2187 = vrot.slane %v2182, %v2186
      %v2189 = vmul.f32 %v2181, %v2187
      %v2190 = vld [vmem:[%s9] sm:$0x1]
      %v2192 = vlaneseq
      %v2193 = vshrl.u32 %v2192, 7
      %v2194 = vsub.s32 0, %v2193
      %v2195 = vrot.slane %v2190, %v2194
      %v2197 = vadd.f32 %v2189, %v2195
      %2198 = vst.msk [vmem:[%s408] sm:$0xff] %vm421, %v2197
      %p2199 = scmp.lt.s32.totalorder %s21, 1
      %s2200 = scalar_select %p2199, %s21, 1
      %s2201 = smul.addr %s2200, 8
      %s2202 = scalar_lea.vmem %s10, %s2201
      // Predicated region
      $region61: #{prompted_bert_forward.6} parent=59 // pred_check
        %p2203 = pneg %p269
      $region62: #{prompted_bert_forward.6} parent=59 // pred_check_branch
        %2205 = sbr.rel (%p2203) target = $region64
      $region63: #{prompted_bert_forward.6} parent=59 // pred_region
        _
      $region64: #{prompted_bert_forward.6} parent=59 // pred_fallthru
        _
    $region60: #{prompted_bert_forward.6} parent=5 // pred_fallthru
      _
    %p2206 = scmp.le.s32.totalorder 2, %s16
    // Predicated region
    $region65: #{prompted_bert_forward.6} parent=5 // pred_check
      %p2207 = pneg %p2206
    $region66: #{prompted_bert_forward.6} parent=5 // pred_check_branch
      %2209 = sbr.rel (%p2207) target = $region68
    $region67: #{prompted_bert_forward.6} parent=5 // pred_region
      %s2210 = ssub.s32 %s16, 2
      // Predicated region
      $region69: #{prompted_bert_forward.6} parent=67 // pred_check
        %p2211 = pneg %p275
      $region70: #{prompted_bert_forward.6} parent=67 // pred_check_branch
        %2213 = sbr.rel (%p2211) target = $region72
      $region71: #{prompted_bert_forward.6} parent=67 // pred_region
        %p2214 = scmp.lt.s32.totalorder %s22, 1
        %s2215 = scalar_select %p2214, %s22, 1
        %s2216 = smul.addr %s2215, 8
        %s2217 = scalar_lea.vmem %s10, %s2216
      $region72: #{prompted_bert_forward.6} parent=67 // pred_fallthru
        _
    $region68: #{prompted_bert_forward.6} parent=5 // pred_fallthru
      _
  $region6: #{prompted_bert_forward.6} parent=0 // loop_footer
    %s20 = sadd.s32 1, %s16
  $region7: #{prompted_bert_forward.6} parent=0 // loop_footer_branch
    %15 = sbr.rel target = $region3
  $region8: #{prompted_bert_forward.6} parent=0 // loop_exit
    _

</llo_original>
